<compile_context>
chip_gen: v6e
topology: v6e:2x2x1
jax: 0.10.0
libtpu: 0.0.40
codegen_flags: <defaults>
</compile_context>

<pallas_src>
import functools

import jax
import jax.numpy as jnp
from jax import lax
from jax.experimental import pallas as pl
from jax.experimental.pallas import tpu as pltpu

CPAD = 128   # lane width; every channel dim is zero-padded to this (requires C <= 128)
EPS = 1e-5


# ----------------------------------------------------------------------------
# Fused Pallas kernel (a block of B images, flattened to (B*H*W, CPAD), per step)
# ----------------------------------------------------------------------------
def _conv3x3_flat(x_flat, w_ref, bias_row, *, img_w, relu):
    """3x3 'valid' conv on a flattened (M, CPAD) spatial grid (M = B*H*W).

    Tap (ky, kx) for flat row r is row r + ky*W + kx, obtained with
    pltpu.roll along the sublane axis.  Wrap-around (across the image edge,
    the image boundary inside the batch block, or the end of the block) only
    contaminates rows that are invalid conv outputs and are sliced off in the
    wrapper.  The 9 taps are lane-concatenated (128-aligned boundaries) into a
    (M, 9*CPAD) patch matrix -> ONE MXU matmul with K = 9*CPAD.
    """
    m = x_flat.shape[0]
    taps = []
    for ky in range(3):
        for kx in range(3):
            d = ky * img_w + kx
            # roll(x, m - d)[r] == x[(r + d) % m]  (jnp.roll semantics, positive shift)
            tap = x_flat if d == 0 else pltpu.roll(x_flat, shift=m - d, axis=0)
            taps.append(tap.astype(jnp.bfloat16))
    patches = jnp.concatenate(taps, axis=-1)                  # (M, 9*CPAD) bf16
    acc = jnp.dot(patches, w_ref[...], preferred_element_type=jnp.float32)
    acc = acc + bias_row                                      # folded-BN bias (f32)
    return jnp.maximum(acc, 0.0) if relu else acc


def _alexnet_p2_kernel(x_ref, w4_ref, b4_ref, w5_ref, b5_ref, o_ref, *, img_w):
    """layer4 (conv3x3 + folded-BN + ReLU) then layer5 (conv3x3 + folded-BN)."""
    x = x_ref[...].astype(jnp.float32)                        # (M, CPAD); f32 so sublane rolls are 32-bit
    y1 = _conv3x3_flat(x, w4_ref, b4_ref[...], img_w=img_w, relu=True)    # layer4, stays in VMEM
    y2 = _conv3x3_flat(y1, w5_ref, b5_ref[...], img_w=img_w, relu=False)  # layer5
    o_ref[...] = y2.astype(o_ref.dtype)                       # dense (M, 128) bf16 store


def alexnet_p2_pallas(x_flat, w4, b4, w5, b5, *, n, h, w, block_batch):
    """x_flat: (N*H*W, CPAD) bf16; w*: (9*CPAD, CPAD) bf16; b*: (1, CPAD) f32."""
    hw = h * w
    m_blk = block_batch * hw
    grid = (n // block_batch,)
    kernel = functools.partial(_alexnet_p2_kernel, img_w=w)
    return pl.pallas_call(
        kernel,
        out_shape=jax.ShapeDtypeStruct((n * hw, CPAD), jnp.bfloat16),
        grid_spec=pltpu.PrefetchScalarGridSpec(
            num_scalar_prefetch=0,
            grid=grid,
            in_specs=[
                pl.BlockSpec((m_blk, CPAD), lambda i: (i, 0)),
                # Constant index_maps: weights/biases are fetched once and reused.
                pl.BlockSpec((9 * CPAD, CPAD), lambda i: (0, 0)),
                pl.BlockSpec((1, CPAD), lambda i: (0, 0)),
                pl.BlockSpec((9 * CPAD, CPAD), lambda i: (0, 0)),
                pl.BlockSpec((1, CPAD), lambda i: (0, 0)),
            ],
            out_specs=pl.BlockSpec((m_blk, CPAD), lambda i: (i, 0)),
        ),
        compiler_params=pltpu.CompilerParams(
            dimension_semantics=("parallel",),
            vmem_limit_bytes=32 * 1024 * 1024,   # v5e default scoped VMEM is only 16 MiB
        ),
    )(x_flat, w4, b4, w5, b5)


# ----------------------------------------------------------------------------
# Parameter construction: fold BN into weights/bias, pad channels, flatten taps
# ----------------------------------------------------------------------------
def make_alexnet_p2_params(key, configs):
    """Deterministic synthetic parameters matching the nn.Module shapes,
    pre-folded/packed for the kernel."""
    c0, c1, c2 = configs
    assert max(c0, c1, c2) <= CPAD, "this kernel packs channels into a single 128-lane group"
    ks = jax.random.split(key, 8)

    def conv_w(k, cin, cout):
        bound = (1.0 / (cin * 9)) ** 0.5
        return jax.random.uniform(k, (3, 3, cin, cout), jnp.float32, -bound, bound)

    def conv_b(k, cin, cout):
        bound = (1.0 / (cin * 9)) ** 0.5
        return jax.random.uniform(k, (cout,), jnp.float32, -bound, bound)

    def bn(k0, k1, c):
        gamma = 1.0 + 0.1 * jax.random.normal(k0, (c,), jnp.float32)
        beta = 0.1 * jax.random.normal(k1, (c,), jnp.float32)
        mean = jnp.zeros((c,), jnp.float32)
        var = jnp.ones((c,), jnp.float32)
        return gamma, beta, mean, var

    def fold_pack(w, cb, gamma, beta, mean, var):
        s = gamma / jnp.sqrt(var + EPS)
        bias = beta + (cb - mean) * s
        wf = w * s[None, None, None, :]                 # fold BN scale into weights
        kh, kw, cin, cout = wf.shape
        wf = jnp.pad(wf, ((0, 0), (0, 0), (0, CPAD - cin), (0, CPAD - cout)))
        wf = wf.reshape(kh * kw * CPAD, CPAD).astype(jnp.bfloat16)   # (9*CPAD, 128)
        bias = jnp.pad(bias, (0, CPAD - cout)).reshape(1, CPAD).astype(jnp.float32)
        return wf, bias

    w4, b4 = fold_pack(conv_w(ks[0], c0, c1), conv_b(ks[1], c0, c1),
                       *bn(ks[2], ks[3], c1))
    w5, b5 = fold_pack(conv_w(ks[4], c1, c2), conv_b(ks[5], c1, c2),
                       *bn(ks[6], ks[7], c2))
    return {"w4": w4, "b4": b4, "w5": w5, "b5": b5}


# ----------------------------------------------------------------------------
# Forward (PyTorch NCHW in/out) and pure-JAX reference
# ----------------------------------------------------------------------------
def _choose_block_batch(n, requested):
    """Largest divisor of n <= requested, preferring grid length >= 2 (v7x 2-TC sharding)."""
    b = max(1, min(requested, n))
    while n % b:
        b -= 1
    if n // b < 2 and b > 1:
        b = max(1, b // 2)
        while n % b:
            b -= 1
    return b


@functools.partial(jax.jit, static_argnames=("feature_size", "block_batch"))
def alexnet_p2_forward(x_nchw, params, *, feature_size, block_batch=2):
    n, c0, h, w = x_nchw.shape
    x = jnp.transpose(x_nchw, (0, 2, 3, 1))                   # NCHW -> NHWC
    x = jnp.pad(x, ((0, 0), (0, 0), (0, 0), (0, CPAD - c0)))
    x = x.reshape(n * h * w, CPAD).astype(jnp.bfloat16)       # flat, lane-dense
    b = _choose_block_batch(n, block_batch)
    y = alexnet_p2_pallas(x, params["w4"], params["b4"], params["w5"], params["b5"],
                          n=n, h=h, w=w, block_batch=b)
    y = y.reshape(n, h, w, CPAD)[:, :h - 4, :w - 4, :feature_size]  # valid region + real channels
    return jnp.transpose(y, (0, 3, 1, 2)).astype(jnp.float32)       # NHWC -> NCHW, f32


def reference_forward(x_nchw, params, configs):
    """Pure-JAX reference in the same numeric regime as the kernel
    (bf16-rounded operands, f32 accumulation, bf16-rounded intermediate/output)."""
    c0, c1, c2 = configs

    def conv(x, w_flat, b_row, relu):
        w = w_flat.astype(jnp.float32).reshape(3, 3, CPAD, CPAD)
        y = lax.conv_general_dilated(
            x, w, window_strides=(1, 1), padding="VALID",
            dimension_numbers=("NCHW", "HWIO", "NCHW"),
            precision=lax.Precision.HIGHEST)
        y = y + b_row.reshape(1, CPAD, 1, 1)
        return jnp.maximum(y, 0.0) if relu else y

    xp = jnp.pad(x_nchw, ((0, 0), (0, CPAD - c0), (0, 0), (0, 0)))
    xp = xp.astype(jnp.bfloat16).astype(jnp.float32)
    y = conv(xp, params["w4"], params["b4"], True)
    y = y.astype(jnp.bfloat16).astype(jnp.float32)
    y = conv(y, params["w5"], params["b5"], False)
    y = y.astype(jnp.bfloat16).astype(jnp.float32)            # kernel emits bf16
    return y[:, :c2]


if __name__ == "__main__":
    # Module-consistent small shapes: width_mult = 1/16 -> configs [30, 24, 16]
    width_mult = 1.0 / 16.0
    configs = [3 if c == 3 else int(c * width_mult) for c in [484, 384, 256]]

    key = jax.random.PRNGKey(0)
    k_params, k_x = jax.random.split(key)
    params = make_alexnet_p2_params(k_params, configs)

    # N=4 with block_batch=2 -> grid=(2,): batched matmuls (M=512) AND >=2 grid
    # steps so v7x's two TensorCores both get work.
    N, H, W = 4, 16, 16
    x = jax.random.normal(k_x, (N, configs[0], H, W), jnp.float32)  # NCHW like PyTorch

    out = jax.block_until_ready(
        alexnet_p2_forward(x, params, feature_size=configs[2], block_batch=2))

    ref = reference_forward(x, params, configs)
    assert out.shape == (N, configs[2], H - 4, W - 4), out.shape
    max_err = float(jnp.max(jnp.abs(out - ref)))
    assert jnp.allclose(out, ref, atol=2e-2, rtol=2e-2), f"mismatch vs reference: {max_err}"

    print("KERNEL_OK")
</pallas_src>

<mosaic_0001>
module attributes {stable_mosaic.version = 11 : i64} {
  func.func @_alexnet_p2_kernel(%arg0: i32, %arg1: memref<512x128xbf16, #tpu.memory_space<vmem>>, %arg2: memref<1152x128xbf16, #tpu.memory_space<vmem>>, %arg3: memref<1x128xf32, #tpu.memory_space<vmem>>, %arg4: memref<1152x128xbf16, #tpu.memory_space<vmem>>, %arg5: memref<1x128xf32, #tpu.memory_space<vmem>>, %arg6: memref<512x128xbf16, #tpu.memory_space<vmem>>) attributes {dimension_semantics = [#tpu.dimension_semantics<parallel>], iteration_bounds = array<i64: 2>, scalar_prefetch = 0 : i64, scratch_operands = 0 : i64, tpu.core_type = #tpu.core_type<tc>, window_params = [{transform_indices = @transform_0, window_bounds = array<i64: 512, 128>}, {pipeline_mode = #tpu.pipeline_mode<synchronous>, transform_indices = @transform_1, window_bounds = array<i64: 1152, 128>}, {pipeline_mode = #tpu.pipeline_mode<synchronous>, transform_indices = @transform_2, window_bounds = array<i64: 1, 128>}, {pipeline_mode = #tpu.pipeline_mode<synchronous>, transform_indices = @transform_3, window_bounds = array<i64: 1152, 128>}, {pipeline_mode = #tpu.pipeline_mode<synchronous>, transform_indices = @transform_4, window_bounds = array<i64: 1, 128>}, {transform_indices = @transform_5, window_bounds = array<i64: 512, 128>}]} {
    %c0 = arith.constant 0 : index
    %c0_0 = arith.constant 0 : index
    %0 = vector.load %arg1[%c0, %c0_0] : memref<512x128xbf16, #tpu.memory_space<vmem>>, vector<512x128xbf16>
    %1 = arith.extf %0 : vector<512x128xbf16> to vector<512x128xf32>
    %c0_1 = arith.constant 0 : index
    %c0_2 = arith.constant 0 : index
    %2 = vector.load %arg3[%c0_1, %c0_2] : memref<1x128xf32, #tpu.memory_space<vmem>>, vector<1x128xf32>
    %3 = arith.truncf %1 : vector<512x128xf32> to vector<512x128xbf16>
    %c511_i32 = arith.constant 511 : i32
    %4 = tpu.dynamic_rotate %1 by %c511_i32 dim 0 : vector<512x128xf32>, i32 -> vector<512x128xf32>
    %5 = arith.truncf %4 : vector<512x128xf32> to vector<512x128xbf16>
    %c510_i32 = arith.constant 510 : i32
    %6 = tpu.dynamic_rotate %1 by %c510_i32 dim 0 : vector<512x128xf32>, i32 -> vector<512x128xf32>
    %7 = arith.truncf %6 : vector<512x128xf32> to vector<512x128xbf16>
    %c496_i32 = arith.constant 496 : i32
    %8 = tpu.dynamic_rotate %1 by %c496_i32 dim 0 : vector<512x128xf32>, i32 -> vector<512x128xf32>
    %9 = arith.truncf %8 : vector<512x128xf32> to vector<512x128xbf16>
    %c495_i32 = arith.constant 495 : i32
    %10 = tpu.dynamic_rotate %1 by %c495_i32 dim 0 : vector<512x128xf32>, i32 -> vector<512x128xf32>
    %11 = arith.truncf %10 : vector<512x128xf32> to vector<512x128xbf16>
    %c494_i32 = arith.constant 494 : i32
    %12 = tpu.dynamic_rotate %1 by %c494_i32 dim 0 : vector<512x128xf32>, i32 -> vector<512x128xf32>
    %13 = arith.truncf %12 : vector<512x128xf32> to vector<512x128xbf16>
    %c480_i32 = arith.constant 480 : i32
    %14 = tpu.dynamic_rotate %1 by %c480_i32 dim 0 : vector<512x128xf32>, i32 -> vector<512x128xf32>
    %15 = arith.truncf %14 : vector<512x128xf32> to vector<512x128xbf16>
    %c479_i32 = arith.constant 479 : i32
    %16 = tpu.dynamic_rotate %1 by %c479_i32 dim 0 : vector<512x128xf32>, i32 -> vector<512x128xf32>
    %17 = arith.truncf %16 : vector<512x128xf32> to vector<512x128xbf16>
    %c478_i32 = arith.constant 478 : i32
    %18 = tpu.dynamic_rotate %1 by %c478_i32 dim 0 : vector<512x128xf32>, i32 -> vector<512x128xf32>
    %19 = arith.truncf %18 : vector<512x128xf32> to vector<512x128xbf16>
    %20 = tpu.concatenate %3, %5, %7, %9, %11, %13, %15, %17, %19 in 1 : vector<512x128xbf16>, vector<512x128xbf16>, vector<512x128xbf16>, vector<512x128xbf16>, vector<512x128xbf16>, vector<512x128xbf16>, vector<512x128xbf16>, vector<512x128xbf16>, vector<512x128xbf16> -> vector<512x1152xbf16>
    %c0_3 = arith.constant 0 : index
    %c0_4 = arith.constant 0 : index
    %21 = vector.load %arg2[%c0_3, %c0_4] : memref<1152x128xbf16, #tpu.memory_space<vmem>>, vector<1152x128xbf16>
    %cst = arith.constant dense<0.000000e+00> : vector<512x128xf32>
    %22 = tpu.matmul %20, %21, %cst {dimension_numbers = #tpu.dot_dimension_numbers<[1], [0], [0], [1], [0, 0, 1, 1], [], []>} : vector<512x1152xbf16>, vector<1152x128xbf16>, vector<512x128xf32> -> vector<512x128xf32>
    %23 = vector.broadcast %2 : vector<1x128xf32> to vector<512x128xf32>
    %24 = arith.addf %22, %23 : vector<512x128xf32>
    %cst_5 = arith.constant 0.000000e+00 : f32
    %25 = vector.broadcast %cst_5 : f32 to vector<512x128xf32>
    %26 = arith.maximumf %24, %25 : vector<512x128xf32>
    %c0_6 = arith.constant 0 : index
    %c0_7 = arith.constant 0 : index
    %27 = vector.load %arg5[%c0_6, %c0_7] : memref<1x128xf32, #tpu.memory_space<vmem>>, vector<1x128xf32>
    %28 = arith.truncf %26 : vector<512x128xf32> to vector<512x128xbf16>
    %c511_i32_8 = arith.constant 511 : i32
    %29 = tpu.dynamic_rotate %26 by %c511_i32_8 dim 0 : vector<512x128xf32>, i32 -> vector<512x128xf32>
    %30 = arith.truncf %29 : vector<512x128xf32> to vector<512x128xbf16>
    %c510_i32_9 = arith.constant 510 : i32
    %31 = tpu.dynamic_rotate %26 by %c510_i32_9 dim 0 : vector<512x128xf32>, i32 -> vector<512x128xf32>
    %32 = arith.truncf %31 : vector<512x128xf32> to vector<512x128xbf16>
    %c496_i32_10 = arith.constant 496 : i32
    %33 = tpu.dynamic_rotate %26 by %c496_i32_10 dim 0 : vector<512x128xf32>, i32 -> vector<512x128xf32>
    %34 = arith.truncf %33 : vector<512x128xf32> to vector<512x128xbf16>
    %c495_i32_11 = arith.constant 495 : i32
    %35 = tpu.dynamic_rotate %26 by %c495_i32_11 dim 0 : vector<512x128xf32>, i32 -> vector<512x128xf32>
    %36 = arith.truncf %35 : vector<512x128xf32> to vector<512x128xbf16>
    %c494_i32_12 = arith.constant 494 : i32
    %37 = tpu.dynamic_rotate %26 by %c494_i32_12 dim 0 : vector<512x128xf32>, i32 -> vector<512x128xf32>
    %38 = arith.truncf %37 : vector<512x128xf32> to vector<512x128xbf16>
    %c480_i32_13 = arith.constant 480 : i32
    %39 = tpu.dynamic_rotate %26 by %c480_i32_13 dim 0 : vector<512x128xf32>, i32 -> vector<512x128xf32>
    %40 = arith.truncf %39 : vector<512x128xf32> to vector<512x128xbf16>
    %c479_i32_14 = arith.constant 479 : i32
    %41 = tpu.dynamic_rotate %26 by %c479_i32_14 dim 0 : vector<512x128xf32>, i32 -> vector<512x128xf32>
    %42 = arith.truncf %41 : vector<512x128xf32> to vector<512x128xbf16>
    %c478_i32_15 = arith.constant 478 : i32
    %43 = tpu.dynamic_rotate %26 by %c478_i32_15 dim 0 : vector<512x128xf32>, i32 -> vector<512x128xf32>
    %44 = arith.truncf %43 : vector<512x128xf32> to vector<512x128xbf16>
    %45 = tpu.concatenate %28, %30, %32, %34, %36, %38, %40, %42, %44 in 1 : vector<512x128xbf16>, vector<512x128xbf16>, vector<512x128xbf16>, vector<512x128xbf16>, vector<512x128xbf16>, vector<512x128xbf16>, vector<512x128xbf16>, vector<512x128xbf16>, vector<512x128xbf16> -> vector<512x1152xbf16>
    %c0_16 = arith.constant 0 : index
    %c0_17 = arith.constant 0 : index
    %46 = vector.load %arg4[%c0_16, %c0_17] : memref<1152x128xbf16, #tpu.memory_space<vmem>>, vector<1152x128xbf16>
    %cst_18 = arith.constant dense<0.000000e+00> : vector<512x128xf32>
    %47 = tpu.matmul %45, %46, %cst_18 {dimension_numbers = #tpu.dot_dimension_numbers<[1], [0], [0], [1], [0, 0, 1, 1], [], []>} : vector<512x1152xbf16>, vector<1152x128xbf16>, vector<512x128xf32> -> vector<512x128xf32>
    %48 = vector.broadcast %27 : vector<1x128xf32> to vector<512x128xf32>
    %49 = arith.addf %47, %48 : vector<512x128xf32>
    %50 = arith.truncf %49 : vector<512x128xf32> to vector<512x128xbf16>
    %c0_19 = arith.constant 0 : index
    %c0_20 = arith.constant 0 : index
    %51 = vector.load %arg6[%c0_19, %c0_20] : memref<512x128xbf16, #tpu.memory_space<vmem>>, vector<512x128xbf16>
    tpu.vector_store %arg6[%c0_19, %c0_20], %50 {strides = array<i32>} : memref<512x128xbf16, #tpu.memory_space<vmem>>, vector<512x128xbf16>,
    return
  }
  func.func @transform_0(%arg0: i32) -> (i32, i32) {
    %c0_i32 = arith.constant 0 : i32
    %c0_i32_0 = arith.constant 0 : i32
    return %arg0, %c0_i32 : i32, i32
  }
  func.func @transform_1(%arg0: i32) -> (i32, i32) {
    %c0_i32 = arith.constant 0 : i32
    %c0_i32_0 = arith.constant 0 : i32
    %c0_i32_1 = arith.constant 0 : i32
    return %c0_i32, %c0_i32_0 : i32, i32
  }
  func.func @transform_2(%arg0: i32) -> (i32, i32) {
    %c0_i32 = arith.constant 0 : i32
    %c0_i32_0 = arith.constant 0 : i32
    %c0_i32_1 = arith.constant 0 : i32
    return %c0_i32, %c0_i32_0 : i32, i32
  }
  func.func @transform_3(%arg0: i32) -> (i32, i32) {
    %c0_i32 = arith.constant 0 : i32
    %c0_i32_0 = arith.constant 0 : i32
    %c0_i32_1 = arith.constant 0 : i32
    return %c0_i32, %c0_i32_0 : i32, i32
  }
  func.func @transform_4(%arg0: i32) -> (i32, i32) {
    %c0_i32 = arith.constant 0 : i32
    %c0_i32_0 = arith.constant 0 : i32
    %c0_i32_1 = arith.constant 0 : i32
    return %c0_i32, %c0_i32_0 : i32, i32
  }
  func.func @transform_5(%arg0: i32) -> (i32, i32) {
    %c0_i32 = arith.constant 0 : i32
    %c0_i32_0 = arith.constant 0 : i32
    return %arg0, %c0_i32 : i32, i32
  }
}

</mosaic_0001>

<llo_original>
// kernel: alexnet_p2_forward.1
$region0: #{alexnet_p2_forward.1}
  #allocation0 [shape = 'u32[]', space=smem, size = 0x4, offset = 0x4, fixed_abs, tag = 'smem constant byte address 0x4 - core index']
  #allocation1 [shape = 'u32[144,128]{1,0:T(1,128)}', space=vmem, size = 0x12000, scoped, tag = 'internal scratch']
  %s0 = inlined_call_operand.vmem [shape: bf16[1024,128], index: 0, kind: input, shape index: {}]
  %s1 = inlined_call_operand.vmem [shape: bf16[1152,128], index: 1, kind: input, shape index: {}]
  %s2 = inlined_call_operand.vmem [shape: f32[1,128], index: 2, kind: input, shape index: {}]
  %s3 = inlined_call_operand.vmem [shape: bf16[1152,128], index: 3, kind: input, shape index: {}]
  %s4 = inlined_call_operand.vmem [shape: f32[1,128], index: 4, kind: input, shape index: {}]
  %s5 = inlined_call_operand.vmem [shape: bf16[1024,128], index: 5, kind: output, shape index: {}]
  %s6 = sld [smem:[#allocation0]]
  $region53: #{alexnet_p2_forward.1} parent=0
    _
  %s8 = ssub.s32 1, %s6
  %s9 = scalar_select 0, %s8, %s6
  loop: start=0, step=1, limit=4
  $region2: #{alexnet_p2_forward.1} parent=0 // loop_pre_header
    _
  $region3: #{alexnet_p2_forward.1} parent=0 // loop_header
    %s11 = sphi 0, %s15
    %p12 = scmp.ge.s32.totalorder %s11, 4
    %s21 = sphi 0, %s23
    %s24 = sphi 0, %s21
    %s25 = sphi 0, %s24
    %s41 = sphi 0, %s25
    %s45 = sphi 0, %s45
    %s47 = sphi 0, %s45
    %s48 = sphi 0, %s47
    %s62 = sphi 0, %s48
    %s66 = sphi 0, %s66
    %s68 = sphi 0, %s66
    %s69 = sphi 0, %s68
    %s83 = sphi 0, %s69
    %s87 = sphi 0, %s87
    %s89 = sphi 0, %s87
    %s90 = sphi 0, %s89
    %s104 = sphi 0, %s90
    %s108 = sphi 0, %s108
    %s110 = sphi 0, %s108
    %s111 = sphi 0, %s110
    %s125 = sphi 0, %s111
    %s131 = sphi 0, %s133
    %s134 = sphi 0, %s131
    %s135 = sphi 0, %s134
    %s151 = sphi 0, %s135
  $region4: #{alexnet_p2_forward.1} parent=0 // loop_header_branch
    %14 = sbr.rel (%p12) target = $region8
  $region5: #{alexnet_p2_forward.1} parent=0 // loop_body
    %s16 = ssub.s32 %s11, 1
    %s17 = ssub.s32 %s11, 2
    %s18 = sadd.s32 %s11, 1
    %s19 = ssub.s32 %s11, %s18
    %p20 = scmp.eq.s32.totalorder %s19, 0
    %s22 = sadd.s32 %s21, 1
    %s23 = scalar_select %p20, %s21, %s22
    %p26 = pneg %p20
    %p27 = scmp.eq.s32.totalorder %s11, 1
    %p28 = por %p26, %p27
    %p29 = scmp.ne.s32.totalorder %s21, %s24
    %p30 = scmp.eq.s32.totalorder %s11, 0
    %p31 = por %p29, %p30
    %p32 = scmp.ne.s32.totalorder %s21, %s24
    %p33 = scmp.eq.s32.totalorder %s16, 1
    %p34 = por %p32, %p33
    %p35 = scmp.ne.s32.totalorder %s24, %s25
    %p36 = scmp.eq.s32.totalorder %s16, 0
    %p37 = por %p35, %p36
    %p38 = scmp.ne.s32.totalorder %s24, %s25
    %p39 = scmp.eq.s32.totalorder %s17, 1
    %p40 = por %p38, %p39
    %p42 = scmp.ne.s32.totalorder %s25, %s41
    %p43 = scmp.eq.s32.totalorder %s17, 0
    %p44 = por %p42, %p43
    %s46 = sadd.s32 %s45, 1
    %p49 = scmp.eq.s32.totalorder %s11, 1
    %p50 = scmp.ne.s32.totalorder %s45, %s47
    %p51 = scmp.eq.s32.totalorder %s11, 0
    %p52 = por %p50, %p51
    %p53 = scmp.ne.s32.totalorder %s45, %s47
    %p54 = scmp.eq.s32.totalorder %s16, 1
    %p55 = por %p53, %p54
    %p56 = scmp.ne.s32.totalorder %s47, %s48
    %p57 = scmp.eq.s32.totalorder %s16, 0
    %p58 = por %p56, %p57
    %p59 = scmp.ne.s32.totalorder %s47, %s48
    %p60 = scmp.eq.s32.totalorder %s17, 1
    %p61 = por %p59, %p60
    %p63 = scmp.ne.s32.totalorder %s48, %s62
    %p64 = scmp.eq.s32.totalorder %s17, 0
    %p65 = por %p63, %p64
    %s67 = sadd.s32 %s66, 1
    %p70 = scmp.eq.s32.totalorder %s11, 1
    %p71 = scmp.ne.s32.totalorder %s66, %s68
    %p72 = scmp.eq.s32.totalorder %s11, 0
    %p73 = por %p71, %p72
    %p74 = scmp.ne.s32.totalorder %s66, %s68
    %p75 = scmp.eq.s32.totalorder %s16, 1
    %p76 = por %p74, %p75
    %p77 = scmp.ne.s32.totalorder %s68, %s69
    %p78 = scmp.eq.s32.totalorder %s16, 0
    %p79 = por %p77, %p78
    %p80 = scmp.ne.s32.totalorder %s68, %s69
    %p81 = scmp.eq.s32.totalorder %s17, 1
    %p82 = por %p80, %p81
    %p84 = scmp.ne.s32.totalorder %s69, %s83
    %p85 = scmp.eq.s32.totalorder %s17, 0
    %p86 = por %p84, %p85
    %s88 = sadd.s32 %s87, 1
    %p91 = scmp.eq.s32.totalorder %s11, 1
    %p92 = scmp.ne.s32.totalorder %s87, %s89
    %p93 = scmp.eq.s32.totalorder %s11, 0
    %p94 = por %p92, %p93
    %p95 = scmp.ne.s32.totalorder %s87, %s89
    %p96 = scmp.eq.s32.totalorder %s16, 1
    %p97 = por %p95, %p96
    %p98 = scmp.ne.s32.totalorder %s89, %s90
    %p99 = scmp.eq.s32.totalorder %s16, 0
    %p100 = por %p98, %p99
    %p101 = scmp.ne.s32.totalorder %s89, %s90
    %p102 = scmp.eq.s32.totalorder %s17, 1
    %p103 = por %p101, %p102
    %p105 = scmp.ne.s32.totalorder %s90, %s104
    %p106 = scmp.eq.s32.totalorder %s17, 0
    %p107 = por %p105, %p106
    %s109 = sadd.s32 %s108, 1
    %p112 = scmp.eq.s32.totalorder %s11, 1
    %p113 = scmp.ne.s32.totalorder %s108, %s110
    %p114 = scmp.eq.s32.totalorder %s11, 0
    %p115 = por %p113, %p114
    %p116 = scmp.ne.s32.totalorder %s108, %s110
    %p117 = scmp.eq.s32.totalorder %s16, 1
    %p118 = por %p116, %p117
    %p119 = scmp.ne.s32.totalorder %s110, %s111
    %p120 = scmp.eq.s32.totalorder %s16, 0
    %p121 = por %p119, %p120
    %p122 = scmp.ne.s32.totalorder %s110, %s111
    %p123 = scmp.eq.s32.totalorder %s17, 1
    %p124 = por %p122, %p123
    %p126 = scmp.ne.s32.totalorder %s111, %s125
    %p127 = scmp.eq.s32.totalorder %s17, 0
    %p128 = por %p126, %p127
    %s129 = ssub.s32 %s11, %s18
    %p130 = scmp.eq.s32.totalorder %s129, 0
    %s132 = sadd.s32 %s131, 1
    %s133 = scalar_select %p130, %s131, %s132
    %p136 = pneg %p130
    %p137 = scmp.eq.s32.totalorder %s11, 1
    %p138 = por %p136, %p137
    %p139 = scmp.ne.s32.totalorder %s131, %s134
    %p140 = scmp.eq.s32.totalorder %s11, 0
    %p141 = por %p139, %p140
    %p142 = scmp.ne.s32.totalorder %s131, %s134
    %p143 = scmp.eq.s32.totalorder %s16, 1
    %p144 = por %p142, %p143
    %p145 = scmp.ne.s32.totalorder %s134, %s135
    %p146 = scmp.eq.s32.totalorder %s16, 0
    %p147 = por %p145, %p146
    %p148 = scmp.ne.s32.totalorder %s134, %s135
    %p149 = scmp.eq.s32.totalorder %s17, 1
    %p150 = por %p148, %p149
    %p152 = scmp.ne.s32.totalorder %s135, %s151
    %p153 = scmp.eq.s32.totalorder %s17, 0
    %p154 = por %p152, %p153
    %p155 = scmp.le.s32.totalorder 1, %s11
    %p156 = scmp.lt.s32.totalorder %s11, 3
    %p157 = pnand %p155, %p156
    %p158 = pneg %p157
    // Predicated region
    $region9: #{alexnet_p2_forward.1} parent=5 // pred_check
      _
    $region10: #{alexnet_p2_forward.1} parent=5 // pred_check_branch
      %160 = sbr.rel (%p157) target = $region12
    $region11: #{alexnet_p2_forward.1} parent=5 // pred_region
      %s161 = ssub.s32 %s11, 1
      // Predicated region
      $region13: #{alexnet_p2_forward.1} parent=11 // pred_check
        %p162 = pneg %p58
      $region14: #{alexnet_p2_forward.1} parent=11 // pred_check_branch
        %164 = sbr.rel (%p162) target = $region16
      $region15: #{alexnet_p2_forward.1} parent=11 // pred_region
        _
      $region16: #{alexnet_p2_forward.1} parent=11 // pred_fallthru
        _
      // Predicated region
      $region17: #{alexnet_p2_forward.1} parent=11 // pred_check
        %p165 = pneg %p79
      $region18: #{alexnet_p2_forward.1} parent=11 // pred_check_branch
        %167 = sbr.rel (%p165) target = $region20
      $region19: #{alexnet_p2_forward.1} parent=11 // pred_region
        _
      $region20: #{alexnet_p2_forward.1} parent=11 // pred_fallthru
        _
      // Predicated region
      $region21: #{alexnet_p2_forward.1} parent=11 // pred_check
        %p168 = pneg %p100
      $region22: #{alexnet_p2_forward.1} parent=11 // pred_check_branch
        %170 = sbr.rel (%p168) target = $region24
      $region23: #{alexnet_p2_forward.1} parent=11 // pred_region
        _
      $region24: #{alexnet_p2_forward.1} parent=11 // pred_fallthru
        _
      // Predicated region
      $region25: #{alexnet_p2_forward.1} parent=11 // pred_check
        %p171 = pneg %p121
      $region26: #{alexnet_p2_forward.1} parent=11 // pred_check_branch
        %173 = sbr.rel (%p171) target = $region28
      $region27: #{alexnet_p2_forward.1} parent=11 // pred_region
        _
      $region28: #{alexnet_p2_forward.1} parent=11 // pred_fallthru
        _
    $region12: #{alexnet_p2_forward.1} parent=5 // pred_fallthru
      _
    %p174 = scmp.lt.s32.totalorder %s11, 2
    // Predicated region
    $region29: #{alexnet_p2_forward.1} parent=5 // pred_check
      %p175 = pneg %p174
    $region30: #{alexnet_p2_forward.1} parent=5 // pred_check_branch
      %177 = sbr.rel (%p175) target = $region32
    $region31: #{alexnet_p2_forward.1} parent=5 // pred_region
      // Predicated region
      $region33: #{alexnet_p2_forward.1} parent=31 // pred_check
        %p178 = pneg %p31
      $region34: #{alexnet_p2_forward.1} parent=31 // pred_check_branch
        %180 = sbr.rel (%p178) target = $region36
      $region35: #{alexnet_p2_forward.1} parent=31 // pred_region
        %s181 = smul.u32 64, %s11
        %p182 = scmp.lt.s32.totalorder %s181, 127
        %s183 = scalar_select %p182, %s181, 127
        %s184 = smul.addr %s183, 4
        %s185 = scalar_lea.vmem %s0, %s184
        %s186 = smul.u32 64, %s11
      $region36: #{alexnet_p2_forward.1} parent=31 // pred_fallthru
        _
    $region32: #{alexnet_p2_forward.1} parent=5 // pred_fallthru
      _
    %p187 = scmp.le.s32.totalorder 1, %s11
    %p188 = scmp.lt.s32.totalorder %s11, 3
    %p189 = pnand %p187, %p188
    %p190 = pneg %p189
    // Predicated region
    $region37: #{alexnet_p2_forward.1} parent=5 // pred_check
      _
    $region38: #{alexnet_p2_forward.1} parent=5 // pred_check_branch
      %192 = sbr.rel (%p189) target = $region40
    $region39: #{alexnet_p2_forward.1} parent=5 // pred_region
      %s193 = ssub.s32 %s11, 1
      %s194 = smul.u32 64, %s16
      %p195 = scmp.lt.s32.totalorder %s194, 127
      %s196 = scalar_select %p195, %s194, 127
      %s197 = smul.addr %s196, 4
      %s198 = scalar_lea.vmem %s0, %s197
      %p199 = pneg %p37
      %p200 = pneg %p34
      %p201 = pneg %p58
      %p202 = pneg %p55
      %p203 = pneg %p79
      %p204 = pneg %p76
      %p205 = pneg %p100
      %p206 = pneg %p97
      %p207 = pneg %p121
      %p208 = pneg %p118
      %p209 = pneg %p147
      %p210 = pneg %p144
      %s211 = smul.u32 64, %s16
      %p212 = scmp.lt.s32.totalorder %s211, 127
      %s213 = scalar_select %p212, %s211, 127
      %s214 = smul.addr %s213, 4
      %s215 = scalar_lea.vmem %s5, %s214
      %s216 = smul.u32 64, %s16
      %p217 = scmp.lt.s32.totalorder %s216, 127
      %s218 = scalar_select %p217, %s216, 127
      %s219 = smul.addr %s218, 4
      %s220 = scalar_lea.vmem %s0, %s219
      %s221 = smul.u32 64, %s16
      %s222 = smul.u32 64, %s16
      %p223 = scmp.lt.s32.totalorder %s222, 127
      %s224 = scalar_select %p223, %s222, 127
      %s225 = smul.addr %s224, 4
      %s226 = scalar_lea.vmem %s5, %s225
      %s227 = smul.u32 64, %s16
      %v229 = vld [vmem:[%s220] sm:$0xf]
      %v230 = vld [vmem:[%s220 + $0x4] sm:$0xf]
      %v231 = vld [vmem:[%s220 + $0x8] sm:$0xf]
      %v232 = vld [vmem:[%s220 + $0xc] sm:$0xf]
      %v233 = vld [vmem:[%s220 + $0x10] sm:$0xf]
      %v234 = vld [vmem:[%s220 + $0x14] sm:$0xf]
      %v235 = vld [vmem:[%s220 + $0x18] sm:$0xf]
      %v236 = vld [vmem:[%s220 + $0x1c] sm:$0xf]
      %v237 = vld [vmem:[%s220 + $0x20] sm:$0xf]
      %v238 = vld [vmem:[%s220 + $0x24] sm:$0xf]
      %v239 = vld [vmem:[%s220 + $0x28] sm:$0xf]
      %v240 = vld [vmem:[%s220 + $0x2c] sm:$0xf]
      %v241 = vld [vmem:[%s220 + $0x30] sm:$0xf]
      %v242 = vld [vmem:[%s220 + $0x34] sm:$0xf]
      %v243 = vld [vmem:[%s220 + $0x38] sm:$0xf]
      %v244 = vld [vmem:[%s220 + $0x3c] sm:$0xf]
      %v245 = vld [vmem:[%s220 + $0x40] sm:$0xf]
      %v246 = vld [vmem:[%s220 + $0x44] sm:$0xf]
      %v247 = vld [vmem:[%s220 + $0x48] sm:$0xf]
      %v248 = vld [vmem:[%s220 + $0x4c] sm:$0xf]
      %v249 = vld [vmem:[%s220 + $0x50] sm:$0xf]
      %v250 = vld [vmem:[%s220 + $0x54] sm:$0xf]
      %v251 = vld [vmem:[%s220 + $0x58] sm:$0xf]
      %v252 = vld [vmem:[%s220 + $0x5c] sm:$0xf]
      %v253 = vld [vmem:[%s220 + $0x60] sm:$0xf]
      %v254 = vld [vmem:[%s220 + $0x64] sm:$0xf]
      %v255 = vld [vmem:[%s220 + $0x68] sm:$0xf]
      %v256 = vld [vmem:[%s220 + $0x6c] sm:$0xf]
      %v257 = vld [vmem:[%s220 + $0x70] sm:$0xf]
      %v258 = vld [vmem:[%s220 + $0x74] sm:$0xf]
      %v259 = vld [vmem:[%s220 + $0x78] sm:$0xf]
      %v260 = vld [vmem:[%s220 + $0x7c] sm:$0xf]
      %v261 = vld [vmem:[%s220 + $0x80] sm:$0xf]
      %v262 = vld [vmem:[%s220 + $0x84] sm:$0xf]
      %v263 = vld [vmem:[%s220 + $0x88] sm:$0xf]
      %v264 = vld [vmem:[%s220 + $0x8c] sm:$0xf]
      %v265 = vld [vmem:[%s220 + $0x90] sm:$0xf]
      %v266 = vld [vmem:[%s220 + $0x94] sm:$0xf]
      %v267 = vld [vmem:[%s220 + $0x98] sm:$0xf]
      %v268 = vld [vmem:[%s220 + $0x9c] sm:$0xf]
      %v269 = vld [vmem:[%s220 + $0xa0] sm:$0xf]
      %v270 = vld [vmem:[%s220 + $0xa4] sm:$0xf]
      %v271 = vld [vmem:[%s220 + $0xa8] sm:$0xf]
      %v272 = vld [vmem:[%s220 + $0xac] sm:$0xf]
      %v273 = vld [vmem:[%s220 + $0xb0] sm:$0xf]
      %v274 = vld [vmem:[%s220 + $0xb4] sm:$0xf]
      %v275 = vld [vmem:[%s220 + $0xb8] sm:$0xf]
      %v276 = vld [vmem:[%s220 + $0xbc] sm:$0xf]
      %v277 = vld [vmem:[%s220 + $0xc0] sm:$0xf]
      %v278 = vld [vmem:[%s220 + $0xc4] sm:$0xf]
      %v279 = vld [vmem:[%s220 + $0xc8] sm:$0xf]
      %v280 = vld [vmem:[%s220 + $0xcc] sm:$0xf]
      %v281 = vld [vmem:[%s220 + $0xd0] sm:$0xf]
      %v282 = vld [vmem:[%s220 + $0xd4] sm:$0xf]
      %v283 = vld [vmem:[%s220 + $0xd8] sm:$0xf]
      %v284 = vld [vmem:[%s220 + $0xdc] sm:$0xf]
      %v285 = vld [vmem:[%s220 + $0xe0] sm:$0xf]
      %v286 = vld [vmem:[%s220 + $0xe4] sm:$0xf]
      %v287 = vld [vmem:[%s220 + $0xe8] sm:$0xf]
      %v288 = vld [vmem:[%s220 + $0xec] sm:$0xf]
      %v289 = vld [vmem:[%s220 + $0xf0] sm:$0xf]
      %v290 = vld [vmem:[%s220 + $0xf4] sm:$0xf]
      %v291 = vld [vmem:[%s220 + $0xf8] sm:$0xf]
      %v292 = vld [vmem:[%s220 + $0xfc] sm:$0xf]
      %v293 = vunpack.c.l.bf16 %v229
      %v294 = vunpack.c.l.bf16 %v230
      %v295 = vunpack.c.l.bf16 %v231
      %v296 = vunpack.c.l.bf16 %v232
      %v297 = vunpack.c.l.bf16 %v233
      %v298 = vunpack.c.l.bf16 %v234
      %v299 = vunpack.c.l.bf16 %v235
      %v300 = vunpack.c.l.bf16 %v236
      %v301 = vunpack.c.l.bf16 %v237
      %v302 = vunpack.c.l.bf16 %v238
      %v303 = vunpack.c.l.bf16 %v239
      %v304 = vunpack.c.l.bf16 %v240
      %v305 = vunpack.c.l.bf16 %v241
      %v306 = vunpack.c.l.bf16 %v242
      %v307 = vunpack.c.l.bf16 %v243
      %v308 = vunpack.c.l.bf16 %v244
      %v309 = vunpack.c.l.bf16 %v245
      %v310 = vunpack.c.l.bf16 %v246
      %v311 = vunpack.c.l.bf16 %v247
      %v312 = vunpack.c.l.bf16 %v248
      %v313 = vunpack.c.l.bf16 %v249
      %v314 = vunpack.c.l.bf16 %v250
      %v315 = vunpack.c.l.bf16 %v251
      %v316 = vunpack.c.l.bf16 %v252
      %v317 = vunpack.c.l.bf16 %v253
      %v318 = vunpack.c.l.bf16 %v254
      %v319 = vunpack.c.l.bf16 %v255
      %v320 = vunpack.c.l.bf16 %v256
      %v321 = vunpack.c.l.bf16 %v257
      %v322 = vunpack.c.l.bf16 %v258
      %v323 = vunpack.c.l.bf16 %v259
      %v324 = vunpack.c.l.bf16 %v260
      %v325 = vunpack.c.l.bf16 %v261
      %v326 = vunpack.c.l.bf16 %v262
      %v327 = vunpack.c.l.bf16 %v263
      %v328 = vunpack.c.l.bf16 %v264
      %v329 = vunpack.c.l.bf16 %v265
      %v330 = vunpack.c.l.bf16 %v266
      %v331 = vunpack.c.l.bf16 %v267
      %v332 = vunpack.c.l.bf16 %v268
      %v333 = vunpack.c.l.bf16 %v269
      %v334 = vunpack.c.l.bf16 %v270
      %v335 = vunpack.c.l.bf16 %v271
      %v336 = vunpack.c.l.bf16 %v272
      %v337 = vunpack.c.l.bf16 %v273
      %v338 = vunpack.c.l.bf16 %v274
      %v339 = vunpack.c.l.bf16 %v275
      %v340 = vunpack.c.l.bf16 %v276
      %v341 = vunpack.c.l.bf16 %v277
      %v342 = vunpack.c.l.bf16 %v278
      %v343 = vunpack.c.l.bf16 %v279
      %v344 = vunpack.c.l.bf16 %v280
      %v345 = vunpack.c.l.bf16 %v281
      %v346 = vunpack.c.l.bf16 %v282
      %v347 = vunpack.c.l.bf16 %v283
      %v348 = vunpack.c.l.bf16 %v284
      %v349 = vunpack.c.l.bf16 %v285
      %v350 = vunpack.c.l.bf16 %v286
      %v351 = vunpack.c.l.bf16 %v287
      %v352 = vunpack.c.l.bf16 %v288
      %v353 = vunpack.c.l.bf16 %v289
      %v354 = vunpack.c.l.bf16 %v290
      %v355 = vunpack.c.l.bf16 %v291
      %v356 = vunpack.c.l.bf16 %v292
      %v357 = vld [vmem:[%s2] sm:$0x1]
      %v358 = vrot.slane %v293, 1
      %v359 = vrot.slane %v294, 1
      %v360 = vrot.slane %v295, 1
      %v361 = vrot.slane %v296, 1
      %v362 = vrot.slane %v297, 1
      %v363 = vrot.slane %v298, 1
      %v364 = vrot.slane %v299, 1
      %v365 = vrot.slane %v300, 1
      %v366 = vrot.slane %v301, 1
      %v367 = vrot.slane %v302, 1
      %v368 = vrot.slane %v303, 1
      %v369 = vrot.slane %v304, 1
      %v370 = vrot.slane %v305, 1
      %v371 = vrot.slane %v306, 1
      %v372 = vrot.slane %v307, 1
      %v373 = vrot.slane %v308, 1
      %v374 = vrot.slane %v309, 1
      %v375 = vrot.slane %v310, 1
      %v376 = vrot.slane %v311, 1
      %v377 = vrot.slane %v312, 1
      %v378 = vrot.slane %v313, 1
      %v379 = vrot.slane %v314, 1
      %v380 = vrot.slane %v315, 1
      %v381 = vrot.slane %v316, 1
      %v382 = vrot.slane %v317, 1
      %v383 = vrot.slane %v318, 1
      %v384 = vrot.slane %v319, 1
      %v385 = vrot.slane %v320, 1
      %v386 = vrot.slane %v321, 1
      %v387 = vrot.slane %v322, 1
      %v388 = vrot.slane %v323, 1
      %v389 = vrot.slane %v324, 1
      %v390 = vrot.slane %v325, 1
      %v391 = vrot.slane %v326, 1
      %v392 = vrot.slane %v327, 1
      %v393 = vrot.slane %v328, 1
      %v394 = vrot.slane %v329, 1
      %v395 = vrot.slane %v330, 1
      %v396 = vrot.slane %v331, 1
      %v397 = vrot.slane %v332, 1
      %v398 = vrot.slane %v333, 1
      %v399 = vrot.slane %v334, 1
      %v400 = vrot.slane %v335, 1
      %v401 = vrot.slane %v336, 1
      %v402 = vrot.slane %v337, 1
      %v403 = vrot.slane %v338, 1
      %v404 = vrot.slane %v339, 1
      %v405 = vrot.slane %v340, 1
      %v406 = vrot.slane %v341, 1
      %v407 = vrot.slane %v342, 1
      %v408 = vrot.slane %v343, 1
      %v409 = vrot.slane %v344, 1
      %v410 = vrot.slane %v345, 1
      %v411 = vrot.slane %v346, 1
      %v412 = vrot.slane %v347, 1
      %v413 = vrot.slane %v348, 1
      %v414 = vrot.slane %v349, 1
      %v415 = vrot.slane %v350, 1
      %v416 = vrot.slane %v351, 1
      %v417 = vrot.slane %v352, 1
      %v418 = vrot.slane %v353, 1
      %v419 = vrot.slane %v354, 1
      %v420 = vrot.slane %v355, 1
      %v421 = vrot.slane %v356, 1
      %v422 = vlaneseq
      %v423 = vshrl.u32 %v422, 7
      %vm424 = vcmp.lt.s32.totalorder %v423, 7
      %v425 = vsel %vm424, %v420, %v421
      %v426 = vsel %vm424, %v419, %v420
      %v427 = vsel %vm424, %v418, %v419
      %v428 = vsel %vm424, %v417, %v418
      %v429 = vsel %vm424, %v416, %v417
      %v430 = vsel %vm424, %v415, %v416
      %v431 = vsel %vm424, %v414, %v415
      %v432 = vsel %vm424, %v413, %v414
      %v433 = vsel %vm424, %v412, %v413
      %v434 = vsel %vm424, %v411, %v412
      %v435 = vsel %vm424, %v410, %v411
      %v436 = vsel %vm424, %v409, %v410
      %v437 = vsel %vm424, %v408, %v409
      %v438 = vsel %vm424, %v407, %v408
      %v439 = vsel %vm424, %v406, %v407
      %v440 = vsel %vm424, %v405, %v406
      %v441 = vsel %vm424, %v404, %v405
      %v442 = vsel %vm424, %v403, %v404
      %v443 = vsel %vm424, %v402, %v403
      %v444 = vsel %vm424, %v401, %v402
      %v445 = vsel %vm424, %v400, %v401
      %v446 = vsel %vm424, %v399, %v400
      %v447 = vsel %vm424, %v398, %v399
      %v448 = vsel %vm424, %v397, %v398
      %v449 = vsel %vm424, %v396, %v397
      %v450 = vsel %vm424, %v395, %v396
      %v451 = vsel %vm424, %v394, %v395
      %v452 = vsel %vm424, %v393, %v394
      %v453 = vsel %vm424, %v392, %v393
      %v454 = vsel %vm424, %v391, %v392
      %v455 = vsel %vm424, %v390, %v391
      %v456 = vsel %vm424, %v389, %v390
      %v457 = vsel %vm424, %v388, %v389
      %v458 = vsel %vm424, %v387, %v388
      %v459 = vsel %vm424, %v386, %v387
      %v460 = vsel %vm424, %v385, %v386
      %v461 = vsel %vm424, %v384, %v385
      %v462 = vsel %vm424, %v383, %v384
      %v463 = vsel %vm424, %v382, %v383
      %v464 = vsel %vm424, %v381, %v382
      %v465 = vsel %vm424, %v380, %v381
      %v466 = vsel %vm424, %v379, %v380
      %v467 = vsel %vm424, %v378, %v379
      %v468 = vsel %vm424, %v377, %v378
      %v469 = vsel %vm424, %v376, %v377
      %v470 = vsel %vm424, %v375, %v376
      %v471 = vsel %vm424, %v374, %v375
      %v472 = vsel %vm424, %v373, %v374
      %v473 = vsel %vm424, %v372, %v373
      %v474 = vsel %vm424, %v371, %v372
      %v475 = vsel %vm424, %v370, %v371
      %v476 = vsel %vm424, %v369, %v370
      %v477 = vsel %vm424, %v368, %v369
      %v478 = vsel %vm424, %v367, %v368
      %v479 = vsel %vm424, %v366, %v367
      %v480 = vsel %vm424, %v365, %v366
      %v481 = vsel %vm424, %v364, %v365
      %v482 = vsel %vm424, %v363, %v364
      %v483 = vsel %vm424, %v362, %v363
      %v484 = vsel %vm424, %v361, %v362
      %v485 = vsel %vm424, %v360, %v361
      %v486 = vsel %vm424, %v359, %v360
      %v487 = vsel %vm424, %v358, %v359
      %v488 = vsel %vm424, %v421, %v358
      %v489 = vpack.c.bf16 %v486, %v487
      %v490 = vpack.c.bf16 %v484, %v485
      %v491 = vpack.c.bf16 %v482, %v483
      %v492 = vpack.c.bf16 %v480, %v481
      %v493 = vpack.c.bf16 %v478, %v479
      %v494 = vpack.c.bf16 %v476, %v477
      %v495 = vpack.c.bf16 %v474, %v475
      %v496 = vpack.c.bf16 %v472, %v473
      %v497 = vpack.c.bf16 %v470, %v471
      %v498 = vpack.c.bf16 %v468, %v469
      %v499 = vpack.c.bf16 %v466, %v467
      %v500 = vpack.c.bf16 %v464, %v465
      %v501 = vpack.c.bf16 %v462, %v463
      %v502 = vpack.c.bf16 %v460, %v461
      %v503 = vpack.c.bf16 %v458, %v459
      %v504 = vpack.c.bf16 %v456, %v457
      %v505 = vpack.c.bf16 %v454, %v455
      %v506 = vpack.c.bf16 %v452, %v453
      %v507 = vpack.c.bf16 %v450, %v451
      %v508 = vpack.c.bf16 %v448, %v449
      %v509 = vpack.c.bf16 %v446, %v447
      %v510 = vpack.c.bf16 %v444, %v445
      %v511 = vpack.c.bf16 %v442, %v443
      %v512 = vpack.c.bf16 %v440, %v441
      %v513 = vpack.c.bf16 %v438, %v439
      %v514 = vpack.c.bf16 %v436, %v437
      %v515 = vpack.c.bf16 %v434, %v435
      %v516 = vpack.c.bf16 %v432, %v433
      %v517 = vpack.c.bf16 %v430, %v431
      %v518 = vpack.c.bf16 %v428, %v429
      %v519 = vpack.c.bf16 %v426, %v427
      %v520 = vpack.c.bf16 %v488, %v425
      %v521 = vrot.slane %v293, 2
      %v522 = vrot.slane %v294, 2
      %v523 = vrot.slane %v295, 2
      %v524 = vrot.slane %v296, 2
      %v525 = vrot.slane %v297, 2
      %v526 = vrot.slane %v298, 2
      %v527 = vrot.slane %v299, 2
      %v528 = vrot.slane %v300, 2
      %v529 = vrot.slane %v301, 2
      %v530 = vrot.slane %v302, 2
      %v531 = vrot.slane %v303, 2
      %v532 = vrot.slane %v304, 2
      %v533 = vrot.slane %v305, 2
      %v534 = vrot.slane %v306, 2
      %v535 = vrot.slane %v307, 2
      %v536 = vrot.slane %v308, 2
      %v537 = vrot.slane %v309, 2
      %v538 = vrot.slane %v310, 2
      %v539 = vrot.slane %v311, 2
      %v540 = vrot.slane %v312, 2
      %v541 = vrot.slane %v313, 2
      %v542 = vrot.slane %v314, 2
      %v543 = vrot.slane %v315, 2
      %v544 = vrot.slane %v316, 2
      %v545 = vrot.slane %v317, 2
      %v546 = vrot.slane %v318, 2
      %v547 = vrot.slane %v319, 2
      %v548 = vrot.slane %v320, 2
      %v549 = vrot.slane %v321, 2
      %v550 = vrot.slane %v322, 2
      %v551 = vrot.slane %v323, 2
      %v552 = vrot.slane %v324, 2
      %v553 = vrot.slane %v325, 2
      %v554 = vrot.slane %v326, 2
      %v555 = vrot.slane %v327, 2
      %v556 = vrot.slane %v328, 2
      %v557 = vrot.slane %v329, 2
      %v558 = vrot.slane %v330, 2
      %v559 = vrot.slane %v331, 2
      %v560 = vrot.slane %v332, 2
      %v561 = vrot.slane %v333, 2
      %v562 = vrot.slane %v334, 2
      %v563 = vrot.slane %v335, 2
      %v564 = vrot.slane %v336, 2
      %v565 = vrot.slane %v337, 2
      %v566 = vrot.slane %v338, 2
      %v567 = vrot.slane %v339, 2
      %v568 = vrot.slane %v340, 2
      %v569 = vrot.slane %v341, 2
      %v570 = vrot.slane %v342, 2
      %v571 = vrot.slane %v343, 2
      %v572 = vrot.slane %v344, 2
      %v573 = vrot.slane %v345, 2
      %v574 = vrot.slane %v346, 2
      %v575 = vrot.slane %v347, 2
      %v576 = vrot.slane %v348, 2
      %v577 = vrot.slane %v349, 2
      %v578 = vrot.slane %v350, 2
      %v579 = vrot.slane %v351, 2
      %v580 = vrot.slane %v352, 2
      %v581 = vrot.slane %v353, 2
      %v582 = vrot.slane %v354, 2
      %v583 = vrot.slane %v355, 2
      %v584 = vrot.slane %v356, 2
      %vm585 = vcmp.lt.s32.totalorder %v423, 6
      %v586 = vsel %vm585, %v583, %v584
      %v587 = vsel %vm585, %v582, %v583
      %v588 = vsel %vm585, %v581, %v582
      %v589 = vsel %vm585, %v580, %v581
      %v590 = vsel %vm585, %v579, %v580
      %v591 = vsel %vm585, %v578, %v579
      %v592 = vsel %vm585, %v577, %v578
      %v593 = vsel %vm585, %v576, %v577
      %v594 = vsel %vm585, %v575, %v576
      %v595 = vsel %vm585, %v574, %v575
      %v596 = vsel %vm585, %v573, %v574
      %v597 = vsel %vm585, %v572, %v573
      %v598 = vsel %vm585, %v571, %v572
      %v599 = vsel %vm585, %v570, %v571
      %v600 = vsel %vm585, %v569, %v570
      %v601 = vsel %vm585, %v568, %v569
      %v602 = vsel %vm585, %v567, %v568
      %v603 = vsel %vm585, %v566, %v567
      %v604 = vsel %vm585, %v565, %v566
      %v605 = vsel %vm585, %v564, %v565
      %v606 = vsel %vm585, %v563, %v564
      %v607 = vsel %vm585, %v562, %v563
      %v608 = vsel %vm585, %v561, %v562
      %v609 = vsel %vm585, %v560, %v561
      %v610 = vsel %vm585, %v559, %v560
      %v611 = vsel %vm585, %v558, %v559
      %v612 = vsel %vm585, %v557, %v558
      %v613 = vsel %vm585, %v556, %v557
      %v614 = vsel %vm585, %v555, %v556
      %v615 = vsel %vm585, %v554, %v555
      %v616 = vsel %vm585, %v553, %v554
      %v617 = vsel %vm585, %v552, %v553
      %v618 = vsel %vm585, %v551, %v552
      %v619 = vsel %vm585, %v550, %v551
      %v620 = vsel %vm585, %v549, %v550
      %v621 = vsel %vm585, %v548, %v549
      %v622 = vsel %vm585, %v547, %v548
      %v623 = vsel %vm585, %v546, %v547
      %v624 = vsel %vm585, %v545, %v546
      %v625 = vsel %vm585, %v544, %v545
      %v626 = vsel %vm585, %v543, %v544
      %v627 = vsel %vm585, %v542, %v543
      %v628 = vsel %vm585, %v541, %v542
      %v629 = vsel %vm585, %v540, %v541
      %v630 = vsel %vm585, %v539, %v540
      %v631 = vsel %vm585, %v538, %v539
      %v632 = vsel %vm585, %v537, %v538
      %v633 = vsel %vm585, %v536, %v537
      %v634 = vsel %vm585, %v535, %v536
      %v635 = vsel %vm585, %v534, %v535
      %v636 = vsel %vm585, %v533, %v534
      %v637 = vsel %vm585, %v532, %v533
      %v638 = vsel %vm585, %v531, %v532
      %v639 = vsel %vm585, %v530, %v531
      %v640 = vsel %vm585, %v529, %v530
      %v641 = vsel %vm585, %v528, %v529
      %v642 = vsel %vm585, %v527, %v528
      %v643 = vsel %vm585, %v526, %v527
      %v644 = vsel %vm585, %v525, %v526
      %v645 = vsel %vm585, %v524, %v525
      %v646 = vsel %vm585, %v523, %v524
      %v647 = vsel %vm585, %v522, %v523
      %v648 = vsel %vm585, %v521, %v522
      %v649 = vsel %vm585, %v584, %v521
      %v650 = vpack.c.bf16 %v647, %v648
      %v651 = vpack.c.bf16 %v645, %v646
      %v652 = vpack.c.bf16 %v643, %v644
      %v653 = vpack.c.bf16 %v641, %v642
      %v654 = vpack.c.bf16 %v639, %v640
      %v655 = vpack.c.bf16 %v637, %v638
      %v656 = vpack.c.bf16 %v635, %v636
      %v657 = vpack.c.bf16 %v633, %v634
      %v658 = vpack.c.bf16 %v631, %v632
      %v659 = vpack.c.bf16 %v629, %v630
      %v660 = vpack.c.bf16 %v627, %v628
      %v661 = vpack.c.bf16 %v625, %v626
      %v662 = vpack.c.bf16 %v623, %v624
      %v663 = vpack.c.bf16 %v621, %v622
      %v664 = vpack.c.bf16 %v619, %v620
      %v665 = vpack.c.bf16 %v617, %v618
      %v666 = vpack.c.bf16 %v615, %v616
      %v667 = vpack.c.bf16 %v613, %v614
      %v668 = vpack.c.bf16 %v611, %v612
      %v669 = vpack.c.bf16 %v609, %v610
      %v670 = vpack.c.bf16 %v607, %v608
      %v671 = vpack.c.bf16 %v605, %v606
      %v672 = vpack.c.bf16 %v603, %v604
      %v673 = vpack.c.bf16 %v601, %v602
      %v674 = vpack.c.bf16 %v599, %v600
      %v675 = vpack.c.bf16 %v597, %v598
      %v676 = vpack.c.bf16 %v595, %v596
      %v677 = vpack.c.bf16 %v593, %v594
      %v678 = vpack.c.bf16 %v591, %v592
      %v679 = vpack.c.bf16 %v589, %v590
      %v680 = vpack.c.bf16 %v587, %v588
      %v681 = vpack.c.bf16 %v649, %v586
      %v682 = vpack.c.bf16 %v296, %v295
      %v683 = vpack.c.bf16 %v298, %v297
      %v684 = vpack.c.bf16 %v300, %v299
      %v685 = vpack.c.bf16 %v302, %v301
      %v686 = vpack.c.bf16 %v304, %v303
      %v687 = vpack.c.bf16 %v306, %v305
      %v688 = vpack.c.bf16 %v308, %v307
      %v689 = vpack.c.bf16 %v310, %v309
      %v690 = vpack.c.bf16 %v312, %v311
      %v691 = vpack.c.bf16 %v314, %v313
      %v692 = vpack.c.bf16 %v316, %v315
      %v693 = vpack.c.bf16 %v318, %v317
      %v694 = vpack.c.bf16 %v320, %v319
      %v695 = vpack.c.bf16 %v322, %v321
      %v696 = vpack.c.bf16 %v324, %v323
      %v697 = vpack.c.bf16 %v326, %v325
      %v698 = vpack.c.bf16 %v328, %v327
      %v699 = vpack.c.bf16 %v330, %v329
      %v700 = vpack.c.bf16 %v332, %v331
      %v701 = vpack.c.bf16 %v334, %v333
      %v702 = vpack.c.bf16 %v336, %v335
      %v703 = vpack.c.bf16 %v338, %v337
      %v704 = vpack.c.bf16 %v340, %v339
      %v705 = vpack.c.bf16 %v342, %v341
      %v706 = vpack.c.bf16 %v344, %v343
      %v707 = vpack.c.bf16 %v346, %v345
      %v708 = vpack.c.bf16 %v348, %v347
      %v709 = vpack.c.bf16 %v350, %v349
      %v710 = vpack.c.bf16 %v352, %v351
      %v711 = vpack.c.bf16 %v354, %v353
      %v712 = vpack.c.bf16 %v356, %v355
      %v713 = vpack.c.bf16 %v294, %v293
      %v778 = vunpack.c.l.b16 %v229
      %v779 = vunpack.c.l.b16 %v230
      %v780 = vunpack.c.l.b16 %v231
      %v781 = vunpack.c.l.b16 %v232
      %v782 = vunpack.c.l.b16 %v233
      %v783 = vunpack.c.l.b16 %v234
      %v784 = vunpack.c.l.b16 %v235
      %v785 = vunpack.c.l.b16 %v236
      %v786 = vunpack.c.l.b16 %v237
      %v787 = vunpack.c.l.b16 %v238
      %v788 = vunpack.c.l.b16 %v239
      %v789 = vunpack.c.l.b16 %v240
      %v790 = vunpack.c.l.b16 %v241
      %v791 = vunpack.c.l.b16 %v242
      %v792 = vunpack.c.l.b16 %v243
      %v793 = vunpack.c.l.b16 %v244
      %v794 = vunpack.c.l.b16 %v245
      %v795 = vunpack.c.l.b16 %v246
      %v796 = vunpack.c.l.b16 %v247
      %v797 = vunpack.c.l.b16 %v248
      %v798 = vunpack.c.l.b16 %v249
      %v799 = vunpack.c.l.b16 %v250
      %v800 = vunpack.c.l.b16 %v251
      %v801 = vunpack.c.l.b16 %v252
      %v802 = vunpack.c.l.b16 %v253
      %v803 = vunpack.c.l.b16 %v254
      %v804 = vunpack.c.l.b16 %v255
      %v805 = vunpack.c.l.b16 %v256
      %v806 = vunpack.c.l.b16 %v257
      %v807 = vunpack.c.l.b16 %v258
      %v808 = vunpack.c.l.b16 %v259
      %v809 = vunpack.c.l.b16 %v260
      %v810 = vunpack.c.l.b16 %v261
      %v811 = vunpack.c.l.b16 %v262
      %v812 = vunpack.c.l.b16 %v263
      %v813 = vunpack.c.l.b16 %v264
      %v814 = vunpack.c.l.b16 %v265
      %v815 = vunpack.c.l.b16 %v266
      %v816 = vunpack.c.l.b16 %v267
      %v817 = vunpack.c.l.b16 %v268
      %v818 = vunpack.c.l.b16 %v269
      %v819 = vunpack.c.l.b16 %v270
      %v820 = vunpack.c.l.b16 %v271
      %v821 = vunpack.c.l.b16 %v272
      %v822 = vunpack.c.l.b16 %v273
      %v823 = vunpack.c.l.b16 %v274
      %v824 = vunpack.c.l.b16 %v275
      %v825 = vunpack.c.l.b16 %v276
      %v826 = vunpack.c.l.b16 %v277
      %v827 = vunpack.c.l.b16 %v278
      %v828 = vunpack.c.l.b16 %v279
      %v829 = vunpack.c.l.b16 %v280
      %v830 = vunpack.c.l.b16 %v281
      %v831 = vunpack.c.l.b16 %v282
      %v832 = vunpack.c.l.b16 %v283
      %v833 = vunpack.c.l.b16 %v284
      %v834 = vunpack.c.l.b16 %v285
      %v835 = vunpack.c.l.b16 %v286
      %v836 = vunpack.c.l.b16 %v287
      %v837 = vunpack.c.l.b16 %v288
      %v838 = vunpack.c.l.b16 %v289
      %v839 = vunpack.c.l.b16 %v290
      %v840 = vunpack.c.l.b16 %v291
      %v841 = vunpack.c.l.b16 %v292
      %v842 = vpack.c.b16 %v779, %v778
      %v843 = vpack.c.b16 %v781, %v780
      %v844 = vpack.c.b16 %v783, %v782
      %v845 = vpack.c.b16 %v785, %v784
      %v846 = vpack.c.b16 %v787, %v786
      %v847 = vpack.c.b16 %v789, %v788
      %v848 = vpack.c.b16 %v791, %v790
      %v849 = vpack.c.b16 %v793, %v792
      %v850 = vpack.c.b16 %v795, %v794
      %v851 = vpack.c.b16 %v797, %v796
      %v852 = vpack.c.b16 %v799, %v798
      %v853 = vpack.c.b16 %v801, %v800
      %v854 = vpack.c.b16 %v803, %v802
      %v855 = vpack.c.b16 %v805, %v804
      %v856 = vpack.c.b16 %v807, %v806
      %v857 = vpack.c.b16 %v809, %v808
      %v858 = vpack.c.b16 %v811, %v810
      %v859 = vpack.c.b16 %v813, %v812
      %v860 = vpack.c.b16 %v815, %v814
      %v861 = vpack.c.b16 %v817, %v816
      %v862 = vpack.c.b16 %v819, %v818
      %v863 = vpack.c.b16 %v821, %v820
      %v864 = vpack.c.b16 %v823, %v822
      %v865 = vpack.c.b16 %v825, %v824
      %v866 = vpack.c.b16 %v827, %v826
      %v867 = vpack.c.b16 %v829, %v828
      %v868 = vpack.c.b16 %v831, %v830
      %v869 = vpack.c.b16 %v833, %v832
      %v870 = vpack.c.b16 %v835, %v834
      %v871 = vpack.c.b16 %v837, %v836
      %v872 = vpack.c.b16 %v839, %v838
      %v873 = vpack.c.b16 %v841, %v840
      %v906 = vld [vmem:[%s1] sm:$0xf]
      %v907 = vld [vmem:[%s1 + $0x4] sm:$0xf]
      %v908 = vld [vmem:[%s1 + $0x8] sm:$0xf]
      %v909 = vld [vmem:[%s1 + $0xc] sm:$0xf]
      %v910 = vld [vmem:[%s1 + $0x10] sm:$0xf]
      %v911 = vld [vmem:[%s1 + $0x14] sm:$0xf]
      %v912 = vld [vmem:[%s1 + $0x18] sm:$0xf]
      %v913 = vld [vmem:[%s1 + $0x1c] sm:$0xf]
      %v914 = vld [vmem:[%s1 + $0x20] sm:$0xf]
      %v915 = vld [vmem:[%s1 + $0x24] sm:$0xf]
      %v916 = vld [vmem:[%s1 + $0x28] sm:$0xf]
      %v917 = vld [vmem:[%s1 + $0x2c] sm:$0xf]
      %v918 = vld [vmem:[%s1 + $0x30] sm:$0xf]
      %v919 = vld [vmem:[%s1 + $0x34] sm:$0xf]
      %v920 = vld [vmem:[%s1 + $0x38] sm:$0xf]
      %v921 = vld [vmem:[%s1 + $0x3c] sm:$0xf]
      %v922 = vld [vmem:[%s1 + $0x40] sm:$0xf]
      %v923 = vld [vmem:[%s1 + $0x44] sm:$0xf]
      %v924 = vld [vmem:[%s1 + $0x48] sm:$0xf]
      %v925 = vld [vmem:[%s1 + $0x4c] sm:$0xf]
      %v926 = vld [vmem:[%s1 + $0x50] sm:$0xf]
      %v927 = vld [vmem:[%s1 + $0x54] sm:$0xf]
      %v928 = vld [vmem:[%s1 + $0x58] sm:$0xf]
      %v929 = vld [vmem:[%s1 + $0x5c] sm:$0xf]
      %v930 = vld [vmem:[%s1 + $0x60] sm:$0xf]
      %v931 = vld [vmem:[%s1 + $0x64] sm:$0xf]
      %v932 = vld [vmem:[%s1 + $0x68] sm:$0xf]
      %v933 = vld [vmem:[%s1 + $0x6c] sm:$0xf]
      %v934 = vld [vmem:[%s1 + $0x70] sm:$0xf]
      %v935 = vld [vmem:[%s1 + $0x74] sm:$0xf]
      %v936 = vld [vmem:[%s1 + $0x78] sm:$0xf]
      %v937 = vld [vmem:[%s1 + $0x7c] sm:$0xf]
      %v938 = vld [vmem:[%s1 + $0x80] sm:$0xf]
      %v939 = vld [vmem:[%s1 + $0x84] sm:$0xf]
      %v940 = vld [vmem:[%s1 + $0x88] sm:$0xf]
      %v941 = vld [vmem:[%s1 + $0x8c] sm:$0xf]
      %v942 = vld [vmem:[%s1 + $0x90] sm:$0xf]
      %v943 = vld [vmem:[%s1 + $0x94] sm:$0xf]
      %v944 = vld [vmem:[%s1 + $0x98] sm:$0xf]
      %v945 = vld [vmem:[%s1 + $0x9c] sm:$0xf]
      %v946 = vld [vmem:[%s1 + $0xa0] sm:$0xf]
      %v947 = vld [vmem:[%s1 + $0xa4] sm:$0xf]
      %v948 = vld [vmem:[%s1 + $0xa8] sm:$0xf]
      %v949 = vld [vmem:[%s1 + $0xac] sm:$0xf]
      %v950 = vld [vmem:[%s1 + $0xb0] sm:$0xf]
      %v951 = vld [vmem:[%s1 + $0xb4] sm:$0xf]
      %v952 = vld [vmem:[%s1 + $0xb8] sm:$0xf]
      %v953 = vld [vmem:[%s1 + $0xbc] sm:$0xf]
      %v954 = vld [vmem:[%s1 + $0xc0] sm:$0xf]
      %v955 = vld [vmem:[%s1 + $0xc4] sm:$0xf]
      %v956 = vld [vmem:[%s1 + $0xc8] sm:$0xf]
      %v957 = vld [vmem:[%s1 + $0xcc] sm:$0xf]
      %v958 = vld [vmem:[%s1 + $0xd0] sm:$0xf]
      %v959 = vld [vmem:[%s1 + $0xd4] sm:$0xf]
      %v960 = vld [vmem:[%s1 + $0xd8] sm:$0xf]
      %v961 = vld [vmem:[%s1 + $0xdc] sm:$0xf]
      %v962 = vld [vmem:[%s1 + $0xe0] sm:$0xf]
      %v963 = vld [vmem:[%s1 + $0xe4] sm:$0xf]
      %v964 = vld [vmem:[%s1 + $0xe8] sm:$0xf]
      %v965 = vld [vmem:[%s1 + $0xec] sm:$0xf]
      %v966 = vld [vmem:[%s1 + $0xf0] sm:$0xf]
      %v967 = vld [vmem:[%s1 + $0xf4] sm:$0xf]
      %v968 = vld [vmem:[%s1 + $0xf8] sm:$0xf]
      %v969 = vld [vmem:[%s1 + $0xfc] sm:$0xf]
      %v970 = vld [vmem:[%s1 + $0x100] sm:$0xf]
      %v971 = vld [vmem:[%s1 + $0x104] sm:$0xf]
      %v972 = vld [vmem:[%s1 + $0x108] sm:$0xf]
      %v973 = vld [vmem:[%s1 + $0x10c] sm:$0xf]
      %v974 = vld [vmem:[%s1 + $0x110] sm:$0xf]
      %v975 = vld [vmem:[%s1 + $0x114] sm:$0xf]
      %v976 = vld [vmem:[%s1 + $0x118] sm:$0xf]
      %v977 = vld [vmem:[%s1 + $0x11c] sm:$0xf]
      %v978 = vld [vmem:[%s1 + $0x120] sm:$0xf]
      %v979 = vld [vmem:[%s1 + $0x124] sm:$0xf]
      %v980 = vld [vmem:[%s1 + $0x128] sm:$0xf]
      %v981 = vld [vmem:[%s1 + $0x12c] sm:$0xf]
      %v982 = vld [vmem:[%s1 + $0x130] sm:$0xf]
      %v983 = vld [vmem:[%s1 + $0x134] sm:$0xf]
      %v984 = vld [vmem:[%s1 + $0x138] sm:$0xf]
      %v985 = vld [vmem:[%s1 + $0x13c] sm:$0xf]
      %v986 = vld [vmem:[%s1 + $0x140] sm:$0xf]
      %v987 = vld [vmem:[%s1 + $0x144] sm:$0xf]
      %v988 = vld [vmem:[%s1 + $0x148] sm:$0xf]
      %v989 = vld [vmem:[%s1 + $0x14c] sm:$0xf]
      %v990 = vld [vmem:[%s1 + $0x150] sm:$0xf]
      %v991 = vld [vmem:[%s1 + $0x154] sm:$0xf]
      %v992 = vld [vmem:[%s1 + $0x158] sm:$0xf]
      %v993 = vld [vmem:[%s1 + $0x15c] sm:$0xf]
      %v994 = vld [vmem:[%s1 + $0x160] sm:$0xf]
      %v995 = vld [vmem:[%s1 + $0x164] sm:$0xf]
      %v996 = vld [vmem:[%s1 + $0x168] sm:$0xf]
      %v997 = vld [vmem:[%s1 + $0x16c] sm:$0xf]
      %v998 = vld [vmem:[%s1 + $0x170] sm:$0xf]
      %v999 = vld [vmem:[%s1 + $0x174] sm:$0xf]
      %v1000 = vld [vmem:[%s1 + $0x178] sm:$0xf]
      %v1001 = vld [vmem:[%s1 + $0x17c] sm:$0xf]
      %v1002 = vld [vmem:[%s1 + $0x180] sm:$0xf]
      %v1003 = vld [vmem:[%s1 + $0x184] sm:$0xf]
      %v1004 = vld [vmem:[%s1 + $0x188] sm:$0xf]
      %v1005 = vld [vmem:[%s1 + $0x18c] sm:$0xf]
      %v1006 = vld [vmem:[%s1 + $0x190] sm:$0xf]
      %v1007 = vld [vmem:[%s1 + $0x194] sm:$0xf]
      %v1008 = vld [vmem:[%s1 + $0x198] sm:$0xf]
      %v1009 = vld [vmem:[%s1 + $0x19c] sm:$0xf]
      %v1010 = vld [vmem:[%s1 + $0x1a0] sm:$0xf]
      %v1011 = vld [vmem:[%s1 + $0x1a4] sm:$0xf]
      %v1012 = vld [vmem:[%s1 + $0x1a8] sm:$0xf]
      %v1013 = vld [vmem:[%s1 + $0x1ac] sm:$0xf]
      %v1014 = vld [vmem:[%s1 + $0x1b0] sm:$0xf]
      %v1015 = vld [vmem:[%s1 + $0x1b4] sm:$0xf]
      %v1016 = vld [vmem:[%s1 + $0x1b8] sm:$0xf]
      %v1017 = vld [vmem:[%s1 + $0x1bc] sm:$0xf]
      %v1018 = vld [vmem:[%s1 + $0x1c0] sm:$0xf]
      %v1019 = vld [vmem:[%s1 + $0x1c4] sm:$0xf]
      %v1020 = vld [vmem:[%s1 + $0x1c8] sm:$0xf]
      %v1021 = vld [vmem:[%s1 + $0x1cc] sm:$0xf]
      %v1022 = vld [vmem:[%s1 + $0x1d0] sm:$0xf]
      %v1023 = vld [vmem:[%s1 + $0x1d4] sm:$0xf]
      %v1024 = vld [vmem:[%s1 + $0x1d8] sm:$0xf]
      %v1025 = vld [vmem:[%s1 + $0x1dc] sm:$0xf]
      %v1026 = vld [vmem:[%s1 + $0x1e0] sm:$0xf]
      %v1027 = vld [vmem:[%s1 + $0x1e4] sm:$0xf]
      %v1028 = vld [vmem:[%s1 + $0x1e8] sm:$0xf]
      %v1029 = vld [vmem:[%s1 + $0x1ec] sm:$0xf]
      %v1030 = vld [vmem:[%s1 + $0x1f0] sm:$0xf]
      %v1031 = vld [vmem:[%s1 + $0x1f4] sm:$0xf]
      %v1032 = vld [vmem:[%s1 + $0x1f8] sm:$0xf]
      %v1033 = vld [vmem:[%s1 + $0x1fc] sm:$0xf]
      %v1034 = vld [vmem:[%s1 + $0x200] sm:$0xf]
      %v1035 = vld [vmem:[%s1 + $0x204] sm:$0xf]
      %v1036 = vld [vmem:[%s1 + $0x208] sm:$0xf]
      %v1037 = vld [vmem:[%s1 + $0x20c] sm:$0xf]
      %v1038 = vld [vmem:[%s1 + $0x210] sm:$0xf]
      %v1039 = vld [vmem:[%s1 + $0x214] sm:$0xf]
      %v1040 = vld [vmem:[%s1 + $0x218] sm:$0xf]
      %v1041 = vld [vmem:[%s1 + $0x21c] sm:$0xf]
      %v1042 = vld [vmem:[%s1 + $0x220] sm:$0xf]
      %v1043 = vld [vmem:[%s1 + $0x224] sm:$0xf]
      %v1044 = vld [vmem:[%s1 + $0x228] sm:$0xf]
      %v1045 = vld [vmem:[%s1 + $0x22c] sm:$0xf]
      %v1046 = vld [vmem:[%s1 + $0x230] sm:$0xf]
      %v1047 = vld [vmem:[%s1 + $0x234] sm:$0xf]
      %v1048 = vld [vmem:[%s1 + $0x238] sm:$0xf]
      %v1049 = vld [vmem:[%s1 + $0x23c] sm:$0xf]
      %v1051 = vlaneseq
      %v1052 = vshrl.u32 %v1051, 7
      %v1053 = vsub.s32 0, %v1052
      %v1054 = vrot.slane %v357, %v1053
      %v1200 = vunpack.c.l.b16 %v906
      %v1201 = vunpack.c.l.b16 %v907
      %v1202 = vunpack.c.l.b16 %v908
      %v1203 = vunpack.c.l.b16 %v909
      %v1204 = vunpack.c.l.b16 %v910
      %v1205 = vunpack.c.l.b16 %v911
      %v1206 = vunpack.c.l.b16 %v912
      %v1207 = vunpack.c.l.b16 %v913
      %v1208 = vunpack.c.l.b16 %v914
      %v1209 = vunpack.c.l.b16 %v915
      %v1210 = vunpack.c.l.b16 %v916
      %v1211 = vunpack.c.l.b16 %v917
      %v1212 = vunpack.c.l.b16 %v918
      %v1213 = vunpack.c.l.b16 %v919
      %v1214 = vunpack.c.l.b16 %v920
      %v1215 = vunpack.c.l.b16 %v921
      %v1216 = vunpack.c.l.b16 %v922
      %v1217 = vunpack.c.l.b16 %v923
      %v1218 = vunpack.c.l.b16 %v924
      %v1219 = vunpack.c.l.b16 %v925
      %v1220 = vunpack.c.l.b16 %v926
      %v1221 = vunpack.c.l.b16 %v927
      %v1222 = vunpack.c.l.b16 %v928
      %v1223 = vunpack.c.l.b16 %v929
      %v1224 = vunpack.c.l.b16 %v930
      %v1225 = vunpack.c.l.b16 %v931
      %v1226 = vunpack.c.l.b16 %v932
      %v1227 = vunpack.c.l.b16 %v933
      %v1228 = vunpack.c.l.b16 %v934
      %v1229 = vunpack.c.l.b16 %v935
      %v1230 = vunpack.c.l.b16 %v936
      %v1231 = vunpack.c.l.b16 %v937
      %v1232 = vunpack.c.l.b16 %v938
      %v1233 = vunpack.c.l.b16 %v939
      %v1234 = vunpack.c.l.b16 %v940
      %v1235 = vunpack.c.l.b16 %v941
      %v1236 = vunpack.c.l.b16 %v942
      %v1237 = vunpack.c.l.b16 %v943
      %v1238 = vunpack.c.l.b16 %v944
      %v1239 = vunpack.c.l.b16 %v945
      %v1240 = vunpack.c.l.b16 %v946
      %v1241 = vunpack.c.l.b16 %v947
      %v1242 = vunpack.c.l.b16 %v948
      %v1243 = vunpack.c.l.b16 %v949
      %v1244 = vunpack.c.l.b16 %v950
      %v1245 = vunpack.c.l.b16 %v951
      %v1246 = vunpack.c.l.b16 %v952
      %v1247 = vunpack.c.l.b16 %v953
      %v1248 = vunpack.c.l.b16 %v954
      %v1249 = vunpack.c.l.b16 %v955
      %v1250 = vunpack.c.l.b16 %v956
      %v1251 = vunpack.c.l.b16 %v957
      %v1252 = vunpack.c.l.b16 %v958
      %v1253 = vunpack.c.l.b16 %v959
      %v1254 = vunpack.c.l.b16 %v960
      %v1255 = vunpack.c.l.b16 %v961
      %v1256 = vunpack.c.l.b16 %v962
      %v1257 = vunpack.c.l.b16 %v963
      %v1258 = vunpack.c.l.b16 %v964
      %v1259 = vunpack.c.l.b16 %v965
      %v1260 = vunpack.c.l.b16 %v966
      %v1261 = vunpack.c.l.b16 %v967
      %v1262 = vunpack.c.l.b16 %v968
      %v1263 = vunpack.c.l.b16 %v969
      %v1264 = vunpack.c.l.b16 %v970
      %v1265 = vunpack.c.l.b16 %v971
      %v1266 = vunpack.c.l.b16 %v972
      %v1267 = vunpack.c.l.b16 %v973
      %v1268 = vunpack.c.l.b16 %v974
      %v1269 = vunpack.c.l.b16 %v975
      %v1270 = vunpack.c.l.b16 %v976
      %v1271 = vunpack.c.l.b16 %v977
      %v1272 = vunpack.c.l.b16 %v978
      %v1273 = vunpack.c.l.b16 %v979
      %v1274 = vunpack.c.l.b16 %v980
      %v1275 = vunpack.c.l.b16 %v981
      %v1276 = vunpack.c.l.b16 %v982
      %v1277 = vunpack.c.l.b16 %v983
      %v1278 = vunpack.c.l.b16 %v984
      %v1279 = vunpack.c.l.b16 %v985
      %v1280 = vunpack.c.l.b16 %v986
      %v1281 = vunpack.c.l.b16 %v987
      %v1282 = vunpack.c.l.b16 %v988
      %v1283 = vunpack.c.l.b16 %v989
      %v1284 = vunpack.c.l.b16 %v990
      %v1285 = vunpack.c.l.b16 %v991
      %v1286 = vunpack.c.l.b16 %v992
      %v1287 = vunpack.c.l.b16 %v993
      %v1288 = vunpack.c.l.b16 %v994
      %v1289 = vunpack.c.l.b16 %v995
      %v1290 = vunpack.c.l.b16 %v996
      %v1291 = vunpack.c.l.b16 %v997
      %v1292 = vunpack.c.l.b16 %v998
      %v1293 = vunpack.c.l.b16 %v999
      %v1294 = vunpack.c.l.b16 %v1000
      %v1295 = vunpack.c.l.b16 %v1001
      %v1296 = vunpack.c.l.b16 %v1002
      %v1297 = vunpack.c.l.b16 %v1003
      %v1298 = vunpack.c.l.b16 %v1004
      %v1299 = vunpack.c.l.b16 %v1005
      %v1300 = vunpack.c.l.b16 %v1006
      %v1301 = vunpack.c.l.b16 %v1007
      %v1302 = vunpack.c.l.b16 %v1008
      %v1303 = vunpack.c.l.b16 %v1009
      %v1304 = vunpack.c.l.b16 %v1010
      %v1305 = vunpack.c.l.b16 %v1011
      %v1306 = vunpack.c.l.b16 %v1012
      %v1307 = vunpack.c.l.b16 %v1013
      %v1308 = vunpack.c.l.b16 %v1014
      %v1309 = vunpack.c.l.b16 %v1015
      %v1310 = vunpack.c.l.b16 %v1016
      %v1311 = vunpack.c.l.b16 %v1017
      %v1312 = vunpack.c.l.b16 %v1018
      %v1313 = vunpack.c.l.b16 %v1019
      %v1314 = vunpack.c.l.b16 %v1020
      %v1315 = vunpack.c.l.b16 %v1021
      %v1316 = vunpack.c.l.b16 %v1022
      %v1317 = vunpack.c.l.b16 %v1023
      %v1318 = vunpack.c.l.b16 %v1024
      %v1319 = vunpack.c.l.b16 %v1025
      %v1320 = vunpack.c.l.b16 %v1026
      %v1321 = vunpack.c.l.b16 %v1027
      %v1322 = vunpack.c.l.b16 %v1028
      %v1323 = vunpack.c.l.b16 %v1029
      %v1324 = vunpack.c.l.b16 %v1030
      %v1325 = vunpack.c.l.b16 %v1031
      %v1326 = vunpack.c.l.b16 %v1032
      %v1327 = vunpack.c.l.b16 %v1033
      %v1328 = vunpack.c.l.b16 %v1034
      %v1329 = vunpack.c.l.b16 %v1035
      %v1330 = vunpack.c.l.b16 %v1036
      %v1331 = vunpack.c.l.b16 %v1037
      %v1332 = vunpack.c.l.b16 %v1038
      %v1333 = vunpack.c.l.b16 %v1039
      %v1334 = vunpack.c.l.b16 %v1040
      %v1335 = vunpack.c.l.b16 %v1041
      %v1336 = vunpack.c.l.b16 %v1042
      %v1337 = vunpack.c.l.b16 %v1043
      %v1338 = vunpack.c.l.b16 %v1044
      %v1339 = vunpack.c.l.b16 %v1045
      %v1340 = vunpack.c.l.b16 %v1046
      %v1341 = vunpack.c.l.b16 %v1047
      %v1342 = vunpack.c.l.b16 %v1048
      %v1343 = vunpack.c.l.b16 %v1049
      %v1344 = vpack.c.b16 %v1201, %v1200
      %v1345 = vpack.c.b16 %v1203, %v1202
      %v1346 = vpack.c.b16 %v1205, %v1204
      %v1347 = vpack.c.b16 %v1207, %v1206
      %v1348 = vpack.c.b16 %v1209, %v1208
      %v1349 = vpack.c.b16 %v1211, %v1210
      %v1350 = vpack.c.b16 %v1213, %v1212
      %v1351 = vpack.c.b16 %v1215, %v1214
      %v1352 = vpack.c.b16 %v1217, %v1216
      %v1353 = vpack.c.b16 %v1219, %v1218
      %v1354 = vpack.c.b16 %v1221, %v1220
      %v1355 = vpack.c.b16 %v1223, %v1222
      %v1356 = vpack.c.b16 %v1225, %v1224
      %v1357 = vpack.c.b16 %v1227, %v1226
      %v1358 = vpack.c.b16 %v1229, %v1228
      %v1359 = vpack.c.b16 %v1231, %v1230
      %v1360 = vpack.c.b16 %v1233, %v1232
      %v1361 = vpack.c.b16 %v1235, %v1234
      %v1362 = vpack.c.b16 %v1237, %v1236
      %v1363 = vpack.c.b16 %v1239, %v1238
      %v1364 = vpack.c.b16 %v1241, %v1240
      %v1365 = vpack.c.b16 %v1243, %v1242
      %v1366 = vpack.c.b16 %v1245, %v1244
      %v1367 = vpack.c.b16 %v1247, %v1246
      %v1368 = vpack.c.b16 %v1249, %v1248
      %v1369 = vpack.c.b16 %v1251, %v1250
      %v1370 = vpack.c.b16 %v1253, %v1252
      %v1371 = vpack.c.b16 %v1255, %v1254
      %v1372 = vpack.c.b16 %v1257, %v1256
      %v1373 = vpack.c.b16 %v1259, %v1258
      %v1374 = vpack.c.b16 %v1261, %v1260
      %v1375 = vpack.c.b16 %v1263, %v1262
      %v1376 = vpack.c.b16 %v1265, %v1264
      %v1377 = vpack.c.b16 %v1267, %v1266
      %v1378 = vpack.c.b16 %v1269, %v1268
      %v1379 = vpack.c.b16 %v1271, %v1270
      %v1380 = vpack.c.b16 %v1273, %v1272
      %v1381 = vpack.c.b16 %v1275, %v1274
      %v1382 = vpack.c.b16 %v1277, %v1276
      %v1383 = vpack.c.b16 %v1279, %v1278
      %v1384 = vpack.c.b16 %v1281, %v1280
      %v1385 = vpack.c.b16 %v1283, %v1282
      %v1386 = vpack.c.b16 %v1285, %v1284
      %v1387 = vpack.c.b16 %v1287, %v1286
      %v1388 = vpack.c.b16 %v1289, %v1288
      %v1389 = vpack.c.b16 %v1291, %v1290
      %v1390 = vpack.c.b16 %v1293, %v1292
      %v1391 = vpack.c.b16 %v1295, %v1294
      %v1392 = vpack.c.b16 %v1297, %v1296
      %v1393 = vpack.c.b16 %v1299, %v1298
      %v1394 = vpack.c.b16 %v1301, %v1300
      %v1395 = vpack.c.b16 %v1303, %v1302
      %v1396 = vpack.c.b16 %v1305, %v1304
      %v1397 = vpack.c.b16 %v1307, %v1306
      %v1398 = vpack.c.b16 %v1309, %v1308
      %v1399 = vpack.c.b16 %v1311, %v1310
      %v1400 = vpack.c.b16 %v1313, %v1312
      %v1401 = vpack.c.b16 %v1315, %v1314
      %v1402 = vpack.c.b16 %v1317, %v1316
      %v1403 = vpack.c.b16 %v1319, %v1318
      %v1404 = vpack.c.b16 %v1321, %v1320
      %v1405 = vpack.c.b16 %v1323, %v1322
      %v1406 = vpack.c.b16 %v1325, %v1324
      %v1407 = vpack.c.b16 %v1327, %v1326
      %v1408 = vpack.c.b16 %v1329, %v1328
      %v1409 = vpack.c.b16 %v1331, %v1330
      %v1410 = vpack.c.b16 %v1333, %v1332
      %v1411 = vpack.c.b16 %v1335, %v1334
      %v1412 = vpack.c.b16 %v1337, %v1336
      %v1413 = vpack.c.b16 %v1339, %v1338
      %v1414 = vpack.c.b16 %v1341, %v1340
      %v1415 = vpack.c.b16 %v1343, %v1342
      %1488 = vmatprep.subr.bf16.mxu0 0
      %1489 = vmatpush1.bf16.msra.mxu0 %v1351
      %1490 = vmatprep.subr.bf16.mxu0 0
      %1491 = vmatpush1.bf16.msra.mxu0 %v1350
      %1492 = vmatprep.subr.bf16.mxu0 0
      %1493 = vmatpush1.bf16.msra.mxu0 %v1349
      %1494 = vmatprep.subr.bf16.mxu0 0
      %1495 = vmatpush1.bf16.msra.mxu0 %v1348
      %1496 = vmatprep.subr.bf16.mxu0 0
      %1497 = vmatpush1.bf16.msra.mxu0 %v1347
      %1498 = vmatprep.subr.bf16.mxu0 0
      %1499 = vmatpush1.bf16.msra.mxu0 %v1346
      %1500 = vmatprep.subr.bf16.mxu0 0
      %1501 = vmatpush1.bf16.msra.mxu0 %v1345
      %1502 = vmatprep.subr.bf16.mxu0 0
      %1503 = vmatpush1.bf16.msra.mxu0 %v1344
      %1504 = vmatprep.subr.bf16.mxu0 0
      %1505 = vmatpush2.bf16.msra.mxu0 %v1359
      %1506 = vmatprep.subr.bf16.mxu0 0
      %1507 = vmatpush2.bf16.msra.mxu0 %v1358
      %1508 = vmatprep.subr.bf16.mxu0 0
      %1509 = vmatpush2.bf16.msra.mxu0 %v1357
      %1510 = vmatprep.subr.bf16.mxu0 0
      %1511 = vmatpush2.bf16.msra.mxu0 %v1356
      %1512 = vmatprep.subr.bf16.mxu0 0
      %1513 = vmatpush2.bf16.msra.mxu0 %v1355
      %1514 = vmatprep.subr.bf16.mxu0 0
      %1515 = vmatpush2.bf16.msra.mxu0 %v1354
      %1516 = vmatprep.subr.bf16.mxu0 0
      %1517 = vmatpush2.bf16.msra.mxu0 %v1353
      %1518 = vmatprep.subr.bf16.mxu0 0
      %1519 = vmatpush2.bf16.msra.mxu0 %v1352
      %1520 = vmatprep.mubr.bf16.mxu0 %v489
      %1521 = vmatmul.mubr.bf16.gmra.mxu0 %v842
      %v1522 = vpop.f32.mrf.mxu0
      %v1523 = vadd.f32 %v1054, %v1522
      %v1524 = vpop.f32.mrf.mxu0
      %v1525 = vpop.f32.mrf.mxu0
      %v1526 = vadd.f32 %v1054, %v1525
      %v1527 = vpop.f32.mrf.mxu0
      %1528 = vmatprep.mubr.bf16.mxu0 %v490
      %1529 = vmatmul.mubr.bf16.gmra.mxu0 %v843
      %v1530 = vpop.f32.mrf.mxu0
      %v1531 = vadd.f32 %v1054, %v1530
      %v1532 = vpop.f32.mrf.mxu0
      %v1533 = vpop.f32.mrf.mxu0
      %v1534 = vadd.f32 %v1054, %v1533
      %v1535 = vpop.f32.mrf.mxu0
      %1536 = vmatprep.mubr.bf16.mxu0 %v491
      %1537 = vmatmul.mubr.bf16.gmra.mxu0 %v844
      %v1538 = vpop.f32.mrf.mxu0
      %v1539 = vadd.f32 %v1054, %v1538
      %v1540 = vpop.f32.mrf.mxu0
      %v1541 = vpop.f32.mrf.mxu0
      %v1542 = vadd.f32 %v1054, %v1541
      %v1543 = vpop.f32.mrf.mxu0
      %1544 = vmatprep.mubr.bf16.mxu0 %v492
      %1545 = vmatmul.mubr.bf16.gmra.mxu0 %v845
      %v1546 = vpop.f32.mrf.mxu0
      %v1547 = vadd.f32 %v1054, %v1546
      %v1548 = vpop.f32.mrf.mxu0
      %v1549 = vpop.f32.mrf.mxu0
      %v1550 = vadd.f32 %v1054, %v1549
      %v1551 = vpop.f32.mrf.mxu0
      %1552 = vmatprep.mubr.bf16.mxu0 %v493
      %1553 = vmatmul.mubr.bf16.gmra.mxu0 %v846
      %v1554 = vpop.f32.mrf.mxu0
      %v1555 = vadd.f32 %v1054, %v1554
      %v1556 = vpop.f32.mrf.mxu0
      %v1557 = vpop.f32.mrf.mxu0
      %v1558 = vadd.f32 %v1054, %v1557
      %v1559 = vpop.f32.mrf.mxu0
      %1560 = vmatprep.mubr.bf16.mxu0 %v494
      %1561 = vmatmul.mubr.bf16.gmra.mxu0 %v847
      %v1562 = vpop.f32.mrf.mxu0
      %v1563 = vadd.f32 %v1054, %v1562
      %v1564 = vpop.f32.mrf.mxu0
      %v1565 = vpop.f32.mrf.mxu0
      %v1566 = vadd.f32 %v1054, %v1565
      %v1567 = vpop.f32.mrf.mxu0
      %1568 = vmatprep.mubr.bf16.mxu0 %v495
      %1569 = vmatmul.mubr.bf16.gmra.mxu0 %v848
      %v1570 = vpop.f32.mrf.mxu0
      %v1571 = vadd.f32 %v1054, %v1570
      %v1572 = vpop.f32.mrf.mxu0
      %v1573 = vpop.f32.mrf.mxu0
      %v1574 = vadd.f32 %v1054, %v1573
      %v1575 = vpop.f32.mrf.mxu0
      %1576 = vmatprep.mubr.bf16.mxu0 %v496
      %1577 = vmatmul.mubr.bf16.gmra.mxu0 %v849
      %v1578 = vpop.f32.mrf.mxu0
      %v1579 = vadd.f32 %v1054, %v1578
      %v1580 = vpop.f32.mrf.mxu0
      %v1581 = vpop.f32.mrf.mxu0
      %v1582 = vadd.f32 %v1054, %v1581
      %v1583 = vpop.f32.mrf.mxu0
      %1584 = vmatprep.mubr.bf16.mxu0 %v497
      %1585 = vmatmul.mubr.bf16.gmra.mxu0 %v850
      %v1586 = vpop.f32.mrf.mxu0
      %v1587 = vadd.f32 %v1054, %v1586
      %v1588 = vpop.f32.mrf.mxu0
      %v1589 = vpop.f32.mrf.mxu0
      %v1590 = vadd.f32 %v1054, %v1589
      %v1591 = vpop.f32.mrf.mxu0
      %1592 = vmatprep.mubr.bf16.mxu0 %v498
      %1593 = vmatmul.mubr.bf16.gmra.mxu0 %v851
      %v1594 = vpop.f32.mrf.mxu0
      %v1595 = vadd.f32 %v1054, %v1594
      %v1596 = vpop.f32.mrf.mxu0
      %v1597 = vpop.f32.mrf.mxu0
      %v1598 = vadd.f32 %v1054, %v1597
      %v1599 = vpop.f32.mrf.mxu0
      %1600 = vmatprep.mubr.bf16.mxu0 %v499
      %1601 = vmatmul.mubr.bf16.gmra.mxu0 %v852
      %v1602 = vpop.f32.mrf.mxu0
      %v1603 = vadd.f32 %v1054, %v1602
      %v1604 = vpop.f32.mrf.mxu0
      %v1605 = vpop.f32.mrf.mxu0
      %v1606 = vadd.f32 %v1054, %v1605
      %v1607 = vpop.f32.mrf.mxu0
      %1608 = vmatprep.mubr.bf16.mxu0 %v500
      %1609 = vmatmul.mubr.bf16.gmra.mxu0 %v853
      %v1610 = vpop.f32.mrf.mxu0
      %v1611 = vadd.f32 %v1054, %v1610
      %v1612 = vpop.f32.mrf.mxu0
      %v1613 = vpop.f32.mrf.mxu0
      %v1614 = vadd.f32 %v1054, %v1613
      %v1615 = vpop.f32.mrf.mxu0
      %1616 = vmatprep.mubr.bf16.mxu0 %v501
      %1617 = vmatmul.mubr.bf16.gmra.mxu0 %v854
      %v1618 = vpop.f32.mrf.mxu0
      %v1619 = vadd.f32 %v1054, %v1618
      %v1620 = vpop.f32.mrf.mxu0
      %v1621 = vpop.f32.mrf.mxu0
      %v1622 = vadd.f32 %v1054, %v1621
      %v1623 = vpop.f32.mrf.mxu0
      %1624 = vmatprep.mubr.bf16.mxu0 %v502
      %1625 = vmatmul.mubr.bf16.gmra.mxu0 %v855
      %v1626 = vpop.f32.mrf.mxu0
      %v1627 = vadd.f32 %v1054, %v1626
      %v1628 = vpop.f32.mrf.mxu0
      %v1629 = vpop.f32.mrf.mxu0
      %v1630 = vadd.f32 %v1054, %v1629
      %v1631 = vpop.f32.mrf.mxu0
      %1632 = vmatprep.mubr.bf16.mxu0 %v503
      %1633 = vmatmul.mubr.bf16.gmra.mxu0 %v856
      %v1634 = vpop.f32.mrf.mxu0
      %v1635 = vadd.f32 %v1054, %v1634
      %v1636 = vpop.f32.mrf.mxu0
      %v1637 = vpop.f32.mrf.mxu0
      %v1638 = vadd.f32 %v1054, %v1637
      %v1639 = vpop.f32.mrf.mxu0
      %1640 = vmatprep.mubr.bf16.mxu0 %v504
      %1641 = vmatmul.mubr.bf16.gmra.mxu0 %v857
      %v1642 = vpop.f32.mrf.mxu0
      %v1643 = vadd.f32 %v1054, %v1642
      %v1644 = vpop.f32.mrf.mxu0
      %v1645 = vpop.f32.mrf.mxu0
      %v1646 = vadd.f32 %v1054, %v1645
      %v1647 = vpop.f32.mrf.mxu0
      %1648 = vmatprep.mubr.bf16.mxu0 %v505
      %1649 = vmatmul.mubr.bf16.gmra.mxu0 %v858
      %v1650 = vpop.f32.mrf.mxu0
      %v1651 = vadd.f32 %v1054, %v1650
      %v1652 = vpop.f32.mrf.mxu0
      %v1653 = vpop.f32.mrf.mxu0
      %v1654 = vadd.f32 %v1054, %v1653
      %v1655 = vpop.f32.mrf.mxu0
      %1656 = vmatprep.mubr.bf16.mxu0 %v506
      %1657 = vmatmul.mubr.bf16.gmra.mxu0 %v859
      %v1658 = vpop.f32.mrf.mxu0
      %v1659 = vadd.f32 %v1054, %v1658
      %v1660 = vpop.f32.mrf.mxu0
      %v1661 = vpop.f32.mrf.mxu0
      %v1662 = vadd.f32 %v1054, %v1661
      %v1663 = vpop.f32.mrf.mxu0
      %1664 = vmatprep.mubr.bf16.mxu0 %v507
      %1665 = vmatmul.mubr.bf16.gmra.mxu0 %v860
      %v1666 = vpop.f32.mrf.mxu0
      %v1667 = vadd.f32 %v1054, %v1666
      %v1668 = vpop.f32.mrf.mxu0
      %v1669 = vpop.f32.mrf.mxu0
      %v1670 = vadd.f32 %v1054, %v1669
      %v1671 = vpop.f32.mrf.mxu0
      %1672 = vmatprep.mubr.bf16.mxu0 %v508
      %1673 = vmatmul.mubr.bf16.gmra.mxu0 %v861
      %v1674 = vpop.f32.mrf.mxu0
      %v1675 = vadd.f32 %v1054, %v1674
      %v1676 = vpop.f32.mrf.mxu0
      %v1677 = vpop.f32.mrf.mxu0
      %v1678 = vadd.f32 %v1054, %v1677
      %v1679 = vpop.f32.mrf.mxu0
      %1680 = vmatprep.mubr.bf16.mxu0 %v509
      %1681 = vmatmul.mubr.bf16.gmra.mxu0 %v862
      %v1682 = vpop.f32.mrf.mxu0
      %v1683 = vadd.f32 %v1054, %v1682
      %v1684 = vpop.f32.mrf.mxu0
      %v1685 = vpop.f32.mrf.mxu0
      %v1686 = vadd.f32 %v1054, %v1685
      %v1687 = vpop.f32.mrf.mxu0
      %1688 = vmatprep.mubr.bf16.mxu0 %v510
      %1689 = vmatmul.mubr.bf16.gmra.mxu0 %v863
      %v1690 = vpop.f32.mrf.mxu0
      %v1691 = vadd.f32 %v1054, %v1690
      %v1692 = vpop.f32.mrf.mxu0
      %v1693 = vpop.f32.mrf.mxu0
      %v1694 = vadd.f32 %v1054, %v1693
      %v1695 = vpop.f32.mrf.mxu0
      %1696 = vmatprep.mubr.bf16.mxu0 %v511
      %1697 = vmatmul.mubr.bf16.gmra.mxu0 %v864
      %v1698 = vpop.f32.mrf.mxu0
      %v1699 = vadd.f32 %v1054, %v1698
      %v1700 = vpop.f32.mrf.mxu0
      %v1701 = vpop.f32.mrf.mxu0
      %v1702 = vadd.f32 %v1054, %v1701
      %v1703 = vpop.f32.mrf.mxu0
      %1704 = vmatprep.mubr.bf16.mxu0 %v512
      %1705 = vmatmul.mubr.bf16.gmra.mxu0 %v865
      %v1706 = vpop.f32.mrf.mxu0
      %v1707 = vadd.f32 %v1054, %v1706
      %v1708 = vpop.f32.mrf.mxu0
      %v1709 = vpop.f32.mrf.mxu0
      %v1710 = vadd.f32 %v1054, %v1709
      %v1711 = vpop.f32.mrf.mxu0
      %1712 = vmatprep.mubr.bf16.mxu0 %v513
      %1713 = vmatmul.mubr.bf16.gmra.mxu0 %v866
      %v1714 = vpop.f32.mrf.mxu0
      %v1715 = vadd.f32 %v1054, %v1714
      %v1716 = vpop.f32.mrf.mxu0
      %v1717 = vpop.f32.mrf.mxu0
      %v1718 = vadd.f32 %v1054, %v1717
      %v1719 = vpop.f32.mrf.mxu0
      %1720 = vmatprep.mubr.bf16.mxu0 %v514
      %1721 = vmatmul.mubr.bf16.gmra.mxu0 %v867
      %v1722 = vpop.f32.mrf.mxu0
      %v1723 = vadd.f32 %v1054, %v1722
      %v1724 = vpop.f32.mrf.mxu0
      %v1725 = vpop.f32.mrf.mxu0
      %v1726 = vadd.f32 %v1054, %v1725
      %v1727 = vpop.f32.mrf.mxu0
      %1728 = vmatprep.mubr.bf16.mxu0 %v515
      %1729 = vmatmul.mubr.bf16.gmra.mxu0 %v868
      %v1730 = vpop.f32.mrf.mxu0
      %v1731 = vadd.f32 %v1054, %v1730
      %v1732 = vpop.f32.mrf.mxu0
      %v1733 = vpop.f32.mrf.mxu0
      %v1734 = vadd.f32 %v1054, %v1733
      %v1735 = vpop.f32.mrf.mxu0
      %1736 = vmatprep.mubr.bf16.mxu0 %v516
      %1737 = vmatmul.mubr.bf16.gmra.mxu0 %v869
      %v1738 = vpop.f32.mrf.mxu0
      %v1739 = vadd.f32 %v1054, %v1738
      %v1740 = vpop.f32.mrf.mxu0
      %v1741 = vpop.f32.mrf.mxu0
      %v1742 = vadd.f32 %v1054, %v1741
      %v1743 = vpop.f32.mrf.mxu0
      %1744 = vmatprep.mubr.bf16.mxu0 %v517
      %1745 = vmatmul.mubr.bf16.gmra.mxu0 %v870
      %v1746 = vpop.f32.mrf.mxu0
      %v1747 = vadd.f32 %v1054, %v1746
      %v1748 = vpop.f32.mrf.mxu0
      %v1749 = vpop.f32.mrf.mxu0
      %v1750 = vadd.f32 %v1054, %v1749
      %v1751 = vpop.f32.mrf.mxu0
      %1752 = vmatprep.mubr.bf16.mxu0 %v518
      %1753 = vmatmul.mubr.bf16.gmra.mxu0 %v871
      %v1754 = vpop.f32.mrf.mxu0
      %v1755 = vadd.f32 %v1054, %v1754
      %v1756 = vpop.f32.mrf.mxu0
      %v1757 = vpop.f32.mrf.mxu0
      %v1758 = vadd.f32 %v1054, %v1757
      %v1759 = vpop.f32.mrf.mxu0
      %1760 = vmatprep.mubr.bf16.mxu0 %v519
      %1761 = vmatmul.mubr.bf16.gmra.mxu0 %v872
      %v1762 = vpop.f32.mrf.mxu0
      %v1763 = vadd.f32 %v1054, %v1762
      %v1764 = vpop.f32.mrf.mxu0
      %v1765 = vpop.f32.mrf.mxu0
      %v1766 = vadd.f32 %v1054, %v1765
      %v1767 = vpop.f32.mrf.mxu0
      %1768 = vmatprep.mubr.bf16.mxu0 %v520
      %1769 = vmatmul.mubr.bf16.gmra.mxu0 %v873
      %v1770 = vpop.f32.mrf.mxu0
      %v1771 = vadd.f32 %v1054, %v1770
      %v1772 = vpop.f32.mrf.mxu0
      %v1773 = vpop.f32.mrf.mxu0
      %v1774 = vadd.f32 %v1054, %v1773
      %v1775 = vpop.f32.mrf.mxu0
      %1776 = vdwg.mxu0
      %1777 = vmatprep.subr.bf16.mxu0 0
      %1778 = vmatpush1.bf16.msra.mxu0 %v1367
      %1779 = vmatprep.subr.bf16.mxu0 0
      %1780 = vmatpush1.bf16.msra.mxu0 %v1366
      %1781 = vmatprep.subr.bf16.mxu0 0
      %1782 = vmatpush1.bf16.msra.mxu0 %v1365
      %1783 = vmatprep.subr.bf16.mxu0 0
      %1784 = vmatpush1.bf16.msra.mxu0 %v1364
      %1785 = vmatprep.subr.bf16.mxu0 0
      %1786 = vmatpush1.bf16.msra.mxu0 %v1363
      %1787 = vmatprep.subr.bf16.mxu0 0
      %1788 = vmatpush1.bf16.msra.mxu0 %v1362
      %1789 = vmatprep.subr.bf16.mxu0 0
      %1790 = vmatpush1.bf16.msra.mxu0 %v1361
      %1791 = vmatprep.subr.bf16.mxu0 0
      %1792 = vmatpush1.bf16.msra.mxu0 %v1360
      %1793 = vmatprep.subr.bf16.mxu0 0
      %1794 = vmatpush2.bf16.msra.mxu0 %v1375
      %1795 = vmatprep.subr.bf16.mxu0 0
      %1796 = vmatpush2.bf16.msra.mxu0 %v1374
      %1797 = vmatprep.subr.bf16.mxu0 0
      %1798 = vmatpush2.bf16.msra.mxu0 %v1373
      %1799 = vmatprep.subr.bf16.mxu0 0
      %1800 = vmatpush2.bf16.msra.mxu0 %v1372
      %1801 = vmatprep.subr.bf16.mxu0 0
      %1802 = vmatpush2.bf16.msra.mxu0 %v1371
      %1803 = vmatprep.subr.bf16.mxu0 0
      %1804 = vmatpush2.bf16.msra.mxu0 %v1370
      %1805 = vmatprep.subr.bf16.mxu0 0
      %1806 = vmatpush2.bf16.msra.mxu0 %v1369
      %1807 = vmatprep.subr.bf16.mxu0 0
      %1808 = vmatpush2.bf16.msra.mxu0 %v1368
      %1809 = vmatprep.mubr.bf16.mxu0 %v682
      %1810 = vmatmul.mubr.bf16.gmra.mxu0 %v650
      %v1811 = vpop.f32.mrf.mxu0
      %v1812 = vadd.f32 %v1523, %v1811
      %v1813 = vpop.f32.mrf.mxu0
      %v1814 = vpop.f32.mrf.mxu0
      %v1815 = vadd.f32 %v1526, %v1814
      %v1816 = vpop.f32.mrf.mxu0
      %1817 = vmatprep.mubr.bf16.mxu0 %v683
      %1818 = vmatmul.mubr.bf16.gmra.mxu0 %v651
      %v1819 = vpop.f32.mrf.mxu0
      %v1820 = vadd.f32 %v1531, %v1819
      %v1821 = vpop.f32.mrf.mxu0
      %v1822 = vpop.f32.mrf.mxu0
      %v1823 = vadd.f32 %v1534, %v1822
      %v1824 = vpop.f32.mrf.mxu0
      %1825 = vmatprep.mubr.bf16.mxu0 %v684
      %1826 = vmatmul.mubr.bf16.gmra.mxu0 %v652
      %v1827 = vpop.f32.mrf.mxu0
      %v1828 = vadd.f32 %v1539, %v1827
      %v1829 = vpop.f32.mrf.mxu0
      %v1830 = vpop.f32.mrf.mxu0
      %v1831 = vadd.f32 %v1542, %v1830
      %v1832 = vpop.f32.mrf.mxu0
      %1833 = vmatprep.mubr.bf16.mxu0 %v685
      %1834 = vmatmul.mubr.bf16.gmra.mxu0 %v653
      %v1835 = vpop.f32.mrf.mxu0
      %v1836 = vadd.f32 %v1547, %v1835
      %v1837 = vpop.f32.mrf.mxu0
      %v1838 = vpop.f32.mrf.mxu0
      %v1839 = vadd.f32 %v1550, %v1838
      %v1840 = vpop.f32.mrf.mxu0
      %1841 = vmatprep.mubr.bf16.mxu0 %v686
      %1842 = vmatmul.mubr.bf16.gmra.mxu0 %v654
      %v1843 = vpop.f32.mrf.mxu0
      %v1844 = vadd.f32 %v1555, %v1843
      %v1845 = vpop.f32.mrf.mxu0
      %v1846 = vpop.f32.mrf.mxu0
      %v1847 = vadd.f32 %v1558, %v1846
      %v1848 = vpop.f32.mrf.mxu0
      %1849 = vmatprep.mubr.bf16.mxu0 %v687
      %1850 = vmatmul.mubr.bf16.gmra.mxu0 %v655
      %v1851 = vpop.f32.mrf.mxu0
      %v1852 = vadd.f32 %v1563, %v1851
      %v1853 = vpop.f32.mrf.mxu0
      %v1854 = vpop.f32.mrf.mxu0
      %v1855 = vadd.f32 %v1566, %v1854
      %v1856 = vpop.f32.mrf.mxu0
      %1857 = vmatprep.mubr.bf16.mxu0 %v688
      %1858 = vmatmul.mubr.bf16.gmra.mxu0 %v656
      %v1859 = vpop.f32.mrf.mxu0
      %v1860 = vadd.f32 %v1571, %v1859
      %v1861 = vpop.f32.mrf.mxu0
      %v1862 = vpop.f32.mrf.mxu0
      %v1863 = vadd.f32 %v1574, %v1862
      %v1864 = vpop.f32.mrf.mxu0
      %1865 = vmatprep.mubr.bf16.mxu0 %v689
      %1866 = vmatmul.mubr.bf16.gmra.mxu0 %v657
      %v1867 = vpop.f32.mrf.mxu0
      %v1868 = vadd.f32 %v1579, %v1867
      %v1869 = vpop.f32.mrf.mxu0
      %v1870 = vpop.f32.mrf.mxu0
      %v1871 = vadd.f32 %v1582, %v1870
      %v1872 = vpop.f32.mrf.mxu0
      %1873 = vmatprep.mubr.bf16.mxu0 %v690
      %1874 = vmatmul.mubr.bf16.gmra.mxu0 %v658
      %v1875 = vpop.f32.mrf.mxu0
      %v1876 = vadd.f32 %v1587, %v1875
      %v1877 = vpop.f32.mrf.mxu0
      %v1878 = vpop.f32.mrf.mxu0
      %v1879 = vadd.f32 %v1590, %v1878
      %v1880 = vpop.f32.mrf.mxu0
      %1881 = vmatprep.mubr.bf16.mxu0 %v691
      %1882 = vmatmul.mubr.bf16.gmra.mxu0 %v659
      %v1883 = vpop.f32.mrf.mxu0
      %v1884 = vadd.f32 %v1595, %v1883
      %v1885 = vpop.f32.mrf.mxu0
      %v1886 = vpop.f32.mrf.mxu0
      %v1887 = vadd.f32 %v1598, %v1886
      %v1888 = vpop.f32.mrf.mxu0
      %1889 = vmatprep.mubr.bf16.mxu0 %v692
      %1890 = vmatmul.mubr.bf16.gmra.mxu0 %v660
      %v1891 = vpop.f32.mrf.mxu0
      %v1892 = vadd.f32 %v1603, %v1891
      %v1893 = vpop.f32.mrf.mxu0
      %v1894 = vpop.f32.mrf.mxu0
      %v1895 = vadd.f32 %v1606, %v1894
      %v1896 = vpop.f32.mrf.mxu0
      %1897 = vmatprep.mubr.bf16.mxu0 %v693
      %1898 = vmatmul.mubr.bf16.gmra.mxu0 %v661
      %v1899 = vpop.f32.mrf.mxu0
      %v1900 = vadd.f32 %v1611, %v1899
      %v1901 = vpop.f32.mrf.mxu0
      %v1902 = vpop.f32.mrf.mxu0
      %v1903 = vadd.f32 %v1614, %v1902
      %v1904 = vpop.f32.mrf.mxu0
      %1905 = vmatprep.mubr.bf16.mxu0 %v694
      %1906 = vmatmul.mubr.bf16.gmra.mxu0 %v662
      %v1907 = vpop.f32.mrf.mxu0
      %v1908 = vadd.f32 %v1619, %v1907
      %v1909 = vpop.f32.mrf.mxu0
      %v1910 = vpop.f32.mrf.mxu0
      %v1911 = vadd.f32 %v1622, %v1910
      %v1912 = vpop.f32.mrf.mxu0
      %1913 = vmatprep.mubr.bf16.mxu0 %v695
      %1914 = vmatmul.mubr.bf16.gmra.mxu0 %v663
      %v1915 = vpop.f32.mrf.mxu0
      %v1916 = vadd.f32 %v1627, %v1915
      %v1917 = vpop.f32.mrf.mxu0
      %v1918 = vpop.f32.mrf.mxu0
      %v1919 = vadd.f32 %v1630, %v1918
      %v1920 = vpop.f32.mrf.mxu0
      %1921 = vmatprep.mubr.bf16.mxu0 %v696
      %1922 = vmatmul.mubr.bf16.gmra.mxu0 %v664
      %v1923 = vpop.f32.mrf.mxu0
      %v1924 = vadd.f32 %v1635, %v1923
      %v1925 = vpop.f32.mrf.mxu0
      %v1926 = vpop.f32.mrf.mxu0
      %v1927 = vadd.f32 %v1638, %v1926
      %v1928 = vpop.f32.mrf.mxu0
      %1929 = vmatprep.mubr.bf16.mxu0 %v697
      %1930 = vmatmul.mubr.bf16.gmra.mxu0 %v665
      %v1931 = vpop.f32.mrf.mxu0
      %v1932 = vadd.f32 %v1643, %v1931
      %v1933 = vpop.f32.mrf.mxu0
      %v1934 = vpop.f32.mrf.mxu0
      %v1935 = vadd.f32 %v1646, %v1934
      %v1936 = vpop.f32.mrf.mxu0
      %1937 = vmatprep.mubr.bf16.mxu0 %v698
      %1938 = vmatmul.mubr.bf16.gmra.mxu0 %v666
      %v1939 = vpop.f32.mrf.mxu0
      %v1940 = vadd.f32 %v1651, %v1939
      %v1941 = vpop.f32.mrf.mxu0
      %v1942 = vpop.f32.mrf.mxu0
      %v1943 = vadd.f32 %v1654, %v1942
      %v1944 = vpop.f32.mrf.mxu0
      %1945 = vmatprep.mubr.bf16.mxu0 %v699
      %1946 = vmatmul.mubr.bf16.gmra.mxu0 %v667
      %v1947 = vpop.f32.mrf.mxu0
      %v1948 = vadd.f32 %v1659, %v1947
      %v1949 = vpop.f32.mrf.mxu0
      %v1950 = vpop.f32.mrf.mxu0
      %v1951 = vadd.f32 %v1662, %v1950
      %v1952 = vpop.f32.mrf.mxu0
      %1953 = vmatprep.mubr.bf16.mxu0 %v700
      %1954 = vmatmul.mubr.bf16.gmra.mxu0 %v668
      %v1955 = vpop.f32.mrf.mxu0
      %v1956 = vadd.f32 %v1667, %v1955
      %v1957 = vpop.f32.mrf.mxu0
      %v1958 = vpop.f32.mrf.mxu0
      %v1959 = vadd.f32 %v1670, %v1958
      %v1960 = vpop.f32.mrf.mxu0
      %1961 = vmatprep.mubr.bf16.mxu0 %v701
      %1962 = vmatmul.mubr.bf16.gmra.mxu0 %v669
      %v1963 = vpop.f32.mrf.mxu0
      %v1964 = vadd.f32 %v1675, %v1963
      %v1965 = vpop.f32.mrf.mxu0
      %v1966 = vpop.f32.mrf.mxu0
      %v1967 = vadd.f32 %v1678, %v1966
      %v1968 = vpop.f32.mrf.mxu0
      %1969 = vmatprep.mubr.bf16.mxu0 %v702
      %1970 = vmatmul.mubr.bf16.gmra.mxu0 %v670
      %v1971 = vpop.f32.mrf.mxu0
      %v1972 = vadd.f32 %v1683, %v1971
      %v1973 = vpop.f32.mrf.mxu0
      %v1974 = vpop.f32.mrf.mxu0
      %v1975 = vadd.f32 %v1686, %v1974
      %v1976 = vpop.f32.mrf.mxu0
      %1977 = vmatprep.mubr.bf16.mxu0 %v703
      %1978 = vmatmul.mubr.bf16.gmra.mxu0 %v671
      %v1979 = vpop.f32.mrf.mxu0
      %v1980 = vadd.f32 %v1691, %v1979
      %v1981 = vpop.f32.mrf.mxu0
      %v1982 = vpop.f32.mrf.mxu0
      %v1983 = vadd.f32 %v1694, %v1982
      %v1984 = vpop.f32.mrf.mxu0
      %1985 = vmatprep.mubr.bf16.mxu0 %v704
      %1986 = vmatmul.mubr.bf16.gmra.mxu0 %v672
      %v1987 = vpop.f32.mrf.mxu0
      %v1988 = vadd.f32 %v1699, %v1987
      %v1989 = vpop.f32.mrf.mxu0
      %v1990 = vpop.f32.mrf.mxu0
      %v1991 = vadd.f32 %v1702, %v1990
      %v1992 = vpop.f32.mrf.mxu0
      %1993 = vmatprep.mubr.bf16.mxu0 %v705
      %1994 = vmatmul.mubr.bf16.gmra.mxu0 %v673
      %v1995 = vpop.f32.mrf.mxu0
      %v1996 = vadd.f32 %v1707, %v1995
      %v1997 = vpop.f32.mrf.mxu0
      %v1998 = vpop.f32.mrf.mxu0
      %v1999 = vadd.f32 %v1710, %v1998
      %v2000 = vpop.f32.mrf.mxu0
      %2001 = vmatprep.mubr.bf16.mxu0 %v706
      %2002 = vmatmul.mubr.bf16.gmra.mxu0 %v674
      %v2003 = vpop.f32.mrf.mxu0
      %v2004 = vadd.f32 %v1715, %v2003
      %v2005 = vpop.f32.mrf.mxu0
      %v2006 = vpop.f32.mrf.mxu0
      %v2007 = vadd.f32 %v1718, %v2006
      %v2008 = vpop.f32.mrf.mxu0
      %2009 = vmatprep.mubr.bf16.mxu0 %v707
      %2010 = vmatmul.mubr.bf16.gmra.mxu0 %v675
      %v2011 = vpop.f32.mrf.mxu0
      %v2012 = vadd.f32 %v1723, %v2011
      %v2013 = vpop.f32.mrf.mxu0
      %v2014 = vpop.f32.mrf.mxu0
      %v2015 = vadd.f32 %v1726, %v2014
      %v2016 = vpop.f32.mrf.mxu0
      %2017 = vmatprep.mubr.bf16.mxu0 %v708
      %2018 = vmatmul.mubr.bf16.gmra.mxu0 %v676
      %v2019 = vpop.f32.mrf.mxu0
      %v2020 = vadd.f32 %v1731, %v2019
      %v2021 = vpop.f32.mrf.mxu0
      %v2022 = vpop.f32.mrf.mxu0
      %v2023 = vadd.f32 %v1734, %v2022
      %v2024 = vpop.f32.mrf.mxu0
      %2025 = vmatprep.mubr.bf16.mxu0 %v709
      %2026 = vmatmul.mubr.bf16.gmra.mxu0 %v677
      %v2027 = vpop.f32.mrf.mxu0
      %v2028 = vadd.f32 %v1739, %v2027
      %v2029 = vpop.f32.mrf.mxu0
      %v2030 = vpop.f32.mrf.mxu0
      %v2031 = vadd.f32 %v1742, %v2030
      %v2032 = vpop.f32.mrf.mxu0
      %2033 = vmatprep.mubr.bf16.mxu0 %v710
      %2034 = vmatmul.mubr.bf16.gmra.mxu0 %v678
      %v2035 = vpop.f32.mrf.mxu0
      %v2036 = vadd.f32 %v1747, %v2035
      %v2037 = vpop.f32.mrf.mxu0
      %v2038 = vpop.f32.mrf.mxu0
      %v2039 = vadd.f32 %v1750, %v2038
      %v2040 = vpop.f32.mrf.mxu0
      %2041 = vmatprep.mubr.bf16.mxu0 %v711
      %2042 = vmatmul.mubr.bf16.gmra.mxu0 %v679
      %v2043 = vpop.f32.mrf.mxu0
      %v2044 = vadd.f32 %v1755, %v2043
      %v2045 = vpop.f32.mrf.mxu0
      %v2046 = vpop.f32.mrf.mxu0
      %v2047 = vadd.f32 %v1758, %v2046
      %v2048 = vpop.f32.mrf.mxu0
      %2049 = vmatprep.mubr.bf16.mxu0 %v712
      %2050 = vmatmul.mubr.bf16.gmra.mxu0 %v680
      %v2051 = vpop.f32.mrf.mxu0
      %v2052 = vadd.f32 %v1763, %v2051
      %v2053 = vpop.f32.mrf.mxu0
      %v2054 = vpop.f32.mrf.mxu0
      %v2055 = vadd.f32 %v1766, %v2054
      %v2056 = vpop.f32.mrf.mxu0
      %2057 = vmatprep.mubr.bf16.mxu0 %v713
      %2058 = vmatmul.mubr.bf16.gmra.mxu0 %v681
      %v2059 = vpop.f32.mrf.mxu0
      %v2060 = vadd.f32 %v1771, %v2059
      %v2061 = vpop.f32.mrf.mxu0
      %v2062 = vpop.f32.mrf.mxu0
      %v2063 = vadd.f32 %v1774, %v2062
      %v2064 = vpop.f32.mrf.mxu0
      %2065 = vdwg.mxu0
      %2066 = vmatprep.subr.bf16.mxu0 0
      %2067 = vmatpush1.bf16.msra.mxu0 %v1383
      %2068 = vmatprep.subr.bf16.mxu0 0
      %2069 = vmatpush1.bf16.msra.mxu0 %v1382
      %2070 = vmatprep.subr.bf16.mxu0 0
      %2071 = vmatpush1.bf16.msra.mxu0 %v1381
      %2072 = vmatprep.subr.bf16.mxu0 0
      %2073 = vmatpush1.bf16.msra.mxu0 %v1380
      %2074 = vmatprep.subr.bf16.mxu0 0
      %2075 = vmatpush1.bf16.msra.mxu0 %v1379
      %2076 = vmatprep.subr.bf16.mxu0 0
      %2077 = vmatpush1.bf16.msra.mxu0 %v1378
      %2078 = vmatprep.subr.bf16.mxu0 0
      %2079 = vmatpush1.bf16.msra.mxu0 %v1377
      %2080 = vmatprep.subr.bf16.mxu0 0
      %2081 = vmatpush1.bf16.msra.mxu0 %v1376
      %2082 = vmatprep.subr.bf16.mxu0 0
      %2083 = vmatpush2.bf16.msra.mxu0 %v1391
      %2084 = vmatprep.subr.bf16.mxu0 0
      %2085 = vmatpush2.bf16.msra.mxu0 %v1390
      %2086 = vmatprep.subr.bf16.mxu0 0
      %2087 = vmatpush2.bf16.msra.mxu0 %v1389
      %2088 = vmatprep.subr.bf16.mxu0 0
      %2089 = vmatpush2.bf16.msra.mxu0 %v1388
      %2090 = vmatprep.subr.bf16.mxu0 0
      %2091 = vmatpush2.bf16.msra.mxu0 %v1387
      %2092 = vmatprep.subr.bf16.mxu0 0
      %2093 = vmatpush2.bf16.msra.mxu0 %v1386
      %2094 = vmatprep.subr.bf16.mxu0 0
      %2095 = vmatpush2.bf16.msra.mxu0 %v1385
      %2096 = vmatprep.subr.bf16.mxu0 0
      %2097 = vmatpush2.bf16.msra.mxu0 %v1384
      %2098 = vmatprep.mubr.bf16.mxu0 %v651
      %2099 = vmatmul.mubr.bf16.gmra.mxu0 %v490
      %v2100 = vpop.f32.mrf.mxu0
      %v2101 = vadd.f32 %v1812, %v2100
      %v2102 = vpop.f32.mrf.mxu0
      %v2103 = vpop.f32.mrf.mxu0
      %v2104 = vadd.f32 %v1815, %v2103
      %v2105 = vpop.f32.mrf.mxu0
      %2106 = vmatprep.mubr.bf16.mxu0 %v652
      %2107 = vmatmul.mubr.bf16.gmra.mxu0 %v491
      %v2108 = vpop.f32.mrf.mxu0
      %v2109 = vadd.f32 %v1820, %v2108
      %v2110 = vpop.f32.mrf.mxu0
      %v2111 = vpop.f32.mrf.mxu0
      %v2112 = vadd.f32 %v1823, %v2111
      %v2113 = vpop.f32.mrf.mxu0
      %2114 = vmatprep.mubr.bf16.mxu0 %v653
      %2115 = vmatmul.mubr.bf16.gmra.mxu0 %v492
      %v2116 = vpop.f32.mrf.mxu0
      %v2117 = vadd.f32 %v1828, %v2116
      %v2118 = vpop.f32.mrf.mxu0
      %v2119 = vpop.f32.mrf.mxu0
      %v2120 = vadd.f32 %v1831, %v2119
      %v2121 = vpop.f32.mrf.mxu0
      %2122 = vmatprep.mubr.bf16.mxu0 %v654
      %2123 = vmatmul.mubr.bf16.gmra.mxu0 %v493
      %v2124 = vpop.f32.mrf.mxu0
      %v2125 = vadd.f32 %v1836, %v2124
      %v2126 = vpop.f32.mrf.mxu0
      %v2127 = vpop.f32.mrf.mxu0
      %v2128 = vadd.f32 %v1839, %v2127
      %v2129 = vpop.f32.mrf.mxu0
      %2130 = vmatprep.mubr.bf16.mxu0 %v655
      %2131 = vmatmul.mubr.bf16.gmra.mxu0 %v494
      %v2132 = vpop.f32.mrf.mxu0
      %v2133 = vadd.f32 %v1844, %v2132
      %v2134 = vpop.f32.mrf.mxu0
      %v2135 = vpop.f32.mrf.mxu0
      %v2136 = vadd.f32 %v1847, %v2135
      %v2137 = vpop.f32.mrf.mxu0
      %2138 = vmatprep.mubr.bf16.mxu0 %v656
      %2139 = vmatmul.mubr.bf16.gmra.mxu0 %v495
      %v2140 = vpop.f32.mrf.mxu0
      %v2141 = vadd.f32 %v1852, %v2140
      %v2142 = vpop.f32.mrf.mxu0
      %v2143 = vpop.f32.mrf.mxu0
      %v2144 = vadd.f32 %v1855, %v2143
      %v2145 = vpop.f32.mrf.mxu0
      %2146 = vmatprep.mubr.bf16.mxu0 %v657
      %2147 = vmatmul.mubr.bf16.gmra.mxu0 %v496
      %v2148 = vpop.f32.mrf.mxu0
      %v2149 = vadd.f32 %v1860, %v2148
      %v2150 = vpop.f32.mrf.mxu0
      %v2151 = vpop.f32.mrf.mxu0
      %v2152 = vadd.f32 %v1863, %v2151
      %v2153 = vpop.f32.mrf.mxu0
      %2154 = vmatprep.mubr.bf16.mxu0 %v658
      %2155 = vmatmul.mubr.bf16.gmra.mxu0 %v497
      %v2156 = vpop.f32.mrf.mxu0
      %v2157 = vadd.f32 %v1868, %v2156
      %v2158 = vpop.f32.mrf.mxu0
      %v2159 = vpop.f32.mrf.mxu0
      %v2160 = vadd.f32 %v1871, %v2159
      %v2161 = vpop.f32.mrf.mxu0
      %2162 = vmatprep.mubr.bf16.mxu0 %v659
      %2163 = vmatmul.mubr.bf16.gmra.mxu0 %v498
      %v2164 = vpop.f32.mrf.mxu0
      %v2165 = vadd.f32 %v1876, %v2164
      %v2166 = vpop.f32.mrf.mxu0
      %v2167 = vpop.f32.mrf.mxu0
      %v2168 = vadd.f32 %v1879, %v2167
      %v2169 = vpop.f32.mrf.mxu0
      %2170 = vmatprep.mubr.bf16.mxu0 %v660
      %2171 = vmatmul.mubr.bf16.gmra.mxu0 %v499
      %v2172 = vpop.f32.mrf.mxu0
      %v2173 = vadd.f32 %v1884, %v2172
      %v2174 = vpop.f32.mrf.mxu0
      %v2175 = vpop.f32.mrf.mxu0
      %v2176 = vadd.f32 %v1887, %v2175
      %v2177 = vpop.f32.mrf.mxu0
      %2178 = vmatprep.mubr.bf16.mxu0 %v661
      %2179 = vmatmul.mubr.bf16.gmra.mxu0 %v500
      %v2180 = vpop.f32.mrf.mxu0
      %v2181 = vadd.f32 %v1892, %v2180
      %v2182 = vpop.f32.mrf.mxu0
      %v2183 = vpop.f32.mrf.mxu0
      %v2184 = vadd.f32 %v1895, %v2183
      %v2185 = vpop.f32.mrf.mxu0
      %2186 = vmatprep.mubr.bf16.mxu0 %v662
      %2187 = vmatmul.mubr.bf16.gmra.mxu0 %v501
      %v2188 = vpop.f32.mrf.mxu0
      %v2189 = vadd.f32 %v1900, %v2188
      %v2190 = vpop.f32.mrf.mxu0
      %v2191 = vpop.f32.mrf.mxu0
      %v2192 = vadd.f32 %v1903, %v2191
      %v2193 = vpop.f32.mrf.mxu0
      %2194 = vmatprep.mubr.bf16.mxu0 %v663
      %2195 = vmatmul.mubr.bf16.gmra.mxu0 %v502
      %v2196 = vpop.f32.mrf.mxu0
      %v2197 = vadd.f32 %v1908, %v2196
      %v2198 = vpop.f32.mrf.mxu0
      %v2199 = vpop.f32.mrf.mxu0
      %v2200 = vadd.f32 %v1911, %v2199
      %v2201 = vpop.f32.mrf.mxu0
      %2202 = vmatprep.mubr.bf16.mxu0 %v664
      %2203 = vmatmul.mubr.bf16.gmra.mxu0 %v503
      %v2204 = vpop.f32.mrf.mxu0
      %v2205 = vadd.f32 %v1916, %v2204
      %v2206 = vpop.f32.mrf.mxu0
      %v2207 = vpop.f32.mrf.mxu0
      %v2208 = vadd.f32 %v1919, %v2207
      %v2209 = vpop.f32.mrf.mxu0
      %2210 = vmatprep.mubr.bf16.mxu0 %v665
      %2211 = vmatmul.mubr.bf16.gmra.mxu0 %v504
      %v2212 = vpop.f32.mrf.mxu0
      %v2213 = vadd.f32 %v1924, %v2212
      %v2214 = vpop.f32.mrf.mxu0
      %v2215 = vpop.f32.mrf.mxu0
      %v2216 = vadd.f32 %v1927, %v2215
      %v2217 = vpop.f32.mrf.mxu0
      %2218 = vmatprep.mubr.bf16.mxu0 %v666
      %2219 = vmatmul.mubr.bf16.gmra.mxu0 %v505
      %v2220 = vpop.f32.mrf.mxu0
      %v2221 = vadd.f32 %v1932, %v2220
      %v2222 = vpop.f32.mrf.mxu0
      %v2223 = vpop.f32.mrf.mxu0
      %v2224 = vadd.f32 %v1935, %v2223
      %v2225 = vpop.f32.mrf.mxu0
      %2226 = vmatprep.mubr.bf16.mxu0 %v667
      %2227 = vmatmul.mubr.bf16.gmra.mxu0 %v506
      %v2228 = vpop.f32.mrf.mxu0
      %v2229 = vadd.f32 %v1940, %v2228
      %v2230 = vpop.f32.mrf.mxu0
      %v2231 = vpop.f32.mrf.mxu0
      %v2232 = vadd.f32 %v1943, %v2231
      %v2233 = vpop.f32.mrf.mxu0
      %2234 = vmatprep.mubr.bf16.mxu0 %v668
      %2235 = vmatmul.mubr.bf16.gmra.mxu0 %v507
      %v2236 = vpop.f32.mrf.mxu0
      %v2237 = vadd.f32 %v1948, %v2236
      %v2238 = vpop.f32.mrf.mxu0
      %v2239 = vpop.f32.mrf.mxu0
      %v2240 = vadd.f32 %v1951, %v2239
      %v2241 = vpop.f32.mrf.mxu0
      %2242 = vmatprep.mubr.bf16.mxu0 %v669
      %2243 = vmatmul.mubr.bf16.gmra.mxu0 %v508
      %v2244 = vpop.f32.mrf.mxu0
      %v2245 = vadd.f32 %v1956, %v2244
      %v2246 = vpop.f32.mrf.mxu0
      %v2247 = vpop.f32.mrf.mxu0
      %v2248 = vadd.f32 %v1959, %v2247
      %v2249 = vpop.f32.mrf.mxu0
      %2250 = vmatprep.mubr.bf16.mxu0 %v670
      %2251 = vmatmul.mubr.bf16.gmra.mxu0 %v509
      %v2252 = vpop.f32.mrf.mxu0
      %v2253 = vadd.f32 %v1964, %v2252
      %v2254 = vpop.f32.mrf.mxu0
      %v2255 = vpop.f32.mrf.mxu0
      %v2256 = vadd.f32 %v1967, %v2255
      %v2257 = vpop.f32.mrf.mxu0
      %2258 = vmatprep.mubr.bf16.mxu0 %v671
      %2259 = vmatmul.mubr.bf16.gmra.mxu0 %v510
      %v2260 = vpop.f32.mrf.mxu0
      %v2261 = vadd.f32 %v1972, %v2260
      %v2262 = vpop.f32.mrf.mxu0
      %v2263 = vpop.f32.mrf.mxu0
      %v2264 = vadd.f32 %v1975, %v2263
      %v2265 = vpop.f32.mrf.mxu0
      %2266 = vmatprep.mubr.bf16.mxu0 %v672
      %2267 = vmatmul.mubr.bf16.gmra.mxu0 %v511
      %v2268 = vpop.f32.mrf.mxu0
      %v2269 = vadd.f32 %v1980, %v2268
      %v2270 = vpop.f32.mrf.mxu0
      %v2271 = vpop.f32.mrf.mxu0
      %v2272 = vadd.f32 %v1983, %v2271
      %v2273 = vpop.f32.mrf.mxu0
      %2274 = vmatprep.mubr.bf16.mxu0 %v673
      %2275 = vmatmul.mubr.bf16.gmra.mxu0 %v512
      %v2276 = vpop.f32.mrf.mxu0
      %v2277 = vadd.f32 %v1988, %v2276
      %v2278 = vpop.f32.mrf.mxu0
      %v2279 = vpop.f32.mrf.mxu0
      %v2280 = vadd.f32 %v1991, %v2279
      %v2281 = vpop.f32.mrf.mxu0
      %2282 = vmatprep.mubr.bf16.mxu0 %v674
      %2283 = vmatmul.mubr.bf16.gmra.mxu0 %v513
      %v2284 = vpop.f32.mrf.mxu0
      %v2285 = vadd.f32 %v1996, %v2284
      %v2286 = vpop.f32.mrf.mxu0
      %v2287 = vpop.f32.mrf.mxu0
      %v2288 = vadd.f32 %v1999, %v2287
      %v2289 = vpop.f32.mrf.mxu0
      %2290 = vmatprep.mubr.bf16.mxu0 %v675
      %2291 = vmatmul.mubr.bf16.gmra.mxu0 %v514
      %v2292 = vpop.f32.mrf.mxu0
      %v2293 = vadd.f32 %v2004, %v2292
      %v2294 = vpop.f32.mrf.mxu0
      %v2295 = vpop.f32.mrf.mxu0
      %v2296 = vadd.f32 %v2007, %v2295
      %v2297 = vpop.f32.mrf.mxu0
      %2298 = vmatprep.mubr.bf16.mxu0 %v676
      %2299 = vmatmul.mubr.bf16.gmra.mxu0 %v515
      %v2300 = vpop.f32.mrf.mxu0
      %v2301 = vadd.f32 %v2012, %v2300
      %v2302 = vpop.f32.mrf.mxu0
      %v2303 = vpop.f32.mrf.mxu0
      %v2304 = vadd.f32 %v2015, %v2303
      %v2305 = vpop.f32.mrf.mxu0
      %2306 = vmatprep.mubr.bf16.mxu0 %v677
      %2307 = vmatmul.mubr.bf16.gmra.mxu0 %v516
      %v2308 = vpop.f32.mrf.mxu0
      %v2309 = vadd.f32 %v2020, %v2308
      %v2310 = vpop.f32.mrf.mxu0
      %v2311 = vpop.f32.mrf.mxu0
      %v2312 = vadd.f32 %v2023, %v2311
      %v2313 = vpop.f32.mrf.mxu0
      %2314 = vmatprep.mubr.bf16.mxu0 %v678
      %2315 = vmatmul.mubr.bf16.gmra.mxu0 %v517
      %v2316 = vpop.f32.mrf.mxu0
      %v2317 = vadd.f32 %v2028, %v2316
      %v2318 = vpop.f32.mrf.mxu0
      %v2319 = vpop.f32.mrf.mxu0
      %v2320 = vadd.f32 %v2031, %v2319
      %v2321 = vpop.f32.mrf.mxu0
      %2322 = vmatprep.mubr.bf16.mxu0 %v679
      %2323 = vmatmul.mubr.bf16.gmra.mxu0 %v518
      %v2324 = vpop.f32.mrf.mxu0
      %v2325 = vadd.f32 %v2036, %v2324
      %v2326 = vpop.f32.mrf.mxu0
      %v2327 = vpop.f32.mrf.mxu0
      %v2328 = vadd.f32 %v2039, %v2327
      %v2329 = vpop.f32.mrf.mxu0
      %2330 = vmatprep.mubr.bf16.mxu0 %v680
      %2331 = vmatmul.mubr.bf16.gmra.mxu0 %v519
      %v2332 = vpop.f32.mrf.mxu0
      %v2333 = vadd.f32 %v2044, %v2332
      %v2334 = vpop.f32.mrf.mxu0
      %v2335 = vpop.f32.mrf.mxu0
      %v2336 = vadd.f32 %v2047, %v2335
      %v2337 = vpop.f32.mrf.mxu0
      %2338 = vmatprep.mubr.bf16.mxu0 %v681
      %2339 = vmatmul.mubr.bf16.gmra.mxu0 %v520
      %v2340 = vpop.f32.mrf.mxu0
      %v2341 = vadd.f32 %v2052, %v2340
      %v2342 = vpop.f32.mrf.mxu0
      %v2343 = vpop.f32.mrf.mxu0
      %v2344 = vadd.f32 %v2055, %v2343
      %v2345 = vpop.f32.mrf.mxu0
      %2346 = vmatprep.mubr.bf16.mxu0 %v650
      %2347 = vmatmul.mubr.bf16.gmra.mxu0 %v489
      %v2348 = vpop.f32.mrf.mxu0
      %v2349 = vadd.f32 %v2060, %v2348
      %v2350 = vpop.f32.mrf.mxu0
      %v2351 = vpop.f32.mrf.mxu0
      %v2352 = vadd.f32 %v2063, %v2351
      %v2353 = vpop.f32.mrf.mxu0
      %2354 = vdwg.mxu0
      %2355 = vmatprep.subr.bf16.mxu0 0
      %2356 = vmatpush1.bf16.msra.mxu0 %v1399
      %2357 = vmatprep.subr.bf16.mxu0 0
      %2358 = vmatpush1.bf16.msra.mxu0 %v1398
      %2359 = vmatprep.subr.bf16.mxu0 0
      %2360 = vmatpush1.bf16.msra.mxu0 %v1397
      %2361 = vmatprep.subr.bf16.mxu0 0
      %2362 = vmatpush1.bf16.msra.mxu0 %v1396
      %2363 = vmatprep.subr.bf16.mxu0 0
      %2364 = vmatpush1.bf16.msra.mxu0 %v1395
      %2365 = vmatprep.subr.bf16.mxu0 0
      %2366 = vmatpush1.bf16.msra.mxu0 %v1394
      %2367 = vmatprep.subr.bf16.mxu0 0
      %2368 = vmatpush1.bf16.msra.mxu0 %v1393
      %2369 = vmatprep.subr.bf16.mxu0 0
      %2370 = vmatpush1.bf16.msra.mxu0 %v1392
      %2371 = vmatprep.subr.bf16.mxu0 0
      %2372 = vmatpush2.bf16.msra.mxu0 %v1407
      %2373 = vmatprep.subr.bf16.mxu0 0
      %2374 = vmatpush2.bf16.msra.mxu0 %v1406
      %2375 = vmatprep.subr.bf16.mxu0 0
      %2376 = vmatpush2.bf16.msra.mxu0 %v1405
      %2377 = vmatprep.subr.bf16.mxu0 0
      %2378 = vmatpush2.bf16.msra.mxu0 %v1404
      %2379 = vmatprep.subr.bf16.mxu0 0
      %2380 = vmatpush2.bf16.msra.mxu0 %v1403
      %2381 = vmatprep.subr.bf16.mxu0 0
      %2382 = vmatpush2.bf16.msra.mxu0 %v1402
      %2383 = vmatprep.subr.bf16.mxu0 0
      %2384 = vmatpush2.bf16.msra.mxu0 %v1401
      %2385 = vmatprep.subr.bf16.mxu0 0
      %2386 = vmatpush2.bf16.msra.mxu0 %v1400
      %2387 = vmatprep.mubr.bf16.mxu0 %v491
      %2388 = vmatmul.mubr.bf16.gmra.mxu0 %v683
      %v2389 = vpop.f32.mrf.mxu0
      %v2390 = vadd.f32 %v2101, %v2389
      %v2391 = vpop.f32.mrf.mxu0
      %v2392 = vpop.f32.mrf.mxu0
      %v2393 = vadd.f32 %v2104, %v2392
      %v2394 = vpop.f32.mrf.mxu0
      %2395 = vmatprep.mubr.bf16.mxu0 %v492
      %2396 = vmatmul.mubr.bf16.gmra.mxu0 %v684
      %v2397 = vpop.f32.mrf.mxu0
      %v2398 = vadd.f32 %v2109, %v2397
      %v2399 = vpop.f32.mrf.mxu0
      %v2400 = vpop.f32.mrf.mxu0
      %v2401 = vadd.f32 %v2112, %v2400
      %v2402 = vpop.f32.mrf.mxu0
      %2403 = vmatprep.mubr.bf16.mxu0 %v493
      %2404 = vmatmul.mubr.bf16.gmra.mxu0 %v685
      %v2405 = vpop.f32.mrf.mxu0
      %v2406 = vadd.f32 %v2117, %v2405
      %v2407 = vpop.f32.mrf.mxu0
      %v2408 = vpop.f32.mrf.mxu0
      %v2409 = vadd.f32 %v2120, %v2408
      %v2410 = vpop.f32.mrf.mxu0
      %2411 = vmatprep.mubr.bf16.mxu0 %v494
      %2412 = vmatmul.mubr.bf16.gmra.mxu0 %v686
      %v2413 = vpop.f32.mrf.mxu0
      %v2414 = vadd.f32 %v2125, %v2413
      %v2415 = vpop.f32.mrf.mxu0
      %v2416 = vpop.f32.mrf.mxu0
      %v2417 = vadd.f32 %v2128, %v2416
      %v2418 = vpop.f32.mrf.mxu0
      %2419 = vmatprep.mubr.bf16.mxu0 %v495
      %2420 = vmatmul.mubr.bf16.gmra.mxu0 %v687
      %v2421 = vpop.f32.mrf.mxu0
      %v2422 = vadd.f32 %v2133, %v2421
      %v2423 = vpop.f32.mrf.mxu0
      %v2424 = vpop.f32.mrf.mxu0
      %v2425 = vadd.f32 %v2136, %v2424
      %v2426 = vpop.f32.mrf.mxu0
      %2427 = vmatprep.mubr.bf16.mxu0 %v496
      %2428 = vmatmul.mubr.bf16.gmra.mxu0 %v688
      %v2429 = vpop.f32.mrf.mxu0
      %v2430 = vadd.f32 %v2141, %v2429
      %v2431 = vpop.f32.mrf.mxu0
      %v2432 = vpop.f32.mrf.mxu0
      %v2433 = vadd.f32 %v2144, %v2432
      %v2434 = vpop.f32.mrf.mxu0
      %2435 = vmatprep.mubr.bf16.mxu0 %v497
      %2436 = vmatmul.mubr.bf16.gmra.mxu0 %v689
      %v2437 = vpop.f32.mrf.mxu0
      %v2438 = vadd.f32 %v2149, %v2437
      %v2439 = vpop.f32.mrf.mxu0
      %v2440 = vpop.f32.mrf.mxu0
      %v2441 = vadd.f32 %v2152, %v2440
      %v2442 = vpop.f32.mrf.mxu0
      %2443 = vmatprep.mubr.bf16.mxu0 %v498
      %2444 = vmatmul.mubr.bf16.gmra.mxu0 %v690
      %v2445 = vpop.f32.mrf.mxu0
      %v2446 = vadd.f32 %v2157, %v2445
      %v2447 = vpop.f32.mrf.mxu0
      %v2448 = vpop.f32.mrf.mxu0
      %v2449 = vadd.f32 %v2160, %v2448
      %v2450 = vpop.f32.mrf.mxu0
      %2451 = vmatprep.mubr.bf16.mxu0 %v499
      %2452 = vmatmul.mubr.bf16.gmra.mxu0 %v691
      %v2453 = vpop.f32.mrf.mxu0
      %v2454 = vadd.f32 %v2165, %v2453
      %v2455 = vpop.f32.mrf.mxu0
      %v2456 = vpop.f32.mrf.mxu0
      %v2457 = vadd.f32 %v2168, %v2456
      %v2458 = vpop.f32.mrf.mxu0
      %2459 = vmatprep.mubr.bf16.mxu0 %v500
      %2460 = vmatmul.mubr.bf16.gmra.mxu0 %v692
      %v2461 = vpop.f32.mrf.mxu0
      %v2462 = vadd.f32 %v2173, %v2461
      %v2463 = vpop.f32.mrf.mxu0
      %v2464 = vpop.f32.mrf.mxu0
      %v2465 = vadd.f32 %v2176, %v2464
      %v2466 = vpop.f32.mrf.mxu0
      %2467 = vmatprep.mubr.bf16.mxu0 %v501
      %2468 = vmatmul.mubr.bf16.gmra.mxu0 %v693
      %v2469 = vpop.f32.mrf.mxu0
      %v2470 = vadd.f32 %v2181, %v2469
      %v2471 = vpop.f32.mrf.mxu0
      %v2472 = vpop.f32.mrf.mxu0
      %v2473 = vadd.f32 %v2184, %v2472
      %v2474 = vpop.f32.mrf.mxu0
      %2475 = vmatprep.mubr.bf16.mxu0 %v502
      %2476 = vmatmul.mubr.bf16.gmra.mxu0 %v694
      %v2477 = vpop.f32.mrf.mxu0
      %v2478 = vadd.f32 %v2189, %v2477
      %v2479 = vpop.f32.mrf.mxu0
      %v2480 = vpop.f32.mrf.mxu0
      %v2481 = vadd.f32 %v2192, %v2480
      %v2482 = vpop.f32.mrf.mxu0
      %2483 = vmatprep.mubr.bf16.mxu0 %v503
      %2484 = vmatmul.mubr.bf16.gmra.mxu0 %v695
      %v2485 = vpop.f32.mrf.mxu0
      %v2486 = vadd.f32 %v2197, %v2485
      %v2487 = vpop.f32.mrf.mxu0
      %v2488 = vpop.f32.mrf.mxu0
      %v2489 = vadd.f32 %v2200, %v2488
      %v2490 = vpop.f32.mrf.mxu0
      %2491 = vmatprep.mubr.bf16.mxu0 %v504
      %2492 = vmatmul.mubr.bf16.gmra.mxu0 %v696
      %v2493 = vpop.f32.mrf.mxu0
      %v2494 = vadd.f32 %v2205, %v2493
      %v2495 = vpop.f32.mrf.mxu0
      %v2496 = vpop.f32.mrf.mxu0
      %v2497 = vadd.f32 %v2208, %v2496
      %v2498 = vpop.f32.mrf.mxu0
      %2499 = vmatprep.mubr.bf16.mxu0 %v505
      %2500 = vmatmul.mubr.bf16.gmra.mxu0 %v697
      %v2501 = vpop.f32.mrf.mxu0
      %v2502 = vadd.f32 %v2213, %v2501
      %v2503 = vpop.f32.mrf.mxu0
      %v2504 = vpop.f32.mrf.mxu0
      %v2505 = vadd.f32 %v2216, %v2504
      %v2506 = vpop.f32.mrf.mxu0
      %2507 = vmatprep.mubr.bf16.mxu0 %v506
      %2508 = vmatmul.mubr.bf16.gmra.mxu0 %v698
      %v2509 = vpop.f32.mrf.mxu0
      %v2510 = vadd.f32 %v2221, %v2509
      %v2511 = vpop.f32.mrf.mxu0
      %v2512 = vpop.f32.mrf.mxu0
      %v2513 = vadd.f32 %v2224, %v2512
      %v2514 = vpop.f32.mrf.mxu0
      %2515 = vmatprep.mubr.bf16.mxu0 %v507
      %2516 = vmatmul.mubr.bf16.gmra.mxu0 %v699
      %v2517 = vpop.f32.mrf.mxu0
      %v2518 = vadd.f32 %v2229, %v2517
      %v2519 = vpop.f32.mrf.mxu0
      %v2520 = vpop.f32.mrf.mxu0
      %v2521 = vadd.f32 %v2232, %v2520
      %v2522 = vpop.f32.mrf.mxu0
      %2523 = vmatprep.mubr.bf16.mxu0 %v508
      %2524 = vmatmul.mubr.bf16.gmra.mxu0 %v700
      %v2525 = vpop.f32.mrf.mxu0
      %v2526 = vadd.f32 %v2237, %v2525
      %v2527 = vpop.f32.mrf.mxu0
      %v2528 = vpop.f32.mrf.mxu0
      %v2529 = vadd.f32 %v2240, %v2528
      %v2530 = vpop.f32.mrf.mxu0
      %2531 = vmatprep.mubr.bf16.mxu0 %v509
      %2532 = vmatmul.mubr.bf16.gmra.mxu0 %v701
      %v2533 = vpop.f32.mrf.mxu0
      %v2534 = vadd.f32 %v2245, %v2533
      %v2535 = vpop.f32.mrf.mxu0
      %v2536 = vpop.f32.mrf.mxu0
      %v2537 = vadd.f32 %v2248, %v2536
      %v2538 = vpop.f32.mrf.mxu0
      %2539 = vmatprep.mubr.bf16.mxu0 %v510
      %2540 = vmatmul.mubr.bf16.gmra.mxu0 %v702
      %v2541 = vpop.f32.mrf.mxu0
      %v2542 = vadd.f32 %v2253, %v2541
      %v2543 = vpop.f32.mrf.mxu0
      %v2544 = vpop.f32.mrf.mxu0
      %v2545 = vadd.f32 %v2256, %v2544
      %v2546 = vpop.f32.mrf.mxu0
      %2547 = vmatprep.mubr.bf16.mxu0 %v511
      %2548 = vmatmul.mubr.bf16.gmra.mxu0 %v703
      %v2549 = vpop.f32.mrf.mxu0
      %v2550 = vadd.f32 %v2261, %v2549
      %v2551 = vpop.f32.mrf.mxu0
      %v2552 = vpop.f32.mrf.mxu0
      %v2553 = vadd.f32 %v2264, %v2552
      %v2554 = vpop.f32.mrf.mxu0
      %2555 = vmatprep.mubr.bf16.mxu0 %v512
      %2556 = vmatmul.mubr.bf16.gmra.mxu0 %v704
      %v2557 = vpop.f32.mrf.mxu0
      %v2558 = vadd.f32 %v2269, %v2557
      %v2559 = vpop.f32.mrf.mxu0
      %v2560 = vpop.f32.mrf.mxu0
      %v2561 = vadd.f32 %v2272, %v2560
      %v2562 = vpop.f32.mrf.mxu0
      %2563 = vmatprep.mubr.bf16.mxu0 %v513
      %2564 = vmatmul.mubr.bf16.gmra.mxu0 %v705
      %v2565 = vpop.f32.mrf.mxu0
      %v2566 = vadd.f32 %v2277, %v2565
      %v2567 = vpop.f32.mrf.mxu0
      %v2568 = vpop.f32.mrf.mxu0
      %v2569 = vadd.f32 %v2280, %v2568
      %v2570 = vpop.f32.mrf.mxu0
      %2571 = vmatprep.mubr.bf16.mxu0 %v514
      %2572 = vmatmul.mubr.bf16.gmra.mxu0 %v706
      %v2573 = vpop.f32.mrf.mxu0
      %v2574 = vadd.f32 %v2285, %v2573
      %v2575 = vpop.f32.mrf.mxu0
      %v2576 = vpop.f32.mrf.mxu0
      %v2577 = vadd.f32 %v2288, %v2576
      %v2578 = vpop.f32.mrf.mxu0
      %2579 = vmatprep.mubr.bf16.mxu0 %v515
      %2580 = vmatmul.mubr.bf16.gmra.mxu0 %v707
      %v2581 = vpop.f32.mrf.mxu0
      %v2582 = vadd.f32 %v2293, %v2581
      %v2583 = vpop.f32.mrf.mxu0
      %v2584 = vpop.f32.mrf.mxu0
      %v2585 = vadd.f32 %v2296, %v2584
      %v2586 = vpop.f32.mrf.mxu0
      %2587 = vmatprep.mubr.bf16.mxu0 %v516
      %2588 = vmatmul.mubr.bf16.gmra.mxu0 %v708
      %v2589 = vpop.f32.mrf.mxu0
      %v2590 = vadd.f32 %v2301, %v2589
      %v2591 = vpop.f32.mrf.mxu0
      %v2592 = vpop.f32.mrf.mxu0
      %v2593 = vadd.f32 %v2304, %v2592
      %v2594 = vpop.f32.mrf.mxu0
      %2595 = vmatprep.mubr.bf16.mxu0 %v517
      %2596 = vmatmul.mubr.bf16.gmra.mxu0 %v709
      %v2597 = vpop.f32.mrf.mxu0
      %v2598 = vadd.f32 %v2309, %v2597
      %v2599 = vpop.f32.mrf.mxu0
      %v2600 = vpop.f32.mrf.mxu0
      %v2601 = vadd.f32 %v2312, %v2600
      %v2602 = vpop.f32.mrf.mxu0
      %2603 = vmatprep.mubr.bf16.mxu0 %v518
      %2604 = vmatmul.mubr.bf16.gmra.mxu0 %v710
      %v2605 = vpop.f32.mrf.mxu0
      %v2606 = vadd.f32 %v2317, %v2605
      %v2607 = vpop.f32.mrf.mxu0
      %v2608 = vpop.f32.mrf.mxu0
      %v2609 = vadd.f32 %v2320, %v2608
      %v2610 = vpop.f32.mrf.mxu0
      %2611 = vmatprep.mubr.bf16.mxu0 %v519
      %2612 = vmatmul.mubr.bf16.gmra.mxu0 %v711
      %v2613 = vpop.f32.mrf.mxu0
      %v2614 = vadd.f32 %v2325, %v2613
      %v2615 = vpop.f32.mrf.mxu0
      %v2616 = vpop.f32.mrf.mxu0
      %v2617 = vadd.f32 %v2328, %v2616
      %v2618 = vpop.f32.mrf.mxu0
      %2619 = vmatprep.mubr.bf16.mxu0 %v520
      %2620 = vmatmul.mubr.bf16.gmra.mxu0 %v712
      %v2621 = vpop.f32.mrf.mxu0
      %v2622 = vadd.f32 %v2333, %v2621
      %v2623 = vpop.f32.mrf.mxu0
      %v2624 = vpop.f32.mrf.mxu0
      %v2625 = vadd.f32 %v2336, %v2624
      %v2626 = vpop.f32.mrf.mxu0
      %2627 = vmatprep.mubr.bf16.mxu0 %v489
      %2628 = vmatmul.mubr.bf16.gmra.mxu0 %v713
      %v2629 = vpop.f32.mrf.mxu0
      %v2630 = vadd.f32 %v2341, %v2629
      %v2631 = vpop.f32.mrf.mxu0
      %v2632 = vpop.f32.mrf.mxu0
      %v2633 = vadd.f32 %v2344, %v2632
      %v2634 = vpop.f32.mrf.mxu0
      %2635 = vmatprep.mubr.bf16.mxu0 %v490
      %2636 = vmatmul.mubr.bf16.gmra.mxu0 %v682
      %v2637 = vpop.f32.mrf.mxu0
      %v2638 = vadd.f32 %v2349, %v2637
      %v2639 = vpop.f32.mrf.mxu0
      %v2640 = vpop.f32.mrf.mxu0
      %v2641 = vadd.f32 %v2352, %v2640
      %v2642 = vpop.f32.mrf.mxu0
      %2643 = vdwg.mxu0
      %2644 = vmatprep.subr.bf16.mxu0 0
      %2645 = vmatpush1.bf16.msra.mxu0 %v1415
      %2646 = vmatprep.subr.bf16.mxu0 0
      %2647 = vmatpush1.bf16.msra.mxu0 %v1414
      %2648 = vmatprep.subr.bf16.mxu0 0
      %2649 = vmatpush1.bf16.msra.mxu0 %v1413
      %2650 = vmatprep.subr.bf16.mxu0 0
      %2651 = vmatpush1.bf16.msra.mxu0 %v1412
      %2652 = vmatprep.subr.bf16.mxu0 0
      %2653 = vmatpush1.bf16.msra.mxu0 %v1411
      %2654 = vmatprep.subr.bf16.mxu0 0
      %2655 = vmatpush1.bf16.msra.mxu0 %v1410
      %2656 = vmatprep.subr.bf16.mxu0 0
      %2657 = vmatpush1.bf16.msra.mxu0 %v1409
      %2658 = vmatprep.subr.bf16.mxu0 0
      %2659 = vmatpush1.bf16.msra.mxu0 %v1408
      %2660 = vmatprep.subr.bf16.mxu0 0
      %2661 = vmatpush2.bf16.msra.mxu0 0
      %2662 = vmatprep.subr.bf16.mxu0 0
      %2663 = vmatpush2.bf16.msra.mxu0 0
      %2664 = vmatprep.subr.bf16.mxu0 0
      %2665 = vmatpush2.bf16.msra.mxu0 0
      %2666 = vmatprep.subr.bf16.mxu0 0
      %2667 = vmatpush2.bf16.msra.mxu0 0
      %2668 = vmatprep.subr.bf16.mxu0 0
      %2669 = vmatpush2.bf16.msra.mxu0 0
      %2670 = vmatprep.subr.bf16.mxu0 0
      %2671 = vmatpush2.bf16.msra.mxu0 0
      %2672 = vmatprep.subr.bf16.mxu0 0
      %2673 = vmatpush2.bf16.msra.mxu0 0
      %2674 = vmatprep.subr.bf16.mxu0 0
      %2675 = vmatpush2.bf16.msra.mxu0 0
      %2676 = vmatprep.mubr.bf16.mxu0 0
      %2677 = vmatmul.mubr.bf16.gmra.mxu0 %v652
      %v2678 = vpop.f32.mrf.mxu0
      %v2679 = vadd.f32 %v2390, %v2678
      %v2680 = vpop.f32.mrf.mxu0
      %v2681 = vpop.f32.mrf.mxu0
      %v2682 = vadd.f32 %v2393, %v2681
      %v2683 = vpop.f32.mrf.mxu0
      %2684 = vmatprep.mubr.bf16.mxu0 0
      %2685 = vmatmul.mubr.bf16.gmra.mxu0 %v653
      %v2686 = vpop.f32.mrf.mxu0
      %v2687 = vadd.f32 %v2398, %v2686
      %v2688 = vpop.f32.mrf.mxu0
      %v2689 = vpop.f32.mrf.mxu0
      %v2690 = vadd.f32 %v2401, %v2689
      %v2691 = vpop.f32.mrf.mxu0
      %2692 = vmatprep.mubr.bf16.mxu0 0
      %2693 = vmatmul.mubr.bf16.gmra.mxu0 %v654
      %v2694 = vpop.f32.mrf.mxu0
      %v2695 = vadd.f32 %v2406, %v2694
      %v2696 = vpop.f32.mrf.mxu0
      %v2697 = vpop.f32.mrf.mxu0
      %v2698 = vadd.f32 %v2409, %v2697
      %v2699 = vpop.f32.mrf.mxu0
      %2700 = vmatprep.mubr.bf16.mxu0 0
      %2701 = vmatmul.mubr.bf16.gmra.mxu0 %v655
      %v2702 = vpop.f32.mrf.mxu0
      %v2703 = vadd.f32 %v2414, %v2702
      %v2704 = vpop.f32.mrf.mxu0
      %v2705 = vpop.f32.mrf.mxu0
      %v2706 = vadd.f32 %v2417, %v2705
      %v2707 = vpop.f32.mrf.mxu0
      %2708 = vmatprep.mubr.bf16.mxu0 0
      %2709 = vmatmul.mubr.bf16.gmra.mxu0 %v656
      %v2710 = vpop.f32.mrf.mxu0
      %v2711 = vadd.f32 %v2422, %v2710
      %v2712 = vpop.f32.mrf.mxu0
      %v2713 = vpop.f32.mrf.mxu0
      %v2714 = vadd.f32 %v2425, %v2713
      %v2715 = vpop.f32.mrf.mxu0
      %2716 = vmatprep.mubr.bf16.mxu0 0
      %2717 = vmatmul.mubr.bf16.gmra.mxu0 %v657
      %v2718 = vpop.f32.mrf.mxu0
      %v2719 = vadd.f32 %v2430, %v2718
      %v2720 = vpop.f32.mrf.mxu0
      %v2721 = vpop.f32.mrf.mxu0
      %v2722 = vadd.f32 %v2433, %v2721
      %v2723 = vpop.f32.mrf.mxu0
      %2724 = vmatprep.mubr.bf16.mxu0 0
      %2725 = vmatmul.mubr.bf16.gmra.mxu0 %v658
      %v2726 = vpop.f32.mrf.mxu0
      %v2727 = vadd.f32 %v2438, %v2726
      %v2728 = vpop.f32.mrf.mxu0
      %v2729 = vpop.f32.mrf.mxu0
      %v2730 = vadd.f32 %v2441, %v2729
      %v2731 = vpop.f32.mrf.mxu0
      %2732 = vmatprep.mubr.bf16.mxu0 0
      %2733 = vmatmul.mubr.bf16.gmra.mxu0 %v659
      %v2734 = vpop.f32.mrf.mxu0
      %v2735 = vadd.f32 %v2446, %v2734
      %v2736 = vpop.f32.mrf.mxu0
      %v2737 = vpop.f32.mrf.mxu0
      %v2738 = vadd.f32 %v2449, %v2737
      %v2739 = vpop.f32.mrf.mxu0
      %2740 = vmatprep.mubr.bf16.mxu0 0
      %2741 = vmatmul.mubr.bf16.gmra.mxu0 %v660
      %v2742 = vpop.f32.mrf.mxu0
      %v2743 = vadd.f32 %v2454, %v2742
      %v2744 = vpop.f32.mrf.mxu0
      %v2745 = vpop.f32.mrf.mxu0
      %v2746 = vadd.f32 %v2457, %v2745
      %v2747 = vpop.f32.mrf.mxu0
      %2748 = vmatprep.mubr.bf16.mxu0 0
      %2749 = vmatmul.mubr.bf16.gmra.mxu0 %v661
      %v2750 = vpop.f32.mrf.mxu0
      %v2751 = vadd.f32 %v2462, %v2750
      %v2752 = vpop.f32.mrf.mxu0
      %v2753 = vpop.f32.mrf.mxu0
      %v2754 = vadd.f32 %v2465, %v2753
      %v2755 = vpop.f32.mrf.mxu0
      %2756 = vmatprep.mubr.bf16.mxu0 0
      %2757 = vmatmul.mubr.bf16.gmra.mxu0 %v662
      %v2758 = vpop.f32.mrf.mxu0
      %v2759 = vadd.f32 %v2470, %v2758
      %v2760 = vpop.f32.mrf.mxu0
      %v2761 = vpop.f32.mrf.mxu0
      %v2762 = vadd.f32 %v2473, %v2761
      %v2763 = vpop.f32.mrf.mxu0
      %2764 = vmatprep.mubr.bf16.mxu0 0
      %2765 = vmatmul.mubr.bf16.gmra.mxu0 %v663
      %v2766 = vpop.f32.mrf.mxu0
      %v2767 = vadd.f32 %v2478, %v2766
      %v2768 = vpop.f32.mrf.mxu0
      %v2769 = vpop.f32.mrf.mxu0
      %v2770 = vadd.f32 %v2481, %v2769
      %v2771 = vpop.f32.mrf.mxu0
      %2772 = vmatprep.mubr.bf16.mxu0 0
      %2773 = vmatmul.mubr.bf16.gmra.mxu0 %v664
      %v2774 = vpop.f32.mrf.mxu0
      %v2775 = vadd.f32 %v2486, %v2774
      %v2776 = vpop.f32.mrf.mxu0
      %v2777 = vpop.f32.mrf.mxu0
      %v2778 = vadd.f32 %v2489, %v2777
      %v2779 = vpop.f32.mrf.mxu0
      %2780 = vmatprep.mubr.bf16.mxu0 0
      %2781 = vmatmul.mubr.bf16.gmra.mxu0 %v665
      %v2782 = vpop.f32.mrf.mxu0
      %v2783 = vadd.f32 %v2494, %v2782
      %v2784 = vpop.f32.mrf.mxu0
      %v2785 = vpop.f32.mrf.mxu0
      %v2786 = vadd.f32 %v2497, %v2785
      %v2787 = vpop.f32.mrf.mxu0
      %2788 = vmatprep.mubr.bf16.mxu0 0
      %2789 = vmatmul.mubr.bf16.gmra.mxu0 %v666
      %v2790 = vpop.f32.mrf.mxu0
      %v2791 = vadd.f32 %v2502, %v2790
      %v2792 = vpop.f32.mrf.mxu0
      %v2793 = vpop.f32.mrf.mxu0
      %v2794 = vadd.f32 %v2505, %v2793
      %v2795 = vpop.f32.mrf.mxu0
      %2796 = vmatprep.mubr.bf16.mxu0 0
      %2797 = vmatmul.mubr.bf16.gmra.mxu0 %v667
      %v2798 = vpop.f32.mrf.mxu0
      %v2799 = vadd.f32 %v2510, %v2798
      %v2800 = vpop.f32.mrf.mxu0
      %v2801 = vpop.f32.mrf.mxu0
      %v2802 = vadd.f32 %v2513, %v2801
      %v2803 = vpop.f32.mrf.mxu0
      %2804 = vmatprep.mubr.bf16.mxu0 0
      %2805 = vmatmul.mubr.bf16.gmra.mxu0 %v668
      %v2806 = vpop.f32.mrf.mxu0
      %v2807 = vadd.f32 %v2518, %v2806
      %v2808 = vpop.f32.mrf.mxu0
      %v2809 = vpop.f32.mrf.mxu0
      %v2810 = vadd.f32 %v2521, %v2809
      %v2811 = vpop.f32.mrf.mxu0
      %2812 = vmatprep.mubr.bf16.mxu0 0
      %2813 = vmatmul.mubr.bf16.gmra.mxu0 %v669
      %v2814 = vpop.f32.mrf.mxu0
      %v2815 = vadd.f32 %v2526, %v2814
      %v2816 = vpop.f32.mrf.mxu0
      %v2817 = vpop.f32.mrf.mxu0
      %v2818 = vadd.f32 %v2529, %v2817
      %v2819 = vpop.f32.mrf.mxu0
      %2820 = vmatprep.mubr.bf16.mxu0 0
      %2821 = vmatmul.mubr.bf16.gmra.mxu0 %v670
      %v2822 = vpop.f32.mrf.mxu0
      %v2823 = vadd.f32 %v2534, %v2822
      %v2824 = vpop.f32.mrf.mxu0
      %v2825 = vpop.f32.mrf.mxu0
      %v2826 = vadd.f32 %v2537, %v2825
      %v2827 = vpop.f32.mrf.mxu0
      %2828 = vmatprep.mubr.bf16.mxu0 0
      %2829 = vmatmul.mubr.bf16.gmra.mxu0 %v671
      %v2830 = vpop.f32.mrf.mxu0
      %v2831 = vadd.f32 %v2542, %v2830
      %v2832 = vpop.f32.mrf.mxu0
      %v2833 = vpop.f32.mrf.mxu0
      %v2834 = vadd.f32 %v2545, %v2833
      %v2835 = vpop.f32.mrf.mxu0
      %2836 = vmatprep.mubr.bf16.mxu0 0
      %2837 = vmatmul.mubr.bf16.gmra.mxu0 %v672
      %v2838 = vpop.f32.mrf.mxu0
      %v2839 = vadd.f32 %v2550, %v2838
      %v2840 = vpop.f32.mrf.mxu0
      %v2841 = vpop.f32.mrf.mxu0
      %v2842 = vadd.f32 %v2553, %v2841
      %v2843 = vpop.f32.mrf.mxu0
      %2844 = vmatprep.mubr.bf16.mxu0 0
      %2845 = vmatmul.mubr.bf16.gmra.mxu0 %v673
      %v2846 = vpop.f32.mrf.mxu0
      %v2847 = vadd.f32 %v2558, %v2846
      %v2848 = vpop.f32.mrf.mxu0
      %v2849 = vpop.f32.mrf.mxu0
      %v2850 = vadd.f32 %v2561, %v2849
      %v2851 = vpop.f32.mrf.mxu0
      %2852 = vmatprep.mubr.bf16.mxu0 0
      %2853 = vmatmul.mubr.bf16.gmra.mxu0 %v674
      %v2854 = vpop.f32.mrf.mxu0
      %v2855 = vadd.f32 %v2566, %v2854
      %v2856 = vpop.f32.mrf.mxu0
      %v2857 = vpop.f32.mrf.mxu0
      %v2858 = vadd.f32 %v2569, %v2857
      %v2859 = vpop.f32.mrf.mxu0
      %2860 = vmatprep.mubr.bf16.mxu0 0
      %2861 = vmatmul.mubr.bf16.gmra.mxu0 %v675
      %v2862 = vpop.f32.mrf.mxu0
      %v2863 = vadd.f32 %v2574, %v2862
      %v2864 = vpop.f32.mrf.mxu0
      %v2865 = vpop.f32.mrf.mxu0
      %v2866 = vadd.f32 %v2577, %v2865
      %v2867 = vpop.f32.mrf.mxu0
      %2868 = vmatprep.mubr.bf16.mxu0 0
      %2869 = vmatmul.mubr.bf16.gmra.mxu0 %v676
      %v2870 = vpop.f32.mrf.mxu0
      %v2871 = vadd.f32 %v2582, %v2870
      %v2872 = vpop.f32.mrf.mxu0
      %v2873 = vpop.f32.mrf.mxu0
      %v2874 = vadd.f32 %v2585, %v2873
      %v2875 = vpop.f32.mrf.mxu0
      %2876 = vmatprep.mubr.bf16.mxu0 0
      %2877 = vmatmul.mubr.bf16.gmra.mxu0 %v677
      %v2878 = vpop.f32.mrf.mxu0
      %v2879 = vadd.f32 %v2590, %v2878
      %v2880 = vpop.f32.mrf.mxu0
      %v2881 = vpop.f32.mrf.mxu0
      %v2882 = vadd.f32 %v2593, %v2881
      %v2883 = vpop.f32.mrf.mxu0
      %2884 = vmatprep.mubr.bf16.mxu0 0
      %2885 = vmatmul.mubr.bf16.gmra.mxu0 %v678
      %v2886 = vpop.f32.mrf.mxu0
      %v2887 = vadd.f32 %v2598, %v2886
      %v2888 = vpop.f32.mrf.mxu0
      %v2889 = vpop.f32.mrf.mxu0
      %v2890 = vadd.f32 %v2601, %v2889
      %v2891 = vpop.f32.mrf.mxu0
      %2892 = vmatprep.mubr.bf16.mxu0 0
      %2893 = vmatmul.mubr.bf16.gmra.mxu0 %v679
      %v2894 = vpop.f32.mrf.mxu0
      %v2895 = vadd.f32 %v2606, %v2894
      %v2896 = vpop.f32.mrf.mxu0
      %v2897 = vpop.f32.mrf.mxu0
      %v2898 = vadd.f32 %v2609, %v2897
      %v2899 = vpop.f32.mrf.mxu0
      %2900 = vmatprep.mubr.bf16.mxu0 0
      %2901 = vmatmul.mubr.bf16.gmra.mxu0 %v680
      %v2902 = vpop.f32.mrf.mxu0
      %v2903 = vadd.f32 %v2614, %v2902
      %v2904 = vpop.f32.mrf.mxu0
      %v2905 = vpop.f32.mrf.mxu0
      %v2906 = vadd.f32 %v2617, %v2905
      %v2907 = vpop.f32.mrf.mxu0
      %2908 = vmatprep.mubr.bf16.mxu0 0
      %2909 = vmatmul.mubr.bf16.gmra.mxu0 %v681
      %v2910 = vpop.f32.mrf.mxu0
      %v2911 = vadd.f32 %v2622, %v2910
      %v2912 = vpop.f32.mrf.mxu0
      %v2913 = vpop.f32.mrf.mxu0
      %v2914 = vadd.f32 %v2625, %v2913
      %v2915 = vpop.f32.mrf.mxu0
      %2916 = vmatprep.mubr.bf16.mxu0 0
      %2917 = vmatmul.mubr.bf16.gmra.mxu0 %v650
      %v2918 = vpop.f32.mrf.mxu0
      %v2919 = vadd.f32 %v2630, %v2918
      %v2920 = vpop.f32.mrf.mxu0
      %v2921 = vpop.f32.mrf.mxu0
      %v2922 = vadd.f32 %v2633, %v2921
      %v2923 = vpop.f32.mrf.mxu0
      %2924 = vmatprep.mubr.bf16.mxu0 0
      %2925 = vmatmul.mubr.bf16.gmra.mxu0 %v651
      %v2926 = vpop.f32.mrf.mxu0
      %v2927 = vadd.f32 %v2638, %v2926
      %v2928 = vpop.f32.mrf.mxu0
      %v2929 = vpop.f32.mrf.mxu0
      %v2930 = vadd.f32 %v2641, %v2929
      %v2931 = vpop.f32.mrf.mxu0
      %2932 = vdwg.mxu0
      %v2933 = vmax.f32 %v2679, 0.0
      %v2934 = vmax.f32 %v2682, 0.0
      %v2935 = vmax.f32 %v2687, 0.0
      %v2936 = vmax.f32 %v2690, 0.0
      %v2937 = vmax.f32 %v2695, 0.0
      %v2938 = vmax.f32 %v2698, 0.0
      %v2939 = vmax.f32 %v2703, 0.0
      %v2940 = vmax.f32 %v2706, 0.0
      %v2941 = vmax.f32 %v2711, 0.0
      %v2942 = vmax.f32 %v2714, 0.0
      %v2943 = vmax.f32 %v2719, 0.0
      %v2944 = vmax.f32 %v2722, 0.0
      %v2945 = vmax.f32 %v2727, 0.0
      %v2946 = vmax.f32 %v2730, 0.0
      %v2947 = vmax.f32 %v2735, 0.0
      %v2948 = vmax.f32 %v2738, 0.0
      %v2949 = vmax.f32 %v2743, 0.0
      %v2950 = vmax.f32 %v2746, 0.0
      %v2951 = vmax.f32 %v2751, 0.0
      %v2952 = vmax.f32 %v2754, 0.0
      %v2953 = vmax.f32 %v2759, 0.0
      %v2954 = vmax.f32 %v2762, 0.0
      %v2955 = vmax.f32 %v2767, 0.0
      %v2956 = vmax.f32 %v2770, 0.0
      %v2957 = vmax.f32 %v2775, 0.0
      %v2958 = vmax.f32 %v2778, 0.0
      %v2959 = vmax.f32 %v2783, 0.0
      %v2960 = vmax.f32 %v2786, 0.0
      %v2961 = vmax.f32 %v2791, 0.0
      %v2962 = vmax.f32 %v2794, 0.0
      %v2963 = vmax.f32 %v2799, 0.0
      %v2964 = vmax.f32 %v2802, 0.0
      %v2965 = vmax.f32 %v2807, 0.0
      %v2966 = vmax.f32 %v2810, 0.0
      %v2967 = vmax.f32 %v2815, 0.0
      %v2968 = vmax.f32 %v2818, 0.0
      %v2969 = vmax.f32 %v2823, 0.0
      %v2970 = vmax.f32 %v2826, 0.0
      %v2971 = vmax.f32 %v2831, 0.0
      %v2972 = vmax.f32 %v2834, 0.0
      %v2973 = vmax.f32 %v2839, 0.0
      %v2974 = vmax.f32 %v2842, 0.0
      %v2975 = vmax.f32 %v2847, 0.0
      %v2976 = vmax.f32 %v2850, 0.0
      %v2977 = vmax.f32 %v2855, 0.0
      %v2978 = vmax.f32 %v2858, 0.0
      %v2979 = vmax.f32 %v2863, 0.0
      %v2980 = vmax.f32 %v2866, 0.0
      %v2981 = vmax.f32 %v2871, 0.0
      %v2982 = vmax.f32 %v2874, 0.0
      %v2983 = vmax.f32 %v2879, 0.0
      %v2984 = vmax.f32 %v2882, 0.0
      %v2985 = vmax.f32 %v2887, 0.0
      %v2986 = vmax.f32 %v2890, 0.0
      %v2987 = vmax.f32 %v2895, 0.0
      %v2988 = vmax.f32 %v2898, 0.0
      %v2989 = vmax.f32 %v2903, 0.0
      %v2990 = vmax.f32 %v2906, 0.0
      %v2991 = vmax.f32 %v2911, 0.0
      %v2992 = vmax.f32 %v2914, 0.0
      %v2993 = vmax.f32 %v2919, 0.0
      %v2994 = vmax.f32 %v2922, 0.0
      %v2995 = vmax.f32 %v2927, 0.0
      %v2996 = vmax.f32 %v2930, 0.0
      %v2997 = vld [vmem:[%s4] sm:$0x1]
      %v2998 = vpack.c.bf16 %v2934, %v2933
      %v2999 = vpack.c.bf16 %v2936, %v2935
      %v3000 = vpack.c.bf16 %v2938, %v2937
      %v3001 = vpack.c.bf16 %v2940, %v2939
      %v3002 = vpack.c.bf16 %v2942, %v2941
      %v3003 = vpack.c.bf16 %v2944, %v2943
      %v3004 = vpack.c.bf16 %v2946, %v2945
      %v3005 = vpack.c.bf16 %v2948, %v2947
      %v3006 = vpack.c.bf16 %v2950, %v2949
      %v3007 = vpack.c.bf16 %v2952, %v2951
      %v3008 = vpack.c.bf16 %v2954, %v2953
      %v3009 = vpack.c.bf16 %v2956, %v2955
      %v3010 = vpack.c.bf16 %v2958, %v2957
      %v3011 = vpack.c.bf16 %v2960, %v2959
      %v3012 = vpack.c.bf16 %v2962, %v2961
      %v3013 = vpack.c.bf16 %v2964, %v2963
      %v3014 = vpack.c.bf16 %v2966, %v2965
      %v3015 = vpack.c.bf16 %v2968, %v2967
      %v3016 = vpack.c.bf16 %v2970, %v2969
      %v3017 = vpack.c.bf16 %v2972, %v2971
      %v3018 = vpack.c.bf16 %v2974, %v2973
      %v3019 = vpack.c.bf16 %v2976, %v2975
      %v3020 = vpack.c.bf16 %v2978, %v2977
      %v3021 = vpack.c.bf16 %v2980, %v2979
      %v3022 = vpack.c.bf16 %v2982, %v2981
      %v3023 = vpack.c.bf16 %v2984, %v2983
      %v3024 = vpack.c.bf16 %v2986, %v2985
      %v3025 = vpack.c.bf16 %v2988, %v2987
      %v3026 = vpack.c.bf16 %v2990, %v2989
      %v3027 = vpack.c.bf16 %v2992, %v2991
      %v3028 = vpack.c.bf16 %v2994, %v2993
      %v3029 = vpack.c.bf16 %v2996, %v2995
      %v3030 = vrot.slane %v2933, 1
      %v3031 = vrot.slane %v2934, 1
      %v3032 = vrot.slane %v2935, 1
      %v3033 = vrot.slane %v2936, 1
      %v3034 = vrot.slane %v2937, 1
      %v3035 = vrot.slane %v2938, 1
      %v3036 = vrot.slane %v2939, 1
      %v3037 = vrot.slane %v2940, 1
      %v3038 = vrot.slane %v2941, 1
      %v3039 = vrot.slane %v2942, 1
      %v3040 = vrot.slane %v2943, 1
      %v3041 = vrot.slane %v2944, 1
      %v3042 = vrot.slane %v2945, 1
      %v3043 = vrot.slane %v2946, 1
      %v3044 = vrot.slane %v2947, 1
      %v3045 = vrot.slane %v2948, 1
      %v3046 = vrot.slane %v2949, 1
      %v3047 = vrot.slane %v2950, 1
      %v3048 = vrot.slane %v2951, 1
      %v3049 = vrot.slane %v2952, 1
      %v3050 = vrot.slane %v2953, 1
      %v3051 = vrot.slane %v2954, 1
      %v3052 = vrot.slane %v2955, 1
      %v3053 = vrot.slane %v2956, 1
      %v3054 = vrot.slane %v2957, 1
      %v3055 = vrot.slane %v2958, 1
      %v3056 = vrot.slane %v2959, 1
      %v3057 = vrot.slane %v2960, 1
      %v3058 = vrot.slane %v2961, 1
      %v3059 = vrot.slane %v2962, 1
      %v3060 = vrot.slane %v2963, 1
      %v3061 = vrot.slane %v2964, 1
      %v3062 = vrot.slane %v2965, 1
      %v3063 = vrot.slane %v2966, 1
      %v3064 = vrot.slane %v2967, 1
      %v3065 = vrot.slane %v2968, 1
      %v3066 = vrot.slane %v2969, 1
      %v3067 = vrot.slane %v2970, 1
      %v3068 = vrot.slane %v2971, 1
      %v3069 = vrot.slane %v2972, 1
      %v3070 = vrot.slane %v2973, 1
      %v3071 = vrot.slane %v2974, 1
      %v3072 = vrot.slane %v2975, 1
      %v3073 = vrot.slane %v2976, 1
      %v3074 = vrot.slane %v2977, 1
      %v3075 = vrot.slane %v2978, 1
      %v3076 = vrot.slane %v2979, 1
      %v3077 = vrot.slane %v2980, 1
      %v3078 = vrot.slane %v2981, 1
      %v3079 = vrot.slane %v2982, 1
      %v3080 = vrot.slane %v2983, 1
      %v3081 = vrot.slane %v2984, 1
      %v3082 = vrot.slane %v2985, 1
      %v3083 = vrot.slane %v2986, 1
      %v3084 = vrot.slane %v2987, 1
      %v3085 = vrot.slane %v2988, 1
      %v3086 = vrot.slane %v2989, 1
      %v3087 = vrot.slane %v2990, 1
      %v3088 = vrot.slane %v2991, 1
      %v3089 = vrot.slane %v2992, 1
      %v3090 = vrot.slane %v2993, 1
      %v3091 = vrot.slane %v2994, 1
      %v3092 = vrot.slane %v2995, 1
      %v3093 = vrot.slane %v2996, 1
      %v3094 = vsel %vm424, %v3092, %v3093
      %v3095 = vsel %vm424, %v3091, %v3092
      %v3096 = vsel %vm424, %v3090, %v3091
      %v3097 = vsel %vm424, %v3089, %v3090
      %v3098 = vsel %vm424, %v3088, %v3089
      %v3099 = vsel %vm424, %v3087, %v3088
      %v3100 = vsel %vm424, %v3086, %v3087
      %v3101 = vsel %vm424, %v3085, %v3086
      %v3102 = vsel %vm424, %v3084, %v3085
      %v3103 = vsel %vm424, %v3083, %v3084
      %v3104 = vsel %vm424, %v3082, %v3083
      %v3105 = vsel %vm424, %v3081, %v3082
      %v3106 = vsel %vm424, %v3080, %v3081
      %v3107 = vsel %vm424, %v3079, %v3080
      %v3108 = vsel %vm424, %v3078, %v3079
      %v3109 = vsel %vm424, %v3077, %v3078
      %v3110 = vsel %vm424, %v3076, %v3077
      %v3111 = vsel %vm424, %v3075, %v3076
      %v3112 = vsel %vm424, %v3074, %v3075
      %v3113 = vsel %vm424, %v3073, %v3074
      %v3114 = vsel %vm424, %v3072, %v3073
      %v3115 = vsel %vm424, %v3071, %v3072
      %v3116 = vsel %vm424, %v3070, %v3071
      %v3117 = vsel %vm424, %v3069, %v3070
      %v3118 = vsel %vm424, %v3068, %v3069
      %v3119 = vsel %vm424, %v3067, %v3068
      %v3120 = vsel %vm424, %v3066, %v3067
      %v3121 = vsel %vm424, %v3065, %v3066
      %v3122 = vsel %vm424, %v3064, %v3065
      %v3123 = vsel %vm424, %v3063, %v3064
      %v3124 = vsel %vm424, %v3062, %v3063
      %v3125 = vsel %vm424, %v3061, %v3062
      %v3126 = vsel %vm424, %v3060, %v3061
      %v3127 = vsel %vm424, %v3059, %v3060
      %v3128 = vsel %vm424, %v3058, %v3059
      %v3129 = vsel %vm424, %v3057, %v3058
      %v3130 = vsel %vm424, %v3056, %v3057
      %v3131 = vsel %vm424, %v3055, %v3056
      %v3132 = vsel %vm424, %v3054, %v3055
      %v3133 = vsel %vm424, %v3053, %v3054
      %v3134 = vsel %vm424, %v3052, %v3053
      %v3135 = vsel %vm424, %v3051, %v3052
      %v3136 = vsel %vm424, %v3050, %v3051
      %v3137 = vsel %vm424, %v3049, %v3050
      %v3138 = vsel %vm424, %v3048, %v3049
      %v3139 = vsel %vm424, %v3047, %v3048
      %v3140 = vsel %vm424, %v3046, %v3047
      %v3141 = vsel %vm424, %v3045, %v3046
      %v3142 = vsel %vm424, %v3044, %v3045
      %v3143 = vsel %vm424, %v3043, %v3044
      %v3144 = vsel %vm424, %v3042, %v3043
      %v3145 = vsel %vm424, %v3041, %v3042
      %v3146 = vsel %vm424, %v3040, %v3041
      %v3147 = vsel %vm424, %v3039, %v3040
      %v3148 = vsel %vm424, %v3038, %v3039
      %v3149 = vsel %vm424, %v3037, %v3038
      %v3150 = vsel %vm424, %v3036, %v3037
      %v3151 = vsel %vm424, %v3035, %v3036
      %v3152 = vsel %vm424, %v3034, %v3035
      %v3153 = vsel %vm424, %v3033, %v3034
      %v3154 = vsel %vm424, %v3032, %v3033
      %v3155 = vsel %vm424, %v3031, %v3032
      %v3156 = vsel %vm424, %v3030, %v3031
      %v3157 = vsel %vm424, %v3093, %v3030
      %v3158 = vpack.c.bf16 %v3155, %v3156
      %v3159 = vpack.c.bf16 %v3153, %v3154
      %v3160 = vpack.c.bf16 %v3151, %v3152
      %v3161 = vpack.c.bf16 %v3149, %v3150
      %v3162 = vpack.c.bf16 %v3147, %v3148
      %v3163 = vpack.c.bf16 %v3145, %v3146
      %v3164 = vpack.c.bf16 %v3143, %v3144
      %v3165 = vpack.c.bf16 %v3141, %v3142
      %v3166 = vpack.c.bf16 %v3139, %v3140
      %v3167 = vpack.c.bf16 %v3137, %v3138
      %v3168 = vpack.c.bf16 %v3135, %v3136
      %v3169 = vpack.c.bf16 %v3133, %v3134
      %v3170 = vpack.c.bf16 %v3131, %v3132
      %v3171 = vpack.c.bf16 %v3129, %v3130
      %v3172 = vpack.c.bf16 %v3127, %v3128
      %v3173 = vpack.c.bf16 %v3125, %v3126
      %v3174 = vpack.c.bf16 %v3123, %v3124
      %v3175 = vpack.c.bf16 %v3121, %v3122
      %v3176 = vpack.c.bf16 %v3119, %v3120
      %v3177 = vpack.c.bf16 %v3117, %v3118
      %v3178 = vpack.c.bf16 %v3115, %v3116
      %v3179 = vpack.c.bf16 %v3113, %v3114
      %v3180 = vpack.c.bf16 %v3111, %v3112
      %v3181 = vpack.c.bf16 %v3109, %v3110
      %v3182 = vpack.c.bf16 %v3107, %v3108
      %v3183 = vpack.c.bf16 %v3105, %v3106
      %v3184 = vpack.c.bf16 %v3103, %v3104
      %v3185 = vpack.c.bf16 %v3101, %v3102
      %v3186 = vpack.c.bf16 %v3099, %v3100
      %v3187 = vpack.c.bf16 %v3097, %v3098
      %v3188 = vpack.c.bf16 %v3095, %v3096
      %v3189 = vpack.c.bf16 %v3157, %v3094
      %v3190 = vrot.slane %v2933, 2
      %v3191 = vrot.slane %v2934, 2
      %v3192 = vrot.slane %v2935, 2
      %v3193 = vrot.slane %v2936, 2
      %v3194 = vrot.slane %v2937, 2
      %v3195 = vrot.slane %v2938, 2
      %v3196 = vrot.slane %v2939, 2
      %v3197 = vrot.slane %v2940, 2
      %v3198 = vrot.slane %v2941, 2
      %v3199 = vrot.slane %v2942, 2
      %v3200 = vrot.slane %v2943, 2
      %v3201 = vrot.slane %v2944, 2
      %v3202 = vrot.slane %v2945, 2
      %v3203 = vrot.slane %v2946, 2
      %v3204 = vrot.slane %v2947, 2
      %v3205 = vrot.slane %v2948, 2
      %v3206 = vrot.slane %v2949, 2
      %v3207 = vrot.slane %v2950, 2
      %v3208 = vrot.slane %v2951, 2
      %v3209 = vrot.slane %v2952, 2
      %v3210 = vrot.slane %v2953, 2
      %v3211 = vrot.slane %v2954, 2
      %v3212 = vrot.slane %v2955, 2
      %v3213 = vrot.slane %v2956, 2
      %v3214 = vrot.slane %v2957, 2
      %v3215 = vrot.slane %v2958, 2
      %v3216 = vrot.slane %v2959, 2
      %v3217 = vrot.slane %v2960, 2
      %v3218 = vrot.slane %v2961, 2
      %v3219 = vrot.slane %v2962, 2
      %v3220 = vrot.slane %v2963, 2
      %v3221 = vrot.slane %v2964, 2
      %v3222 = vrot.slane %v2965, 2
      %v3223 = vrot.slane %v2966, 2
      %v3224 = vrot.slane %v2967, 2
      %v3225 = vrot.slane %v2968, 2
      %v3226 = vrot.slane %v2969, 2
      %v3227 = vrot.slane %v2970, 2
      %v3228 = vrot.slane %v2971, 2
      %v3229 = vrot.slane %v2972, 2
      %v3230 = vrot.slane %v2973, 2
      %v3231 = vrot.slane %v2974, 2
      %v3232 = vrot.slane %v2975, 2
      %v3233 = vrot.slane %v2976, 2
      %v3234 = vrot.slane %v2977, 2
      %v3235 = vrot.slane %v2978, 2
      %v3236 = vrot.slane %v2979, 2
      %v3237 = vrot.slane %v2980, 2
      %v3238 = vrot.slane %v2981, 2
      %v3239 = vrot.slane %v2982, 2
      %v3240 = vrot.slane %v2983, 2
      %v3241 = vrot.slane %v2984, 2
      %v3242 = vrot.slane %v2985, 2
      %v3243 = vrot.slane %v2986, 2
      %v3244 = vrot.slane %v2987, 2
      %v3245 = vrot.slane %v2988, 2
      %v3246 = vrot.slane %v2989, 2
      %v3247 = vrot.slane %v2990, 2
      %v3248 = vrot.slane %v2991, 2
      %v3249 = vrot.slane %v2992, 2
      %v3250 = vrot.slane %v2993, 2
      %v3251 = vrot.slane %v2994, 2
      %v3252 = vrot.slane %v2995, 2
      %v3253 = vrot.slane %v2996, 2
      %v3254 = vsel %vm585, %v3252, %v3253
      %v3255 = vsel %vm585, %v3251, %v3252
      %v3256 = vsel %vm585, %v3250, %v3251
      %v3257 = vsel %vm585, %v3249, %v3250
      %v3258 = vsel %vm585, %v3248, %v3249
      %v3259 = vsel %vm585, %v3247, %v3248
      %v3260 = vsel %vm585, %v3246, %v3247
      %v3261 = vsel %vm585, %v3245, %v3246
      %v3262 = vsel %vm585, %v3244, %v3245
      %v3263 = vsel %vm585, %v3243, %v3244
      %v3264 = vsel %vm585, %v3242, %v3243
      %v3265 = vsel %vm585, %v3241, %v3242
      %v3266 = vsel %vm585, %v3240, %v3241
      %v3267 = vsel %vm585, %v3239, %v3240
      %v3268 = vsel %vm585, %v3238, %v3239
      %v3269 = vsel %vm585, %v3237, %v3238
      %v3270 = vsel %vm585, %v3236, %v3237
      %v3271 = vsel %vm585, %v3235, %v3236
      %v3272 = vsel %vm585, %v3234, %v3235
      %v3273 = vsel %vm585, %v3233, %v3234
      %v3274 = vsel %vm585, %v3232, %v3233
      %v3275 = vsel %vm585, %v3231, %v3232
      %v3276 = vsel %vm585, %v3230, %v3231
      %v3277 = vsel %vm585, %v3229, %v3230
      %v3278 = vsel %vm585, %v3228, %v3229
      %v3279 = vsel %vm585, %v3227, %v3228
      %v3280 = vsel %vm585, %v3226, %v3227
      %v3281 = vsel %vm585, %v3225, %v3226
      %v3282 = vsel %vm585, %v3224, %v3225
      %v3283 = vsel %vm585, %v3223, %v3224
      %v3284 = vsel %vm585, %v3222, %v3223
      %v3285 = vsel %vm585, %v3221, %v3222
      %v3286 = vsel %vm585, %v3220, %v3221
      %v3287 = vsel %vm585, %v3219, %v3220
      %v3288 = vsel %vm585, %v3218, %v3219
      %v3289 = vsel %vm585, %v3217, %v3218
      %v3290 = vsel %vm585, %v3216, %v3217
      %v3291 = vsel %vm585, %v3215, %v3216
      %v3292 = vsel %vm585, %v3214, %v3215
      %v3293 = vsel %vm585, %v3213, %v3214
      %v3294 = vsel %vm585, %v3212, %v3213
      %v3295 = vsel %vm585, %v3211, %v3212
      %v3296 = vsel %vm585, %v3210, %v3211
      %v3297 = vsel %vm585, %v3209, %v3210
      %v3298 = vsel %vm585, %v3208, %v3209
      %v3299 = vsel %vm585, %v3207, %v3208
      %v3300 = vsel %vm585, %v3206, %v3207
      %v3301 = vsel %vm585, %v3205, %v3206
      %v3302 = vsel %vm585, %v3204, %v3205
      %v3303 = vsel %vm585, %v3203, %v3204
      %v3304 = vsel %vm585, %v3202, %v3203
      %v3305 = vsel %vm585, %v3201, %v3202
      %v3306 = vsel %vm585, %v3200, %v3201
      %v3307 = vsel %vm585, %v3199, %v3200
      %v3308 = vsel %vm585, %v3198, %v3199
      %v3309 = vsel %vm585, %v3197, %v3198
      %v3310 = vsel %vm585, %v3196, %v3197
      %v3311 = vsel %vm585, %v3195, %v3196
      %v3312 = vsel %vm585, %v3194, %v3195
      %v3313 = vsel %vm585, %v3193, %v3194
      %v3314 = vsel %vm585, %v3192, %v3193
      %v3315 = vsel %vm585, %v3191, %v3192
      %v3316 = vsel %vm585, %v3190, %v3191
      %v3317 = vsel %vm585, %v3253, %v3190
      %v3318 = vpack.c.bf16 %v3315, %v3316
      %v3319 = vpack.c.bf16 %v3313, %v3314
      %v3320 = vpack.c.bf16 %v3311, %v3312
      %v3321 = vpack.c.bf16 %v3309, %v3310
      %v3322 = vpack.c.bf16 %v3307, %v3308
      %v3323 = vpack.c.bf16 %v3305, %v3306
      %v3324 = vpack.c.bf16 %v3303, %v3304
      %v3325 = vpack.c.bf16 %v3301, %v3302
      %v3326 = vpack.c.bf16 %v3299, %v3300
      %v3327 = vpack.c.bf16 %v3297, %v3298
      %v3328 = vpack.c.bf16 %v3295, %v3296
      %v3329 = vpack.c.bf16 %v3293, %v3294
      %v3330 = vpack.c.bf16 %v3291, %v3292
      %v3331 = vpack.c.bf16 %v3289, %v3290
      %v3332 = vpack.c.bf16 %v3287, %v3288
      %v3333 = vpack.c.bf16 %v3285, %v3286
      %v3334 = vpack.c.bf16 %v3283, %v3284
      %v3335 = vpack.c.bf16 %v3281, %v3282
      %v3336 = vpack.c.bf16 %v3279, %v3280
      %v3337 = vpack.c.bf16 %v3277, %v3278
      %v3338 = vpack.c.bf16 %v3275, %v3276
      %v3339 = vpack.c.bf16 %v3273, %v3274
      %v3340 = vpack.c.bf16 %v3271, %v3272
      %v3341 = vpack.c.bf16 %v3269, %v3270
      %v3342 = vpack.c.bf16 %v3267, %v3268
      %v3343 = vpack.c.bf16 %v3265, %v3266
      %v3344 = vpack.c.bf16 %v3263, %v3264
      %v3345 = vpack.c.bf16 %v3261, %v3262
      %v3346 = vpack.c.bf16 %v3259, %v3260
      %v3347 = vpack.c.bf16 %v3257, %v3258
      %v3348 = vpack.c.bf16 %v3255, %v3256
      %v3349 = vpack.c.bf16 %v3317, %v3254
      %v3350 = vld [vmem:[%s3] sm:$0xf]
      %v3351 = vld [vmem:[%s3 + $0x4] sm:$0xf]
      %v3352 = vld [vmem:[%s3 + $0x8] sm:$0xf]
      %v3353 = vld [vmem:[%s3 + $0xc] sm:$0xf]
      %v3354 = vld [vmem:[%s3 + $0x10] sm:$0xf]
      %v3355 = vld [vmem:[%s3 + $0x14] sm:$0xf]
      %v3356 = vld [vmem:[%s3 + $0x18] sm:$0xf]
      %v3357 = vld [vmem:[%s3 + $0x1c] sm:$0xf]
      %v3358 = vld [vmem:[%s3 + $0x20] sm:$0xf]
      %v3359 = vld [vmem:[%s3 + $0x24] sm:$0xf]
      %v3360 = vld [vmem:[%s3 + $0x28] sm:$0xf]
      %v3361 = vld [vmem:[%s3 + $0x2c] sm:$0xf]
      %v3362 = vld [vmem:[%s3 + $0x30] sm:$0xf]
      %v3363 = vld [vmem:[%s3 + $0x34] sm:$0xf]
      %v3364 = vld [vmem:[%s3 + $0x38] sm:$0xf]
      %v3365 = vld [vmem:[%s3 + $0x3c] sm:$0xf]
      %v3366 = vld [vmem:[%s3 + $0x40] sm:$0xf]
      %v3367 = vld [vmem:[%s3 + $0x44] sm:$0xf]
      %v3368 = vld [vmem:[%s3 + $0x48] sm:$0xf]
      %v3369 = vld [vmem:[%s3 + $0x4c] sm:$0xf]
      %v3370 = vld [vmem:[%s3 + $0x50] sm:$0xf]
      %v3371 = vld [vmem:[%s3 + $0x54] sm:$0xf]
      %v3372 = vld [vmem:[%s3 + $0x58] sm:$0xf]
      %v3373 = vld [vmem:[%s3 + $0x5c] sm:$0xf]
      %v3374 = vld [vmem:[%s3 + $0x60] sm:$0xf]
      %v3375 = vld [vmem:[%s3 + $0x64] sm:$0xf]
      %v3376 = vld [vmem:[%s3 + $0x68] sm:$0xf]
      %v3377 = vld [vmem:[%s3 + $0x6c] sm:$0xf]
      %v3378 = vld [vmem:[%s3 + $0x70] sm:$0xf]
      %v3379 = vld [vmem:[%s3 + $0x74] sm:$0xf]
      %v3380 = vld [vmem:[%s3 + $0x78] sm:$0xf]
      %v3381 = vld [vmem:[%s3 + $0x7c] sm:$0xf]
      %v3382 = vld [vmem:[%s3 + $0x80] sm:$0xf]
      %v3383 = vld [vmem:[%s3 + $0x84] sm:$0xf]
      %v3384 = vld [vmem:[%s3 + $0x88] sm:$0xf]
      %v3385 = vld [vmem:[%s3 + $0x8c] sm:$0xf]
      %v3386 = vld [vmem:[%s3 + $0x90] sm:$0xf]
      %v3387 = vld [vmem:[%s3 + $0x94] sm:$0xf]
      %v3388 = vld [vmem:[%s3 + $0x98] sm:$0xf]
      %v3389 = vld [vmem:[%s3 + $0x9c] sm:$0xf]
      %v3390 = vld [vmem:[%s3 + $0xa0] sm:$0xf]
      %v3391 = vld [vmem:[%s3 + $0xa4] sm:$0xf]
      %v3392 = vld [vmem:[%s3 + $0xa8] sm:$0xf]
      %v3393 = vld [vmem:[%s3 + $0xac] sm:$0xf]
      %v3394 = vld [vmem:[%s3 + $0xb0] sm:$0xf]
      %v3395 = vld [vmem:[%s3 + $0xb4] sm:$0xf]
      %v3396 = vld [vmem:[%s3 + $0xb8] sm:$0xf]
      %v3397 = vld [vmem:[%s3 + $0xbc] sm:$0xf]
      %v3398 = vld [vmem:[%s3 + $0xc0] sm:$0xf]
      %v3399 = vld [vmem:[%s3 + $0xc4] sm:$0xf]
      %v3400 = vld [vmem:[%s3 + $0xc8] sm:$0xf]
      %v3401 = vld [vmem:[%s3 + $0xcc] sm:$0xf]
      %v3402 = vld [vmem:[%s3 + $0xd0] sm:$0xf]
      %v3403 = vld [vmem:[%s3 + $0xd4] sm:$0xf]
      %v3404 = vld [vmem:[%s3 + $0xd8] sm:$0xf]
      %v3405 = vld [vmem:[%s3 + $0xdc] sm:$0xf]
      %v3406 = vld [vmem:[%s3 + $0xe0] sm:$0xf]
      %v3407 = vld [vmem:[%s3 + $0xe4] sm:$0xf]
      %v3408 = vld [vmem:[%s3 + $0xe8] sm:$0xf]
      %v3409 = vld [vmem:[%s3 + $0xec] sm:$0xf]
      %v3410 = vld [vmem:[%s3 + $0xf0] sm:$0xf]
      %v3411 = vld [vmem:[%s3 + $0xf4] sm:$0xf]
      %v3412 = vld [vmem:[%s3 + $0xf8] sm:$0xf]
      %v3413 = vld [vmem:[%s3 + $0xfc] sm:$0xf]
      %v3414 = vld [vmem:[%s3 + $0x100] sm:$0xf]
      %v3415 = vld [vmem:[%s3 + $0x104] sm:$0xf]
      %v3416 = vld [vmem:[%s3 + $0x108] sm:$0xf]
      %v3417 = vld [vmem:[%s3 + $0x10c] sm:$0xf]
      %v3418 = vld [vmem:[%s3 + $0x110] sm:$0xf]
      %v3419 = vld [vmem:[%s3 + $0x114] sm:$0xf]
      %v3420 = vld [vmem:[%s3 + $0x118] sm:$0xf]
      %v3421 = vld [vmem:[%s3 + $0x11c] sm:$0xf]
      %v3422 = vld [vmem:[%s3 + $0x120] sm:$0xf]
      %v3423 = vld [vmem:[%s3 + $0x124] sm:$0xf]
      %v3424 = vld [vmem:[%s3 + $0x128] sm:$0xf]
      %v3425 = vld [vmem:[%s3 + $0x12c] sm:$0xf]
      %v3426 = vld [vmem:[%s3 + $0x130] sm:$0xf]
      %v3427 = vld [vmem:[%s3 + $0x134] sm:$0xf]
      %v3428 = vld [vmem:[%s3 + $0x138] sm:$0xf]
      %v3429 = vld [vmem:[%s3 + $0x13c] sm:$0xf]
      %v3430 = vld [vmem:[%s3 + $0x140] sm:$0xf]
      %v3431 = vld [vmem:[%s3 + $0x144] sm:$0xf]
      %v3432 = vld [vmem:[%s3 + $0x148] sm:$0xf]
      %v3433 = vld [vmem:[%s3 + $0x14c] sm:$0xf]
      %v3434 = vld [vmem:[%s3 + $0x150] sm:$0xf]
      %v3435 = vld [vmem:[%s3 + $0x154] sm:$0xf]
      %v3436 = vld [vmem:[%s3 + $0x158] sm:$0xf]
      %v3437 = vld [vmem:[%s3 + $0x15c] sm:$0xf]
      %v3438 = vld [vmem:[%s3 + $0x160] sm:$0xf]
      %v3439 = vld [vmem:[%s3 + $0x164] sm:$0xf]
      %v3440 = vld [vmem:[%s3 + $0x168] sm:$0xf]
      %v3441 = vld [vmem:[%s3 + $0x16c] sm:$0xf]
      %v3442 = vld [vmem:[%s3 + $0x170] sm:$0xf]
      %v3443 = vld [vmem:[%s3 + $0x174] sm:$0xf]
      %v3444 = vld [vmem:[%s3 + $0x178] sm:$0xf]
      %v3445 = vld [vmem:[%s3 + $0x17c] sm:$0xf]
      %v3446 = vld [vmem:[%s3 + $0x180] sm:$0xf]
      %v3447 = vld [vmem:[%s3 + $0x184] sm:$0xf]
      %v3448 = vld [vmem:[%s3 + $0x188] sm:$0xf]
      %v3449 = vld [vmem:[%s3 + $0x18c] sm:$0xf]
      %v3450 = vld [vmem:[%s3 + $0x190] sm:$0xf]
      %v3451 = vld [vmem:[%s3 + $0x194] sm:$0xf]
      %v3452 = vld [vmem:[%s3 + $0x198] sm:$0xf]
      %v3453 = vld [vmem:[%s3 + $0x19c] sm:$0xf]
      %v3454 = vld [vmem:[%s3 + $0x1a0] sm:$0xf]
      %v3455 = vld [vmem:[%s3 + $0x1a4] sm:$0xf]
      %v3456 = vld [vmem:[%s3 + $0x1a8] sm:$0xf]
      %v3457 = vld [vmem:[%s3 + $0x1ac] sm:$0xf]
      %v3458 = vld [vmem:[%s3 + $0x1b0] sm:$0xf]
      %v3459 = vld [vmem:[%s3 + $0x1b4] sm:$0xf]
      %v3460 = vld [vmem:[%s3 + $0x1b8] sm:$0xf]
      %v3461 = vld [vmem:[%s3 + $0x1bc] sm:$0xf]
      %v3462 = vld [vmem:[%s3 + $0x1c0] sm:$0xf]
      %v3463 = vld [vmem:[%s3 + $0x1c4] sm:$0xf]
      %v3464 = vld [vmem:[%s3 + $0x1c8] sm:$0xf]
      %v3465 = vld [vmem:[%s3 + $0x1cc] sm:$0xf]
      %v3466 = vld [vmem:[%s3 + $0x1d0] sm:$0xf]
      %v3467 = vld [vmem:[%s3 + $0x1d4] sm:$0xf]
      %v3468 = vld [vmem:[%s3 + $0x1d8] sm:$0xf]
      %v3469 = vld [vmem:[%s3 + $0x1dc] sm:$0xf]
      %v3470 = vld [vmem:[%s3 + $0x1e0] sm:$0xf]
      %v3471 = vld [vmem:[%s3 + $0x1e4] sm:$0xf]
      %v3472 = vld [vmem:[%s3 + $0x1e8] sm:$0xf]
      %v3473 = vld [vmem:[%s3 + $0x1ec] sm:$0xf]
      %v3474 = vld [vmem:[%s3 + $0x1f0] sm:$0xf]
      %v3475 = vld [vmem:[%s3 + $0x1f4] sm:$0xf]
      %v3476 = vld [vmem:[%s3 + $0x1f8] sm:$0xf]
      %v3477 = vld [vmem:[%s3 + $0x1fc] sm:$0xf]
      %v3478 = vld [vmem:[%s3 + $0x200] sm:$0xf]
      %v3479 = vld [vmem:[%s3 + $0x204] sm:$0xf]
      %v3480 = vld [vmem:[%s3 + $0x208] sm:$0xf]
      %v3481 = vld [vmem:[%s3 + $0x20c] sm:$0xf]
      %v3482 = vld [vmem:[%s3 + $0x210] sm:$0xf]
      %v3483 = vld [vmem:[%s3 + $0x214] sm:$0xf]
      %v3484 = vld [vmem:[%s3 + $0x218] sm:$0xf]
      %v3485 = vld [vmem:[%s3 + $0x21c] sm:$0xf]
      %v3486 = vld [vmem:[%s3 + $0x220] sm:$0xf]
      %v3487 = vld [vmem:[%s3 + $0x224] sm:$0xf]
      %v3488 = vld [vmem:[%s3 + $0x228] sm:$0xf]
      %v3489 = vld [vmem:[%s3 + $0x22c] sm:$0xf]
      %v3490 = vld [vmem:[%s3 + $0x230] sm:$0xf]
      %v3491 = vld [vmem:[%s3 + $0x234] sm:$0xf]
      %v3492 = vld [vmem:[%s3 + $0x238] sm:$0xf]
      %v3493 = vld [vmem:[%s3 + $0x23c] sm:$0xf]
      %v3495 = vlaneseq
      %v3496 = vshrl.u32 %v3495, 7
      %v3497 = vsub.s32 0, %v3496
      %v3498 = vrot.slane %v2997, %v3497
      %v3644 = vunpack.c.l.b16 %v3350
      %v3645 = vunpack.c.l.b16 %v3351
      %v3646 = vunpack.c.l.b16 %v3352
      %v3647 = vunpack.c.l.b16 %v3353
      %v3648 = vunpack.c.l.b16 %v3354
      %v3649 = vunpack.c.l.b16 %v3355
      %v3650 = vunpack.c.l.b16 %v3356
      %v3651 = vunpack.c.l.b16 %v3357
      %v3652 = vunpack.c.l.b16 %v3358
      %v3653 = vunpack.c.l.b16 %v3359
      %v3654 = vunpack.c.l.b16 %v3360
      %v3655 = vunpack.c.l.b16 %v3361
      %v3656 = vunpack.c.l.b16 %v3362
      %v3657 = vunpack.c.l.b16 %v3363
      %v3658 = vunpack.c.l.b16 %v3364
      %v3659 = vunpack.c.l.b16 %v3365
      %v3660 = vunpack.c.l.b16 %v3366
      %v3661 = vunpack.c.l.b16 %v3367
      %v3662 = vunpack.c.l.b16 %v3368
      %v3663 = vunpack.c.l.b16 %v3369
      %v3664 = vunpack.c.l.b16 %v3370
      %v3665 = vunpack.c.l.b16 %v3371
      %v3666 = vunpack.c.l.b16 %v3372
      %v3667 = vunpack.c.l.b16 %v3373
      %v3668 = vunpack.c.l.b16 %v3374
      %v3669 = vunpack.c.l.b16 %v3375
      %v3670 = vunpack.c.l.b16 %v3376
      %v3671 = vunpack.c.l.b16 %v3377
      %v3672 = vunpack.c.l.b16 %v3378
      %v3673 = vunpack.c.l.b16 %v3379
      %v3674 = vunpack.c.l.b16 %v3380
      %v3675 = vunpack.c.l.b16 %v3381
      %v3676 = vunpack.c.l.b16 %v3382
      %v3677 = vunpack.c.l.b16 %v3383
      %v3678 = vunpack.c.l.b16 %v3384
      %v3679 = vunpack.c.l.b16 %v3385
      %v3680 = vunpack.c.l.b16 %v3386
      %v3681 = vunpack.c.l.b16 %v3387
      %v3682 = vunpack.c.l.b16 %v3388
      %v3683 = vunpack.c.l.b16 %v3389
      %v3684 = vunpack.c.l.b16 %v3390
      %v3685 = vunpack.c.l.b16 %v3391
      %v3686 = vunpack.c.l.b16 %v3392
      %v3687 = vunpack.c.l.b16 %v3393
      %v3688 = vunpack.c.l.b16 %v3394
      %v3689 = vunpack.c.l.b16 %v3395
      %v3690 = vunpack.c.l.b16 %v3396
      %v3691 = vunpack.c.l.b16 %v3397
      %v3692 = vunpack.c.l.b16 %v3398
      %v3693 = vunpack.c.l.b16 %v3399
      %v3694 = vunpack.c.l.b16 %v3400
      %v3695 = vunpack.c.l.b16 %v3401
      %v3696 = vunpack.c.l.b16 %v3402
      %v3697 = vunpack.c.l.b16 %v3403
      %v3698 = vunpack.c.l.b16 %v3404
      %v3699 = vunpack.c.l.b16 %v3405
      %v3700 = vunpack.c.l.b16 %v3406
      %v3701 = vunpack.c.l.b16 %v3407
      %v3702 = vunpack.c.l.b16 %v3408
      %v3703 = vunpack.c.l.b16 %v3409
      %v3704 = vunpack.c.l.b16 %v3410
      %v3705 = vunpack.c.l.b16 %v3411
      %v3706 = vunpack.c.l.b16 %v3412
      %v3707 = vunpack.c.l.b16 %v3413
      %v3708 = vunpack.c.l.b16 %v3414
      %v3709 = vunpack.c.l.b16 %v3415
      %v3710 = vunpack.c.l.b16 %v3416
      %v3711 = vunpack.c.l.b16 %v3417
      %v3712 = vunpack.c.l.b16 %v3418
      %v3713 = vunpack.c.l.b16 %v3419
      %v3714 = vunpack.c.l.b16 %v3420
      %v3715 = vunpack.c.l.b16 %v3421
      %v3716 = vunpack.c.l.b16 %v3422
      %v3717 = vunpack.c.l.b16 %v3423
      %v3718 = vunpack.c.l.b16 %v3424
      %v3719 = vunpack.c.l.b16 %v3425
      %v3720 = vunpack.c.l.b16 %v3426
      %v3721 = vunpack.c.l.b16 %v3427
      %v3722 = vunpack.c.l.b16 %v3428
      %v3723 = vunpack.c.l.b16 %v3429
      %v3724 = vunpack.c.l.b16 %v3430
      %v3725 = vunpack.c.l.b16 %v3431
      %v3726 = vunpack.c.l.b16 %v3432
      %v3727 = vunpack.c.l.b16 %v3433
      %v3728 = vunpack.c.l.b16 %v3434
      %v3729 = vunpack.c.l.b16 %v3435
      %v3730 = vunpack.c.l.b16 %v3436
      %v3731 = vunpack.c.l.b16 %v3437
      %v3732 = vunpack.c.l.b16 %v3438
      %v3733 = vunpack.c.l.b16 %v3439
      %v3734 = vunpack.c.l.b16 %v3440
      %v3735 = vunpack.c.l.b16 %v3441
      %v3736 = vunpack.c.l.b16 %v3442
      %v3737 = vunpack.c.l.b16 %v3443
      %v3738 = vunpack.c.l.b16 %v3444
      %v3739 = vunpack.c.l.b16 %v3445
      %v3740 = vunpack.c.l.b16 %v3446
      %v3741 = vunpack.c.l.b16 %v3447
      %v3742 = vunpack.c.l.b16 %v3448
      %v3743 = vunpack.c.l.b16 %v3449
      %v3744 = vunpack.c.l.b16 %v3450
      %v3745 = vunpack.c.l.b16 %v3451
      %v3746 = vunpack.c.l.b16 %v3452
      %v3747 = vunpack.c.l.b16 %v3453
      %v3748 = vunpack.c.l.b16 %v3454
      %v3749 = vunpack.c.l.b16 %v3455
      %v3750 = vunpack.c.l.b16 %v3456
      %v3751 = vunpack.c.l.b16 %v3457
      %v3752 = vunpack.c.l.b16 %v3458
      %v3753 = vunpack.c.l.b16 %v3459
      %v3754 = vunpack.c.l.b16 %v3460
      %v3755 = vunpack.c.l.b16 %v3461
      %v3756 = vunpack.c.l.b16 %v3462
      %v3757 = vunpack.c.l.b16 %v3463
      %v3758 = vunpack.c.l.b16 %v3464
      %v3759 = vunpack.c.l.b16 %v3465
      %v3760 = vunpack.c.l.b16 %v3466
      %v3761 = vunpack.c.l.b16 %v3467
      %v3762 = vunpack.c.l.b16 %v3468
      %v3763 = vunpack.c.l.b16 %v3469
      %v3764 = vunpack.c.l.b16 %v3470
      %v3765 = vunpack.c.l.b16 %v3471
      %v3766 = vunpack.c.l.b16 %v3472
      %v3767 = vunpack.c.l.b16 %v3473
      %v3768 = vunpack.c.l.b16 %v3474
      %v3769 = vunpack.c.l.b16 %v3475
      %v3770 = vunpack.c.l.b16 %v3476
      %v3771 = vunpack.c.l.b16 %v3477
      %v3772 = vunpack.c.l.b16 %v3478
      %v3773 = vunpack.c.l.b16 %v3479
      %v3774 = vunpack.c.l.b16 %v3480
      %v3775 = vunpack.c.l.b16 %v3481
      %v3776 = vunpack.c.l.b16 %v3482
      %v3777 = vunpack.c.l.b16 %v3483
      %v3778 = vunpack.c.l.b16 %v3484
      %v3779 = vunpack.c.l.b16 %v3485
      %v3780 = vunpack.c.l.b16 %v3486
      %v3781 = vunpack.c.l.b16 %v3487
      %v3782 = vunpack.c.l.b16 %v3488
      %v3783 = vunpack.c.l.b16 %v3489
      %v3784 = vunpack.c.l.b16 %v3490
      %v3785 = vunpack.c.l.b16 %v3491
      %v3786 = vunpack.c.l.b16 %v3492
      %v3787 = vunpack.c.l.b16 %v3493
      %v3788 = vpack.c.b16 %v3645, %v3644
      %v3789 = vpack.c.b16 %v3647, %v3646
      %v3790 = vpack.c.b16 %v3649, %v3648
      %v3791 = vpack.c.b16 %v3651, %v3650
      %v3792 = vpack.c.b16 %v3653, %v3652
      %v3793 = vpack.c.b16 %v3655, %v3654
      %v3794 = vpack.c.b16 %v3657, %v3656
      %v3795 = vpack.c.b16 %v3659, %v3658
      %v3796 = vpack.c.b16 %v3661, %v3660
      %v3797 = vpack.c.b16 %v3663, %v3662
      %v3798 = vpack.c.b16 %v3665, %v3664
      %v3799 = vpack.c.b16 %v3667, %v3666
      %v3800 = vpack.c.b16 %v3669, %v3668
      %v3801 = vpack.c.b16 %v3671, %v3670
      %v3802 = vpack.c.b16 %v3673, %v3672
      %v3803 = vpack.c.b16 %v3675, %v3674
      %v3804 = vpack.c.b16 %v3677, %v3676
      %v3805 = vpack.c.b16 %v3679, %v3678
      %v3806 = vpack.c.b16 %v3681, %v3680
      %v3807 = vpack.c.b16 %v3683, %v3682
      %v3808 = vpack.c.b16 %v3685, %v3684
      %v3809 = vpack.c.b16 %v3687, %v3686
      %v3810 = vpack.c.b16 %v3689, %v3688
      %v3811 = vpack.c.b16 %v3691, %v3690
      %v3812 = vpack.c.b16 %v3693, %v3692
      %v3813 = vpack.c.b16 %v3695, %v3694
      %v3814 = vpack.c.b16 %v3697, %v3696
      %v3815 = vpack.c.b16 %v3699, %v3698
      %v3816 = vpack.c.b16 %v3701, %v3700
      %v3817 = vpack.c.b16 %v3703, %v3702
      %v3818 = vpack.c.b16 %v3705, %v3704
      %v3819 = vpack.c.b16 %v3707, %v3706
      %v3820 = vpack.c.b16 %v3709, %v3708
      %v3821 = vpack.c.b16 %v3711, %v3710
      %v3822 = vpack.c.b16 %v3713, %v3712
      %v3823 = vpack.c.b16 %v3715, %v3714
      %v3824 = vpack.c.b16 %v3717, %v3716
      %v3825 = vpack.c.b16 %v3719, %v3718
      %v3826 = vpack.c.b16 %v3721, %v3720
      %v3827 = vpack.c.b16 %v3723, %v3722
      %v3828 = vpack.c.b16 %v3725, %v3724
      %v3829 = vpack.c.b16 %v3727, %v3726
      %v3830 = vpack.c.b16 %v3729, %v3728
      %v3831 = vpack.c.b16 %v3731, %v3730
      %v3832 = vpack.c.b16 %v3733, %v3732
      %v3833 = vpack.c.b16 %v3735, %v3734
      %v3834 = vpack.c.b16 %v3737, %v3736
      %v3835 = vpack.c.b16 %v3739, %v3738
      %v3836 = vpack.c.b16 %v3741, %v3740
      %v3837 = vpack.c.b16 %v3743, %v3742
      %v3838 = vpack.c.b16 %v3745, %v3744
      %v3839 = vpack.c.b16 %v3747, %v3746
      %v3840 = vpack.c.b16 %v3749, %v3748
      %v3841 = vpack.c.b16 %v3751, %v3750
      %v3842 = vpack.c.b16 %v3753, %v3752
      %v3843 = vpack.c.b16 %v3755, %v3754
      %v3844 = vpack.c.b16 %v3757, %v3756
      %v3845 = vpack.c.b16 %v3759, %v3758
      %v3846 = vpack.c.b16 %v3761, %v3760
      %v3847 = vpack.c.b16 %v3763, %v3762
      %v3848 = vpack.c.b16 %v3765, %v3764
      %v3849 = vpack.c.b16 %v3767, %v3766
      %v3850 = vpack.c.b16 %v3769, %v3768
      %v3851 = vpack.c.b16 %v3771, %v3770
      %v3852 = vpack.c.b16 %v3773, %v3772
      %v3853 = vpack.c.b16 %v3775, %v3774
      %v3854 = vpack.c.b16 %v3777, %v3776
      %v3855 = vpack.c.b16 %v3779, %v3778
      %v3856 = vpack.c.b16 %v3781, %v3780
      %v3857 = vpack.c.b16 %v3783, %v3782
      %v3858 = vpack.c.b16 %v3785, %v3784
      %v3859 = vpack.c.b16 %v3787, %v3786
      %3932 = vmatprep.subr.bf16.mxu0 0
      %3933 = vmatpush1.bf16.msra.mxu0 %v3795
      %3934 = vmatprep.subr.bf16.mxu0 0
      %3935 = vmatpush1.bf16.msra.mxu0 %v3794
      %3936 = vmatprep.subr.bf16.mxu0 0
      %3937 = vmatpush1.bf16.msra.mxu0 %v3793
      %3938 = vmatprep.subr.bf16.mxu0 0
      %3939 = vmatpush1.bf16.msra.mxu0 %v3792
      %3940 = vmatprep.subr.bf16.mxu0 0
      %3941 = vmatpush1.bf16.msra.mxu0 %v3791
      %3942 = vmatprep.subr.bf16.mxu0 0
      %3943 = vmatpush1.bf16.msra.mxu0 %v3790
      %3944 = vmatprep.subr.bf16.mxu0 0
      %3945 = vmatpush1.bf16.msra.mxu0 %v3789
      %3946 = vmatprep.subr.bf16.mxu0 0
      %3947 = vmatpush1.bf16.msra.mxu0 %v3788
      %3948 = vmatprep.subr.bf16.mxu0 0
      %3949 = vmatpush2.bf16.msra.mxu0 %v3803
      %3950 = vmatprep.subr.bf16.mxu0 0
      %3951 = vmatpush2.bf16.msra.mxu0 %v3802
      %3952 = vmatprep.subr.bf16.mxu0 0
      %3953 = vmatpush2.bf16.msra.mxu0 %v3801
      %3954 = vmatprep.subr.bf16.mxu0 0
      %3955 = vmatpush2.bf16.msra.mxu0 %v3800
      %3956 = vmatprep.subr.bf16.mxu0 0
      %3957 = vmatpush2.bf16.msra.mxu0 %v3799
      %3958 = vmatprep.subr.bf16.mxu0 0
      %3959 = vmatpush2.bf16.msra.mxu0 %v3798
      %3960 = vmatprep.subr.bf16.mxu0 0
      %3961 = vmatpush2.bf16.msra.mxu0 %v3797
      %3962 = vmatprep.subr.bf16.mxu0 0
      %3963 = vmatpush2.bf16.msra.mxu0 %v3796
      %3964 = vmatprep.mubr.bf16.mxu0 %v3158
      %3965 = vmatmul.mubr.bf16.gmra.mxu0 %v2998
      %v3966 = vpop.f32.mrf.mxu0
      %v3967 = vadd.f32 %v3498, %v3966
      %v3968 = vpop.f32.mrf.mxu0
      %v3969 = vpop.f32.mrf.mxu0
      %v3970 = vadd.f32 %v3498, %v3969
      %v3971 = vpop.f32.mrf.mxu0
      %3972 = vmatprep.mubr.bf16.mxu0 %v3159
      %3973 = vmatmul.mubr.bf16.gmra.mxu0 %v2999
      %v3974 = vpop.f32.mrf.mxu0
      %v3975 = vadd.f32 %v3498, %v3974
      %v3976 = vpop.f32.mrf.mxu0
      %v3977 = vpop.f32.mrf.mxu0
      %v3978 = vadd.f32 %v3498, %v3977
      %v3979 = vpop.f32.mrf.mxu0
      %3980 = vmatprep.mubr.bf16.mxu0 %v3160
      %3981 = vmatmul.mubr.bf16.gmra.mxu0 %v3000
      %v3982 = vpop.f32.mrf.mxu0
      %v3983 = vadd.f32 %v3498, %v3982
      %v3984 = vpop.f32.mrf.mxu0
      %v3985 = vpop.f32.mrf.mxu0
      %v3986 = vadd.f32 %v3498, %v3985
      %v3987 = vpop.f32.mrf.mxu0
      %3988 = vmatprep.mubr.bf16.mxu0 %v3161
      %3989 = vmatmul.mubr.bf16.gmra.mxu0 %v3001
      %v3990 = vpop.f32.mrf.mxu0
      %v3991 = vadd.f32 %v3498, %v3990
      %v3992 = vpop.f32.mrf.mxu0
      %v3993 = vpop.f32.mrf.mxu0
      %v3994 = vadd.f32 %v3498, %v3993
      %v3995 = vpop.f32.mrf.mxu0
      %3996 = vmatprep.mubr.bf16.mxu0 %v3162
      %3997 = vmatmul.mubr.bf16.gmra.mxu0 %v3002
      %v3998 = vpop.f32.mrf.mxu0
      %v3999 = vadd.f32 %v3498, %v3998
      %v4000 = vpop.f32.mrf.mxu0
      %v4001 = vpop.f32.mrf.mxu0
      %v4002 = vadd.f32 %v3498, %v4001
      %v4003 = vpop.f32.mrf.mxu0
      %4004 = vmatprep.mubr.bf16.mxu0 %v3163
      %4005 = vmatmul.mubr.bf16.gmra.mxu0 %v3003
      %v4006 = vpop.f32.mrf.mxu0
      %v4007 = vadd.f32 %v3498, %v4006
      %v4008 = vpop.f32.mrf.mxu0
      %v4009 = vpop.f32.mrf.mxu0
      %v4010 = vadd.f32 %v3498, %v4009
      %v4011 = vpop.f32.mrf.mxu0
      %4012 = vmatprep.mubr.bf16.mxu0 %v3164
      %4013 = vmatmul.mubr.bf16.gmra.mxu0 %v3004
      %v4014 = vpop.f32.mrf.mxu0
      %v4015 = vadd.f32 %v3498, %v4014
      %v4016 = vpop.f32.mrf.mxu0
      %v4017 = vpop.f32.mrf.mxu0
      %v4018 = vadd.f32 %v3498, %v4017
      %v4019 = vpop.f32.mrf.mxu0
      %4020 = vmatprep.mubr.bf16.mxu0 %v3165
      %4021 = vmatmul.mubr.bf16.gmra.mxu0 %v3005
      %v4022 = vpop.f32.mrf.mxu0
      %v4023 = vadd.f32 %v3498, %v4022
      %v4024 = vpop.f32.mrf.mxu0
      %v4025 = vpop.f32.mrf.mxu0
      %v4026 = vadd.f32 %v3498, %v4025
      %v4027 = vpop.f32.mrf.mxu0
      %4028 = vmatprep.mubr.bf16.mxu0 %v3166
      %4029 = vmatmul.mubr.bf16.gmra.mxu0 %v3006
      %v4030 = vpop.f32.mrf.mxu0
      %v4031 = vadd.f32 %v3498, %v4030
      %v4032 = vpop.f32.mrf.mxu0
      %v4033 = vpop.f32.mrf.mxu0
      %v4034 = vadd.f32 %v3498, %v4033
      %v4035 = vpop.f32.mrf.mxu0
      %4036 = vmatprep.mubr.bf16.mxu0 %v3167
      %4037 = vmatmul.mubr.bf16.gmra.mxu0 %v3007
      %v4038 = vpop.f32.mrf.mxu0
      %v4039 = vadd.f32 %v3498, %v4038
      %v4040 = vpop.f32.mrf.mxu0
      %v4041 = vpop.f32.mrf.mxu0
      %v4042 = vadd.f32 %v3498, %v4041
      %v4043 = vpop.f32.mrf.mxu0
      %4044 = vmatprep.mubr.bf16.mxu0 %v3168
      %4045 = vmatmul.mubr.bf16.gmra.mxu0 %v3008
      %v4046 = vpop.f32.mrf.mxu0
      %v4047 = vadd.f32 %v3498, %v4046
      %v4048 = vpop.f32.mrf.mxu0
      %v4049 = vpop.f32.mrf.mxu0
      %v4050 = vadd.f32 %v3498, %v4049
      %v4051 = vpop.f32.mrf.mxu0
      %4052 = vmatprep.mubr.bf16.mxu0 %v3169
      %4053 = vmatmul.mubr.bf16.gmra.mxu0 %v3009
      %v4054 = vpop.f32.mrf.mxu0
      %v4055 = vadd.f32 %v3498, %v4054
      %v4056 = vpop.f32.mrf.mxu0
      %v4057 = vpop.f32.mrf.mxu0
      %v4058 = vadd.f32 %v3498, %v4057
      %v4059 = vpop.f32.mrf.mxu0
      %4060 = vmatprep.mubr.bf16.mxu0 %v3170
      %4061 = vmatmul.mubr.bf16.gmra.mxu0 %v3010
      %v4062 = vpop.f32.mrf.mxu0
      %v4063 = vadd.f32 %v3498, %v4062
      %v4064 = vpop.f32.mrf.mxu0
      %v4065 = vpop.f32.mrf.mxu0
      %v4066 = vadd.f32 %v3498, %v4065
      %v4067 = vpop.f32.mrf.mxu0
      %4068 = vmatprep.mubr.bf16.mxu0 %v3171
      %4069 = vmatmul.mubr.bf16.gmra.mxu0 %v3011
      %v4070 = vpop.f32.mrf.mxu0
      %v4071 = vadd.f32 %v3498, %v4070
      %v4072 = vpop.f32.mrf.mxu0
      %v4073 = vpop.f32.mrf.mxu0
      %v4074 = vadd.f32 %v3498, %v4073
      %v4075 = vpop.f32.mrf.mxu0
      %4076 = vmatprep.mubr.bf16.mxu0 %v3172
      %4077 = vmatmul.mubr.bf16.gmra.mxu0 %v3012
      %v4078 = vpop.f32.mrf.mxu0
      %v4079 = vadd.f32 %v3498, %v4078
      %v4080 = vpop.f32.mrf.mxu0
      %v4081 = vpop.f32.mrf.mxu0
      %v4082 = vadd.f32 %v3498, %v4081
      %v4083 = vpop.f32.mrf.mxu0
      %4084 = vmatprep.mubr.bf16.mxu0 %v3173
      %4085 = vmatmul.mubr.bf16.gmra.mxu0 %v3013
      %v4086 = vpop.f32.mrf.mxu0
      %v4087 = vadd.f32 %v3498, %v4086
      %v4088 = vpop.f32.mrf.mxu0
      %v4089 = vpop.f32.mrf.mxu0
      %v4090 = vadd.f32 %v3498, %v4089
      %v4091 = vpop.f32.mrf.mxu0
      %4092 = vmatprep.mubr.bf16.mxu0 %v3174
      %4093 = vmatmul.mubr.bf16.gmra.mxu0 %v3014
      %v4094 = vpop.f32.mrf.mxu0
      %v4095 = vadd.f32 %v3498, %v4094
      %v4096 = vpop.f32.mrf.mxu0
      %v4097 = vpop.f32.mrf.mxu0
      %v4098 = vadd.f32 %v3498, %v4097
      %v4099 = vpop.f32.mrf.mxu0
      %4100 = vmatprep.mubr.bf16.mxu0 %v3175
      %4101 = vmatmul.mubr.bf16.gmra.mxu0 %v3015
      %v4102 = vpop.f32.mrf.mxu0
      %v4103 = vadd.f32 %v3498, %v4102
      %v4104 = vpop.f32.mrf.mxu0
      %v4105 = vpop.f32.mrf.mxu0
      %v4106 = vadd.f32 %v3498, %v4105
      %v4107 = vpop.f32.mrf.mxu0
      %4108 = vmatprep.mubr.bf16.mxu0 %v3176
      %4109 = vmatmul.mubr.bf16.gmra.mxu0 %v3016
      %v4110 = vpop.f32.mrf.mxu0
      %v4111 = vadd.f32 %v3498, %v4110
      %v4112 = vpop.f32.mrf.mxu0
      %v4113 = vpop.f32.mrf.mxu0
      %v4114 = vadd.f32 %v3498, %v4113
      %v4115 = vpop.f32.mrf.mxu0
      %4116 = vmatprep.mubr.bf16.mxu0 %v3177
      %4117 = vmatmul.mubr.bf16.gmra.mxu0 %v3017
      %v4118 = vpop.f32.mrf.mxu0
      %v4119 = vadd.f32 %v3498, %v4118
      %v4120 = vpop.f32.mrf.mxu0
      %v4121 = vpop.f32.mrf.mxu0
      %v4122 = vadd.f32 %v3498, %v4121
      %v4123 = vpop.f32.mrf.mxu0
      %4124 = vmatprep.mubr.bf16.mxu0 %v3178
      %4125 = vmatmul.mubr.bf16.gmra.mxu0 %v3018
      %v4126 = vpop.f32.mrf.mxu0
      %v4127 = vadd.f32 %v3498, %v4126
      %v4128 = vpop.f32.mrf.mxu0
      %v4129 = vpop.f32.mrf.mxu0
      %v4130 = vadd.f32 %v3498, %v4129
      %v4131 = vpop.f32.mrf.mxu0
      %4132 = vmatprep.mubr.bf16.mxu0 %v3179
      %4133 = vmatmul.mubr.bf16.gmra.mxu0 %v3019
      %v4134 = vpop.f32.mrf.mxu0
      %v4135 = vadd.f32 %v3498, %v4134
      %v4136 = vpop.f32.mrf.mxu0
      %v4137 = vpop.f32.mrf.mxu0
      %v4138 = vadd.f32 %v3498, %v4137
      %v4139 = vpop.f32.mrf.mxu0
      %4140 = vmatprep.mubr.bf16.mxu0 %v3180
      %4141 = vmatmul.mubr.bf16.gmra.mxu0 %v3020
      %v4142 = vpop.f32.mrf.mxu0
      %v4143 = vadd.f32 %v3498, %v4142
      %v4144 = vpop.f32.mrf.mxu0
      %v4145 = vpop.f32.mrf.mxu0
      %v4146 = vadd.f32 %v3498, %v4145
      %v4147 = vpop.f32.mrf.mxu0
      %4148 = vmatprep.mubr.bf16.mxu0 %v3181
      %4149 = vmatmul.mubr.bf16.gmra.mxu0 %v3021
      %v4150 = vpop.f32.mrf.mxu0
      %v4151 = vadd.f32 %v3498, %v4150
      %v4152 = vpop.f32.mrf.mxu0
      %v4153 = vpop.f32.mrf.mxu0
      %v4154 = vadd.f32 %v3498, %v4153
      %v4155 = vpop.f32.mrf.mxu0
      %4156 = vmatprep.mubr.bf16.mxu0 %v3182
      %4157 = vmatmul.mubr.bf16.gmra.mxu0 %v3022
      %v4158 = vpop.f32.mrf.mxu0
      %v4159 = vadd.f32 %v3498, %v4158
      %v4160 = vpop.f32.mrf.mxu0
      %v4161 = vpop.f32.mrf.mxu0
      %v4162 = vadd.f32 %v3498, %v4161
      %v4163 = vpop.f32.mrf.mxu0
      %4164 = vmatprep.mubr.bf16.mxu0 %v3183
      %4165 = vmatmul.mubr.bf16.gmra.mxu0 %v3023
      %v4166 = vpop.f32.mrf.mxu0
      %v4167 = vadd.f32 %v3498, %v4166
      %v4168 = vpop.f32.mrf.mxu0
      %v4169 = vpop.f32.mrf.mxu0
      %v4170 = vadd.f32 %v3498, %v4169
      %v4171 = vpop.f32.mrf.mxu0
      %4172 = vmatprep.mubr.bf16.mxu0 %v3184
      %4173 = vmatmul.mubr.bf16.gmra.mxu0 %v3024
      %v4174 = vpop.f32.mrf.mxu0
      %v4175 = vadd.f32 %v3498, %v4174
      %v4176 = vpop.f32.mrf.mxu0
      %v4177 = vpop.f32.mrf.mxu0
      %v4178 = vadd.f32 %v3498, %v4177
      %v4179 = vpop.f32.mrf.mxu0
      %4180 = vmatprep.mubr.bf16.mxu0 %v3185
      %4181 = vmatmul.mubr.bf16.gmra.mxu0 %v3025
      %v4182 = vpop.f32.mrf.mxu0
      %v4183 = vadd.f32 %v3498, %v4182
      %v4184 = vpop.f32.mrf.mxu0
      %v4185 = vpop.f32.mrf.mxu0
      %v4186 = vadd.f32 %v3498, %v4185
      %v4187 = vpop.f32.mrf.mxu0
      %4188 = vmatprep.mubr.bf16.mxu0 %v3186
      %4189 = vmatmul.mubr.bf16.gmra.mxu0 %v3026
      %v4190 = vpop.f32.mrf.mxu0
      %v4191 = vadd.f32 %v3498, %v4190
      %v4192 = vpop.f32.mrf.mxu0
      %v4193 = vpop.f32.mrf.mxu0
      %v4194 = vadd.f32 %v3498, %v4193
      %v4195 = vpop.f32.mrf.mxu0
      %4196 = vmatprep.mubr.bf16.mxu0 %v3187
      %4197 = vmatmul.mubr.bf16.gmra.mxu0 %v3027
      %v4198 = vpop.f32.mrf.mxu0
      %v4199 = vadd.f32 %v3498, %v4198
      %v4200 = vpop.f32.mrf.mxu0
      %v4201 = vpop.f32.mrf.mxu0
      %v4202 = vadd.f32 %v3498, %v4201
      %v4203 = vpop.f32.mrf.mxu0
      %4204 = vmatprep.mubr.bf16.mxu0 %v3188
      %4205 = vmatmul.mubr.bf16.gmra.mxu0 %v3028
      %v4206 = vpop.f32.mrf.mxu0
      %v4207 = vadd.f32 %v3498, %v4206
      %v4208 = vpop.f32.mrf.mxu0
      %v4209 = vpop.f32.mrf.mxu0
      %v4210 = vadd.f32 %v3498, %v4209
      %v4211 = vpop.f32.mrf.mxu0
      %4212 = vmatprep.mubr.bf16.mxu0 %v3189
      %4213 = vmatmul.mubr.bf16.gmra.mxu0 %v3029
      %v4214 = vpop.f32.mrf.mxu0
      %v4215 = vadd.f32 %v3498, %v4214
      %v4216 = vpop.f32.mrf.mxu0
      %v4217 = vpop.f32.mrf.mxu0
      %v4218 = vadd.f32 %v3498, %v4217
      %v4219 = vpop.f32.mrf.mxu0
      %4220 = vdwg.mxu0
      %4221 = vmatprep.subr.bf16.mxu0 0
      %4222 = vmatpush1.bf16.msra.mxu0 %v3811
      %4223 = vmatprep.subr.bf16.mxu0 0
      %4224 = vmatpush1.bf16.msra.mxu0 %v3810
      %4225 = vmatprep.subr.bf16.mxu0 0
      %4226 = vmatpush1.bf16.msra.mxu0 %v3809
      %4227 = vmatprep.subr.bf16.mxu0 0
      %4228 = vmatpush1.bf16.msra.mxu0 %v3808
      %4229 = vmatprep.subr.bf16.mxu0 0
      %4230 = vmatpush1.bf16.msra.mxu0 %v3807
      %4231 = vmatprep.subr.bf16.mxu0 0
      %4232 = vmatpush1.bf16.msra.mxu0 %v3806
      %4233 = vmatprep.subr.bf16.mxu0 0
      %4234 = vmatpush1.bf16.msra.mxu0 %v3805
      %4235 = vmatprep.subr.bf16.mxu0 0
      %4236 = vmatpush1.bf16.msra.mxu0 %v3804
      %4237 = vmatprep.subr.bf16.mxu0 0
      %4238 = vmatpush2.bf16.msra.mxu0 %v3819
      %4239 = vmatprep.subr.bf16.mxu0 0
      %4240 = vmatpush2.bf16.msra.mxu0 %v3818
      %4241 = vmatprep.subr.bf16.mxu0 0
      %4242 = vmatpush2.bf16.msra.mxu0 %v3817
      %4243 = vmatprep.subr.bf16.mxu0 0
      %4244 = vmatpush2.bf16.msra.mxu0 %v3816
      %4245 = vmatprep.subr.bf16.mxu0 0
      %4246 = vmatpush2.bf16.msra.mxu0 %v3815
      %4247 = vmatprep.subr.bf16.mxu0 0
      %4248 = vmatpush2.bf16.msra.mxu0 %v3814
      %4249 = vmatprep.subr.bf16.mxu0 0
      %4250 = vmatpush2.bf16.msra.mxu0 %v3813
      %4251 = vmatprep.subr.bf16.mxu0 0
      %4252 = vmatpush2.bf16.msra.mxu0 %v3812
      %4253 = vmatprep.mubr.bf16.mxu0 %v2999
      %4254 = vmatmul.mubr.bf16.gmra.mxu0 %v3318
      %v4255 = vpop.f32.mrf.mxu0
      %v4256 = vadd.f32 %v3967, %v4255
      %v4257 = vpop.f32.mrf.mxu0
      %v4258 = vpop.f32.mrf.mxu0
      %v4259 = vadd.f32 %v3970, %v4258
      %v4260 = vpop.f32.mrf.mxu0
      %4261 = vmatprep.mubr.bf16.mxu0 %v3000
      %4262 = vmatmul.mubr.bf16.gmra.mxu0 %v3319
      %v4263 = vpop.f32.mrf.mxu0
      %v4264 = vadd.f32 %v3975, %v4263
      %v4265 = vpop.f32.mrf.mxu0
      %v4266 = vpop.f32.mrf.mxu0
      %v4267 = vadd.f32 %v3978, %v4266
      %v4268 = vpop.f32.mrf.mxu0
      %4269 = vmatprep.mubr.bf16.mxu0 %v3001
      %4270 = vmatmul.mubr.bf16.gmra.mxu0 %v3320
      %v4271 = vpop.f32.mrf.mxu0
      %v4272 = vadd.f32 %v3983, %v4271
      %v4273 = vpop.f32.mrf.mxu0
      %v4274 = vpop.f32.mrf.mxu0
      %v4275 = vadd.f32 %v3986, %v4274
      %v4276 = vpop.f32.mrf.mxu0
      %4277 = vmatprep.mubr.bf16.mxu0 %v3002
      %4278 = vmatmul.mubr.bf16.gmra.mxu0 %v3321
      %v4279 = vpop.f32.mrf.mxu0
      %v4280 = vadd.f32 %v3991, %v4279
      %v4281 = vpop.f32.mrf.mxu0
      %v4282 = vpop.f32.mrf.mxu0
      %v4283 = vadd.f32 %v3994, %v4282
      %v4284 = vpop.f32.mrf.mxu0
      %4285 = vmatprep.mubr.bf16.mxu0 %v3003
      %4286 = vmatmul.mubr.bf16.gmra.mxu0 %v3322
      %v4287 = vpop.f32.mrf.mxu0
      %v4288 = vadd.f32 %v3999, %v4287
      %v4289 = vpop.f32.mrf.mxu0
      %v4290 = vpop.f32.mrf.mxu0
      %v4291 = vadd.f32 %v4002, %v4290
      %v4292 = vpop.f32.mrf.mxu0
      %4293 = vmatprep.mubr.bf16.mxu0 %v3004
      %4294 = vmatmul.mubr.bf16.gmra.mxu0 %v3323
      %v4295 = vpop.f32.mrf.mxu0
      %v4296 = vadd.f32 %v4007, %v4295
      %v4297 = vpop.f32.mrf.mxu0
      %v4298 = vpop.f32.mrf.mxu0
      %v4299 = vadd.f32 %v4010, %v4298
      %v4300 = vpop.f32.mrf.mxu0
      %4301 = vmatprep.mubr.bf16.mxu0 %v3005
      %4302 = vmatmul.mubr.bf16.gmra.mxu0 %v3324
      %v4303 = vpop.f32.mrf.mxu0
      %v4304 = vadd.f32 %v4015, %v4303
      %v4305 = vpop.f32.mrf.mxu0
      %v4306 = vpop.f32.mrf.mxu0
      %v4307 = vadd.f32 %v4018, %v4306
      %v4308 = vpop.f32.mrf.mxu0
      %4309 = vmatprep.mubr.bf16.mxu0 %v3006
      %4310 = vmatmul.mubr.bf16.gmra.mxu0 %v3325
      %v4311 = vpop.f32.mrf.mxu0
      %v4312 = vadd.f32 %v4023, %v4311
      %v4313 = vpop.f32.mrf.mxu0
      %v4314 = vpop.f32.mrf.mxu0
      %v4315 = vadd.f32 %v4026, %v4314
      %v4316 = vpop.f32.mrf.mxu0
      %4317 = vmatprep.mubr.bf16.mxu0 %v3007
      %4318 = vmatmul.mubr.bf16.gmra.mxu0 %v3326
      %v4319 = vpop.f32.mrf.mxu0
      %v4320 = vadd.f32 %v4031, %v4319
      %v4321 = vpop.f32.mrf.mxu0
      %v4322 = vpop.f32.mrf.mxu0
      %v4323 = vadd.f32 %v4034, %v4322
      %v4324 = vpop.f32.mrf.mxu0
      %4325 = vmatprep.mubr.bf16.mxu0 %v3008
      %4326 = vmatmul.mubr.bf16.gmra.mxu0 %v3327
      %v4327 = vpop.f32.mrf.mxu0
      %v4328 = vadd.f32 %v4039, %v4327
      %v4329 = vpop.f32.mrf.mxu0
      %v4330 = vpop.f32.mrf.mxu0
      %v4331 = vadd.f32 %v4042, %v4330
      %v4332 = vpop.f32.mrf.mxu0
      %4333 = vmatprep.mubr.bf16.mxu0 %v3009
      %4334 = vmatmul.mubr.bf16.gmra.mxu0 %v3328
      %v4335 = vpop.f32.mrf.mxu0
      %v4336 = vadd.f32 %v4047, %v4335
      %v4337 = vpop.f32.mrf.mxu0
      %v4338 = vpop.f32.mrf.mxu0
      %v4339 = vadd.f32 %v4050, %v4338
      %v4340 = vpop.f32.mrf.mxu0
      %4341 = vmatprep.mubr.bf16.mxu0 %v3010
      %4342 = vmatmul.mubr.bf16.gmra.mxu0 %v3329
      %v4343 = vpop.f32.mrf.mxu0
      %v4344 = vadd.f32 %v4055, %v4343
      %v4345 = vpop.f32.mrf.mxu0
      %v4346 = vpop.f32.mrf.mxu0
      %v4347 = vadd.f32 %v4058, %v4346
      %v4348 = vpop.f32.mrf.mxu0
      %4349 = vmatprep.mubr.bf16.mxu0 %v3011
      %4350 = vmatmul.mubr.bf16.gmra.mxu0 %v3330
      %v4351 = vpop.f32.mrf.mxu0
      %v4352 = vadd.f32 %v4063, %v4351
      %v4353 = vpop.f32.mrf.mxu0
      %v4354 = vpop.f32.mrf.mxu0
      %v4355 = vadd.f32 %v4066, %v4354
      %v4356 = vpop.f32.mrf.mxu0
      %4357 = vmatprep.mubr.bf16.mxu0 %v3012
      %4358 = vmatmul.mubr.bf16.gmra.mxu0 %v3331
      %v4359 = vpop.f32.mrf.mxu0
      %v4360 = vadd.f32 %v4071, %v4359
      %v4361 = vpop.f32.mrf.mxu0
      %v4362 = vpop.f32.mrf.mxu0
      %v4363 = vadd.f32 %v4074, %v4362
      %v4364 = vpop.f32.mrf.mxu0
      %4365 = vmatprep.mubr.bf16.mxu0 %v3013
      %4366 = vmatmul.mubr.bf16.gmra.mxu0 %v3332
      %v4367 = vpop.f32.mrf.mxu0
      %v4368 = vadd.f32 %v4079, %v4367
      %v4369 = vpop.f32.mrf.mxu0
      %v4370 = vpop.f32.mrf.mxu0
      %v4371 = vadd.f32 %v4082, %v4370
      %v4372 = vpop.f32.mrf.mxu0
      %4373 = vmatprep.mubr.bf16.mxu0 %v3014
      %4374 = vmatmul.mubr.bf16.gmra.mxu0 %v3333
      %v4375 = vpop.f32.mrf.mxu0
      %v4376 = vadd.f32 %v4087, %v4375
      %v4377 = vpop.f32.mrf.mxu0
      %v4378 = vpop.f32.mrf.mxu0
      %v4379 = vadd.f32 %v4090, %v4378
      %v4380 = vpop.f32.mrf.mxu0
      %4381 = vmatprep.mubr.bf16.mxu0 %v3015
      %4382 = vmatmul.mubr.bf16.gmra.mxu0 %v3334
      %v4383 = vpop.f32.mrf.mxu0
      %v4384 = vadd.f32 %v4095, %v4383
      %v4385 = vpop.f32.mrf.mxu0
      %v4386 = vpop.f32.mrf.mxu0
      %v4387 = vadd.f32 %v4098, %v4386
      %v4388 = vpop.f32.mrf.mxu0
      %4389 = vmatprep.mubr.bf16.mxu0 %v3016
      %4390 = vmatmul.mubr.bf16.gmra.mxu0 %v3335
      %v4391 = vpop.f32.mrf.mxu0
      %v4392 = vadd.f32 %v4103, %v4391
      %v4393 = vpop.f32.mrf.mxu0
      %v4394 = vpop.f32.mrf.mxu0
      %v4395 = vadd.f32 %v4106, %v4394
      %v4396 = vpop.f32.mrf.mxu0
      %4397 = vmatprep.mubr.bf16.mxu0 %v3017
      %4398 = vmatmul.mubr.bf16.gmra.mxu0 %v3336
      %v4399 = vpop.f32.mrf.mxu0
      %v4400 = vadd.f32 %v4111, %v4399
      %v4401 = vpop.f32.mrf.mxu0
      %v4402 = vpop.f32.mrf.mxu0
      %v4403 = vadd.f32 %v4114, %v4402
      %v4404 = vpop.f32.mrf.mxu0
      %4405 = vmatprep.mubr.bf16.mxu0 %v3018
      %4406 = vmatmul.mubr.bf16.gmra.mxu0 %v3337
      %v4407 = vpop.f32.mrf.mxu0
      %v4408 = vadd.f32 %v4119, %v4407
      %v4409 = vpop.f32.mrf.mxu0
      %v4410 = vpop.f32.mrf.mxu0
      %v4411 = vadd.f32 %v4122, %v4410
      %v4412 = vpop.f32.mrf.mxu0
      %4413 = vmatprep.mubr.bf16.mxu0 %v3019
      %4414 = vmatmul.mubr.bf16.gmra.mxu0 %v3338
      %v4415 = vpop.f32.mrf.mxu0
      %v4416 = vadd.f32 %v4127, %v4415
      %v4417 = vpop.f32.mrf.mxu0
      %v4418 = vpop.f32.mrf.mxu0
      %v4419 = vadd.f32 %v4130, %v4418
      %v4420 = vpop.f32.mrf.mxu0
      %4421 = vmatprep.mubr.bf16.mxu0 %v3020
      %4422 = vmatmul.mubr.bf16.gmra.mxu0 %v3339
      %v4423 = vpop.f32.mrf.mxu0
      %v4424 = vadd.f32 %v4135, %v4423
      %v4425 = vpop.f32.mrf.mxu0
      %v4426 = vpop.f32.mrf.mxu0
      %v4427 = vadd.f32 %v4138, %v4426
      %v4428 = vpop.f32.mrf.mxu0
      %4429 = vmatprep.mubr.bf16.mxu0 %v3021
      %4430 = vmatmul.mubr.bf16.gmra.mxu0 %v3340
      %v4431 = vpop.f32.mrf.mxu0
      %v4432 = vadd.f32 %v4143, %v4431
      %v4433 = vpop.f32.mrf.mxu0
      %v4434 = vpop.f32.mrf.mxu0
      %v4435 = vadd.f32 %v4146, %v4434
      %v4436 = vpop.f32.mrf.mxu0
      %4437 = vmatprep.mubr.bf16.mxu0 %v3022
      %4438 = vmatmul.mubr.bf16.gmra.mxu0 %v3341
      %v4439 = vpop.f32.mrf.mxu0
      %v4440 = vadd.f32 %v4151, %v4439
      %v4441 = vpop.f32.mrf.mxu0
      %v4442 = vpop.f32.mrf.mxu0
      %v4443 = vadd.f32 %v4154, %v4442
      %v4444 = vpop.f32.mrf.mxu0
      %4445 = vmatprep.mubr.bf16.mxu0 %v3023
      %4446 = vmatmul.mubr.bf16.gmra.mxu0 %v3342
      %v4447 = vpop.f32.mrf.mxu0
      %v4448 = vadd.f32 %v4159, %v4447
      %v4449 = vpop.f32.mrf.mxu0
      %v4450 = vpop.f32.mrf.mxu0
      %v4451 = vadd.f32 %v4162, %v4450
      %v4452 = vpop.f32.mrf.mxu0
      %4453 = vmatprep.mubr.bf16.mxu0 %v3024
      %4454 = vmatmul.mubr.bf16.gmra.mxu0 %v3343
      %v4455 = vpop.f32.mrf.mxu0
      %v4456 = vadd.f32 %v4167, %v4455
      %v4457 = vpop.f32.mrf.mxu0
      %v4458 = vpop.f32.mrf.mxu0
      %v4459 = vadd.f32 %v4170, %v4458
      %v4460 = vpop.f32.mrf.mxu0
      %4461 = vmatprep.mubr.bf16.mxu0 %v3025
      %4462 = vmatmul.mubr.bf16.gmra.mxu0 %v3344
      %v4463 = vpop.f32.mrf.mxu0
      %v4464 = vadd.f32 %v4175, %v4463
      %v4465 = vpop.f32.mrf.mxu0
      %v4466 = vpop.f32.mrf.mxu0
      %v4467 = vadd.f32 %v4178, %v4466
      %v4468 = vpop.f32.mrf.mxu0
      %4469 = vmatprep.mubr.bf16.mxu0 %v3026
      %4470 = vmatmul.mubr.bf16.gmra.mxu0 %v3345
      %v4471 = vpop.f32.mrf.mxu0
      %v4472 = vadd.f32 %v4183, %v4471
      %v4473 = vpop.f32.mrf.mxu0
      %v4474 = vpop.f32.mrf.mxu0
      %v4475 = vadd.f32 %v4186, %v4474
      %v4476 = vpop.f32.mrf.mxu0
      %4477 = vmatprep.mubr.bf16.mxu0 %v3027
      %4478 = vmatmul.mubr.bf16.gmra.mxu0 %v3346
      %v4479 = vpop.f32.mrf.mxu0
      %v4480 = vadd.f32 %v4191, %v4479
      %v4481 = vpop.f32.mrf.mxu0
      %v4482 = vpop.f32.mrf.mxu0
      %v4483 = vadd.f32 %v4194, %v4482
      %v4484 = vpop.f32.mrf.mxu0
      %4485 = vmatprep.mubr.bf16.mxu0 %v3028
      %4486 = vmatmul.mubr.bf16.gmra.mxu0 %v3347
      %v4487 = vpop.f32.mrf.mxu0
      %v4488 = vadd.f32 %v4199, %v4487
      %v4489 = vpop.f32.mrf.mxu0
      %v4490 = vpop.f32.mrf.mxu0
      %v4491 = vadd.f32 %v4202, %v4490
      %v4492 = vpop.f32.mrf.mxu0
      %4493 = vmatprep.mubr.bf16.mxu0 %v3029
      %4494 = vmatmul.mubr.bf16.gmra.mxu0 %v3348
      %v4495 = vpop.f32.mrf.mxu0
      %v4496 = vadd.f32 %v4207, %v4495
      %v4497 = vpop.f32.mrf.mxu0
      %v4498 = vpop.f32.mrf.mxu0
      %v4499 = vadd.f32 %v4210, %v4498
      %v4500 = vpop.f32.mrf.mxu0
      %4501 = vmatprep.mubr.bf16.mxu0 %v2998
      %4502 = vmatmul.mubr.bf16.gmra.mxu0 %v3349
      %v4503 = vpop.f32.mrf.mxu0
      %v4504 = vadd.f32 %v4215, %v4503
      %v4505 = vpop.f32.mrf.mxu0
      %v4506 = vpop.f32.mrf.mxu0
      %v4507 = vadd.f32 %v4218, %v4506
      %v4508 = vpop.f32.mrf.mxu0
      %4509 = vdwg.mxu0
      %4510 = vmatprep.subr.bf16.mxu0 0
      %4511 = vmatpush1.bf16.msra.mxu0 %v3827
      %4512 = vmatprep.subr.bf16.mxu0 0
      %4513 = vmatpush1.bf16.msra.mxu0 %v3826
      %4514 = vmatprep.subr.bf16.mxu0 0
      %4515 = vmatpush1.bf16.msra.mxu0 %v3825
      %4516 = vmatprep.subr.bf16.mxu0 0
      %4517 = vmatpush1.bf16.msra.mxu0 %v3824
      %4518 = vmatprep.subr.bf16.mxu0 0
      %4519 = vmatpush1.bf16.msra.mxu0 %v3823
      %4520 = vmatprep.subr.bf16.mxu0 0
      %4521 = vmatpush1.bf16.msra.mxu0 %v3822
      %4522 = vmatprep.subr.bf16.mxu0 0
      %4523 = vmatpush1.bf16.msra.mxu0 %v3821
      %4524 = vmatprep.subr.bf16.mxu0 0
      %4525 = vmatpush1.bf16.msra.mxu0 %v3820
      %4526 = vmatprep.subr.bf16.mxu0 0
      %4527 = vmatpush2.bf16.msra.mxu0 %v3835
      %4528 = vmatprep.subr.bf16.mxu0 0
      %4529 = vmatpush2.bf16.msra.mxu0 %v3834
      %4530 = vmatprep.subr.bf16.mxu0 0
      %4531 = vmatpush2.bf16.msra.mxu0 %v3833
      %4532 = vmatprep.subr.bf16.mxu0 0
      %4533 = vmatpush2.bf16.msra.mxu0 %v3832
      %4534 = vmatprep.subr.bf16.mxu0 0
      %4535 = vmatpush2.bf16.msra.mxu0 %v3831
      %4536 = vmatprep.subr.bf16.mxu0 0
      %4537 = vmatpush2.bf16.msra.mxu0 %v3830
      %4538 = vmatprep.subr.bf16.mxu0 0
      %4539 = vmatpush2.bf16.msra.mxu0 %v3829
      %4540 = vmatprep.subr.bf16.mxu0 0
      %4541 = vmatpush2.bf16.msra.mxu0 %v3828
      %4542 = vmatprep.mubr.bf16.mxu0 %v3319
      %4543 = vmatmul.mubr.bf16.gmra.mxu0 %v3159
      %v4544 = vpop.f32.mrf.mxu0
      %v4545 = vadd.f32 %v4256, %v4544
      %v4546 = vpop.f32.mrf.mxu0
      %v4547 = vpop.f32.mrf.mxu0
      %v4548 = vadd.f32 %v4259, %v4547
      %v4549 = vpop.f32.mrf.mxu0
      %4550 = vmatprep.mubr.bf16.mxu0 %v3320
      %4551 = vmatmul.mubr.bf16.gmra.mxu0 %v3160
      %v4552 = vpop.f32.mrf.mxu0
      %v4553 = vadd.f32 %v4264, %v4552
      %v4554 = vpop.f32.mrf.mxu0
      %v4555 = vpop.f32.mrf.mxu0
      %v4556 = vadd.f32 %v4267, %v4555
      %v4557 = vpop.f32.mrf.mxu0
      %4558 = vmatprep.mubr.bf16.mxu0 %v3321
      %4559 = vmatmul.mubr.bf16.gmra.mxu0 %v3161
      %v4560 = vpop.f32.mrf.mxu0
      %v4561 = vadd.f32 %v4272, %v4560
      %v4562 = vpop.f32.mrf.mxu0
      %v4563 = vpop.f32.mrf.mxu0
      %v4564 = vadd.f32 %v4275, %v4563
      %v4565 = vpop.f32.mrf.mxu0
      %4566 = vmatprep.mubr.bf16.mxu0 %v3322
      %4567 = vmatmul.mubr.bf16.gmra.mxu0 %v3162
      %v4568 = vpop.f32.mrf.mxu0
      %v4569 = vadd.f32 %v4280, %v4568
      %v4570 = vpop.f32.mrf.mxu0
      %v4571 = vpop.f32.mrf.mxu0
      %v4572 = vadd.f32 %v4283, %v4571
      %v4573 = vpop.f32.mrf.mxu0
      %4574 = vmatprep.mubr.bf16.mxu0 %v3323
      %4575 = vmatmul.mubr.bf16.gmra.mxu0 %v3163
      %v4576 = vpop.f32.mrf.mxu0
      %v4577 = vadd.f32 %v4288, %v4576
      %v4578 = vpop.f32.mrf.mxu0
      %v4579 = vpop.f32.mrf.mxu0
      %v4580 = vadd.f32 %v4291, %v4579
      %v4581 = vpop.f32.mrf.mxu0
      %4582 = vmatprep.mubr.bf16.mxu0 %v3324
      %4583 = vmatmul.mubr.bf16.gmra.mxu0 %v3164
      %v4584 = vpop.f32.mrf.mxu0
      %v4585 = vadd.f32 %v4296, %v4584
      %v4586 = vpop.f32.mrf.mxu0
      %v4587 = vpop.f32.mrf.mxu0
      %v4588 = vadd.f32 %v4299, %v4587
      %v4589 = vpop.f32.mrf.mxu0
      %4590 = vmatprep.mubr.bf16.mxu0 %v3325
      %4591 = vmatmul.mubr.bf16.gmra.mxu0 %v3165
      %v4592 = vpop.f32.mrf.mxu0
      %v4593 = vadd.f32 %v4304, %v4592
      %v4594 = vpop.f32.mrf.mxu0
      %v4595 = vpop.f32.mrf.mxu0
      %v4596 = vadd.f32 %v4307, %v4595
      %v4597 = vpop.f32.mrf.mxu0
      %4598 = vmatprep.mubr.bf16.mxu0 %v3326
      %4599 = vmatmul.mubr.bf16.gmra.mxu0 %v3166
      %v4600 = vpop.f32.mrf.mxu0
      %v4601 = vadd.f32 %v4312, %v4600
      %v4602 = vpop.f32.mrf.mxu0
      %v4603 = vpop.f32.mrf.mxu0
      %v4604 = vadd.f32 %v4315, %v4603
      %v4605 = vpop.f32.mrf.mxu0
      %4606 = vmatprep.mubr.bf16.mxu0 %v3327
      %4607 = vmatmul.mubr.bf16.gmra.mxu0 %v3167
      %v4608 = vpop.f32.mrf.mxu0
      %v4609 = vadd.f32 %v4320, %v4608
      %v4610 = vpop.f32.mrf.mxu0
      %v4611 = vpop.f32.mrf.mxu0
      %v4612 = vadd.f32 %v4323, %v4611
      %v4613 = vpop.f32.mrf.mxu0
      %4614 = vmatprep.mubr.bf16.mxu0 %v3328
      %4615 = vmatmul.mubr.bf16.gmra.mxu0 %v3168
      %v4616 = vpop.f32.mrf.mxu0
      %v4617 = vadd.f32 %v4328, %v4616
      %v4618 = vpop.f32.mrf.mxu0
      %v4619 = vpop.f32.mrf.mxu0
      %v4620 = vadd.f32 %v4331, %v4619
      %v4621 = vpop.f32.mrf.mxu0
      %4622 = vmatprep.mubr.bf16.mxu0 %v3329
      %4623 = vmatmul.mubr.bf16.gmra.mxu0 %v3169
      %v4624 = vpop.f32.mrf.mxu0
      %v4625 = vadd.f32 %v4336, %v4624
      %v4626 = vpop.f32.mrf.mxu0
      %v4627 = vpop.f32.mrf.mxu0
      %v4628 = vadd.f32 %v4339, %v4627
      %v4629 = vpop.f32.mrf.mxu0
      %4630 = vmatprep.mubr.bf16.mxu0 %v3330
      %4631 = vmatmul.mubr.bf16.gmra.mxu0 %v3170
      %v4632 = vpop.f32.mrf.mxu0
      %v4633 = vadd.f32 %v4344, %v4632
      %v4634 = vpop.f32.mrf.mxu0
      %v4635 = vpop.f32.mrf.mxu0
      %v4636 = vadd.f32 %v4347, %v4635
      %v4637 = vpop.f32.mrf.mxu0
      %4638 = vmatprep.mubr.bf16.mxu0 %v3331
      %4639 = vmatmul.mubr.bf16.gmra.mxu0 %v3171
      %v4640 = vpop.f32.mrf.mxu0
      %v4641 = vadd.f32 %v4352, %v4640
      %v4642 = vpop.f32.mrf.mxu0
      %v4643 = vpop.f32.mrf.mxu0
      %v4644 = vadd.f32 %v4355, %v4643
      %v4645 = vpop.f32.mrf.mxu0
      %4646 = vmatprep.mubr.bf16.mxu0 %v3332
      %4647 = vmatmul.mubr.bf16.gmra.mxu0 %v3172
      %v4648 = vpop.f32.mrf.mxu0
      %v4649 = vadd.f32 %v4360, %v4648
      %v4650 = vpop.f32.mrf.mxu0
      %v4651 = vpop.f32.mrf.mxu0
      %v4652 = vadd.f32 %v4363, %v4651
      %v4653 = vpop.f32.mrf.mxu0
      %4654 = vmatprep.mubr.bf16.mxu0 %v3333
      %4655 = vmatmul.mubr.bf16.gmra.mxu0 %v3173
      %v4656 = vpop.f32.mrf.mxu0
      %v4657 = vadd.f32 %v4368, %v4656
      %v4658 = vpop.f32.mrf.mxu0
      %v4659 = vpop.f32.mrf.mxu0
      %v4660 = vadd.f32 %v4371, %v4659
      %v4661 = vpop.f32.mrf.mxu0
      %4662 = vmatprep.mubr.bf16.mxu0 %v3334
      %4663 = vmatmul.mubr.bf16.gmra.mxu0 %v3174
      %v4664 = vpop.f32.mrf.mxu0
      %v4665 = vadd.f32 %v4376, %v4664
      %v4666 = vpop.f32.mrf.mxu0
      %v4667 = vpop.f32.mrf.mxu0
      %v4668 = vadd.f32 %v4379, %v4667
      %v4669 = vpop.f32.mrf.mxu0
      %4670 = vmatprep.mubr.bf16.mxu0 %v3335
      %4671 = vmatmul.mubr.bf16.gmra.mxu0 %v3175
      %v4672 = vpop.f32.mrf.mxu0
      %v4673 = vadd.f32 %v4384, %v4672
      %v4674 = vpop.f32.mrf.mxu0
      %v4675 = vpop.f32.mrf.mxu0
      %v4676 = vadd.f32 %v4387, %v4675
      %v4677 = vpop.f32.mrf.mxu0
      %4678 = vmatprep.mubr.bf16.mxu0 %v3336
      %4679 = vmatmul.mubr.bf16.gmra.mxu0 %v3176
      %v4680 = vpop.f32.mrf.mxu0
      %v4681 = vadd.f32 %v4392, %v4680
      %v4682 = vpop.f32.mrf.mxu0
      %v4683 = vpop.f32.mrf.mxu0
      %v4684 = vadd.f32 %v4395, %v4683
      %v4685 = vpop.f32.mrf.mxu0
      %4686 = vmatprep.mubr.bf16.mxu0 %v3337
      %4687 = vmatmul.mubr.bf16.gmra.mxu0 %v3177
      %v4688 = vpop.f32.mrf.mxu0
      %v4689 = vadd.f32 %v4400, %v4688
      %v4690 = vpop.f32.mrf.mxu0
      %v4691 = vpop.f32.mrf.mxu0
      %v4692 = vadd.f32 %v4403, %v4691
      %v4693 = vpop.f32.mrf.mxu0
      %4694 = vmatprep.mubr.bf16.mxu0 %v3338
      %4695 = vmatmul.mubr.bf16.gmra.mxu0 %v3178
      %v4696 = vpop.f32.mrf.mxu0
      %v4697 = vadd.f32 %v4408, %v4696
      %v4698 = vpop.f32.mrf.mxu0
      %v4699 = vpop.f32.mrf.mxu0
      %v4700 = vadd.f32 %v4411, %v4699
      %v4701 = vpop.f32.mrf.mxu0
      %4702 = vmatprep.mubr.bf16.mxu0 %v3339
      %4703 = vmatmul.mubr.bf16.gmra.mxu0 %v3179
      %v4704 = vpop.f32.mrf.mxu0
      %v4705 = vadd.f32 %v4416, %v4704
      %v4706 = vpop.f32.mrf.mxu0
      %v4707 = vpop.f32.mrf.mxu0
      %v4708 = vadd.f32 %v4419, %v4707
      %v4709 = vpop.f32.mrf.mxu0
      %4710 = vmatprep.mubr.bf16.mxu0 %v3340
      %4711 = vmatmul.mubr.bf16.gmra.mxu0 %v3180
      %v4712 = vpop.f32.mrf.mxu0
      %v4713 = vadd.f32 %v4424, %v4712
      %v4714 = vpop.f32.mrf.mxu0
      %v4715 = vpop.f32.mrf.mxu0
      %v4716 = vadd.f32 %v4427, %v4715
      %v4717 = vpop.f32.mrf.mxu0
      %4718 = vmatprep.mubr.bf16.mxu0 %v3341
      %4719 = vmatmul.mubr.bf16.gmra.mxu0 %v3181
      %v4720 = vpop.f32.mrf.mxu0
      %v4721 = vadd.f32 %v4432, %v4720
      %v4722 = vpop.f32.mrf.mxu0
      %v4723 = vpop.f32.mrf.mxu0
      %v4724 = vadd.f32 %v4435, %v4723
      %v4725 = vpop.f32.mrf.mxu0
      %4726 = vmatprep.mubr.bf16.mxu0 %v3342
      %4727 = vmatmul.mubr.bf16.gmra.mxu0 %v3182
      %v4728 = vpop.f32.mrf.mxu0
      %v4729 = vadd.f32 %v4440, %v4728
      %v4730 = vpop.f32.mrf.mxu0
      %v4731 = vpop.f32.mrf.mxu0
      %v4732 = vadd.f32 %v4443, %v4731
      %v4733 = vpop.f32.mrf.mxu0
      %4734 = vmatprep.mubr.bf16.mxu0 %v3343
      %4735 = vmatmul.mubr.bf16.gmra.mxu0 %v3183
      %v4736 = vpop.f32.mrf.mxu0
      %v4737 = vadd.f32 %v4448, %v4736
      %v4738 = vpop.f32.mrf.mxu0
      %v4739 = vpop.f32.mrf.mxu0
      %v4740 = vadd.f32 %v4451, %v4739
      %v4741 = vpop.f32.mrf.mxu0
      %4742 = vmatprep.mubr.bf16.mxu0 %v3344
      %4743 = vmatmul.mubr.bf16.gmra.mxu0 %v3184
      %v4744 = vpop.f32.mrf.mxu0
      %v4745 = vadd.f32 %v4456, %v4744
      %v4746 = vpop.f32.mrf.mxu0
      %v4747 = vpop.f32.mrf.mxu0
      %v4748 = vadd.f32 %v4459, %v4747
      %v4749 = vpop.f32.mrf.mxu0
      %4750 = vmatprep.mubr.bf16.mxu0 %v3345
      %4751 = vmatmul.mubr.bf16.gmra.mxu0 %v3185
      %v4752 = vpop.f32.mrf.mxu0
      %v4753 = vadd.f32 %v4464, %v4752
      %v4754 = vpop.f32.mrf.mxu0
      %v4755 = vpop.f32.mrf.mxu0
      %v4756 = vadd.f32 %v4467, %v4755
      %v4757 = vpop.f32.mrf.mxu0
      %4758 = vmatprep.mubr.bf16.mxu0 %v3346
      %4759 = vmatmul.mubr.bf16.gmra.mxu0 %v3186
      %v4760 = vpop.f32.mrf.mxu0
      %v4761 = vadd.f32 %v4472, %v4760
      %v4762 = vpop.f32.mrf.mxu0
      %v4763 = vpop.f32.mrf.mxu0
      %v4764 = vadd.f32 %v4475, %v4763
      %v4765 = vpop.f32.mrf.mxu0
      %4766 = vmatprep.mubr.bf16.mxu0 %v3347
      %4767 = vmatmul.mubr.bf16.gmra.mxu0 %v3187
      %v4768 = vpop.f32.mrf.mxu0
      %v4769 = vadd.f32 %v4480, %v4768
      %v4770 = vpop.f32.mrf.mxu0
      %v4771 = vpop.f32.mrf.mxu0
      %v4772 = vadd.f32 %v4483, %v4771
      %v4773 = vpop.f32.mrf.mxu0
      %4774 = vmatprep.mubr.bf16.mxu0 %v3348
      %4775 = vmatmul.mubr.bf16.gmra.mxu0 %v3188
      %v4776 = vpop.f32.mrf.mxu0
      %v4777 = vadd.f32 %v4488, %v4776
      %v4778 = vpop.f32.mrf.mxu0
      %v4779 = vpop.f32.mrf.mxu0
      %v4780 = vadd.f32 %v4491, %v4779
      %v4781 = vpop.f32.mrf.mxu0
      %4782 = vmatprep.mubr.bf16.mxu0 %v3349
      %4783 = vmatmul.mubr.bf16.gmra.mxu0 %v3189
      %v4784 = vpop.f32.mrf.mxu0
      %v4785 = vadd.f32 %v4496, %v4784
      %v4786 = vpop.f32.mrf.mxu0
      %v4787 = vpop.f32.mrf.mxu0
      %v4788 = vadd.f32 %v4499, %v4787
      %v4789 = vpop.f32.mrf.mxu0
      %4790 = vmatprep.mubr.bf16.mxu0 %v3318
      %4791 = vmatmul.mubr.bf16.gmra.mxu0 %v3158
      %v4792 = vpop.f32.mrf.mxu0
      %v4793 = vadd.f32 %v4504, %v4792
      %v4794 = vpop.f32.mrf.mxu0
      %v4795 = vpop.f32.mrf.mxu0
      %v4796 = vadd.f32 %v4507, %v4795
      %v4797 = vpop.f32.mrf.mxu0
      %4798 = vdwg.mxu0
      %4799 = vmatprep.subr.bf16.mxu0 0
      %4800 = vmatpush1.bf16.msra.mxu0 %v3843
      %4801 = vmatprep.subr.bf16.mxu0 0
      %4802 = vmatpush1.bf16.msra.mxu0 %v3842
      %4803 = vmatprep.subr.bf16.mxu0 0
      %4804 = vmatpush1.bf16.msra.mxu0 %v3841
      %4805 = vmatprep.subr.bf16.mxu0 0
      %4806 = vmatpush1.bf16.msra.mxu0 %v3840
      %4807 = vmatprep.subr.bf16.mxu0 0
      %4808 = vmatpush1.bf16.msra.mxu0 %v3839
      %4809 = vmatprep.subr.bf16.mxu0 0
      %4810 = vmatpush1.bf16.msra.mxu0 %v3838
      %4811 = vmatprep.subr.bf16.mxu0 0
      %4812 = vmatpush1.bf16.msra.mxu0 %v3837
      %4813 = vmatprep.subr.bf16.mxu0 0
      %4814 = vmatpush1.bf16.msra.mxu0 %v3836
      %4815 = vmatprep.subr.bf16.mxu0 0
      %4816 = vmatpush2.bf16.msra.mxu0 %v3851
      %4817 = vmatprep.subr.bf16.mxu0 0
      %4818 = vmatpush2.bf16.msra.mxu0 %v3850
      %4819 = vmatprep.subr.bf16.mxu0 0
      %4820 = vmatpush2.bf16.msra.mxu0 %v3849
      %4821 = vmatprep.subr.bf16.mxu0 0
      %4822 = vmatpush2.bf16.msra.mxu0 %v3848
      %4823 = vmatprep.subr.bf16.mxu0 0
      %4824 = vmatpush2.bf16.msra.mxu0 %v3847
      %4825 = vmatprep.subr.bf16.mxu0 0
      %4826 = vmatpush2.bf16.msra.mxu0 %v3846
      %4827 = vmatprep.subr.bf16.mxu0 0
      %4828 = vmatpush2.bf16.msra.mxu0 %v3845
      %4829 = vmatprep.subr.bf16.mxu0 0
      %4830 = vmatpush2.bf16.msra.mxu0 %v3844
      %4831 = vmatprep.mubr.bf16.mxu0 %v3160
      %4832 = vmatmul.mubr.bf16.gmra.mxu0 %v3000
      %v4833 = vpop.f32.mrf.mxu0
      %v4834 = vadd.f32 %v4545, %v4833
      %v4835 = vpop.f32.mrf.mxu0
      %v4836 = vpop.f32.mrf.mxu0
      %v4837 = vadd.f32 %v4548, %v4836
      %v4838 = vpop.f32.mrf.mxu0
      %4839 = vmatprep.mubr.bf16.mxu0 %v3161
      %4840 = vmatmul.mubr.bf16.gmra.mxu0 %v3001
      %v4841 = vpop.f32.mrf.mxu0
      %v4842 = vadd.f32 %v4553, %v4841
      %v4843 = vpop.f32.mrf.mxu0
      %v4844 = vpop.f32.mrf.mxu0
      %v4845 = vadd.f32 %v4556, %v4844
      %v4846 = vpop.f32.mrf.mxu0
      %4847 = vmatprep.mubr.bf16.mxu0 %v3162
      %4848 = vmatmul.mubr.bf16.gmra.mxu0 %v3002
      %v4849 = vpop.f32.mrf.mxu0
      %v4850 = vadd.f32 %v4561, %v4849
      %v4851 = vpop.f32.mrf.mxu0
      %v4852 = vpop.f32.mrf.mxu0
      %v4853 = vadd.f32 %v4564, %v4852
      %v4854 = vpop.f32.mrf.mxu0
      %4855 = vmatprep.mubr.bf16.mxu0 %v3163
      %4856 = vmatmul.mubr.bf16.gmra.mxu0 %v3003
      %v4857 = vpop.f32.mrf.mxu0
      %v4858 = vadd.f32 %v4569, %v4857
      %v4859 = vpop.f32.mrf.mxu0
      %v4860 = vpop.f32.mrf.mxu0
      %v4861 = vadd.f32 %v4572, %v4860
      %v4862 = vpop.f32.mrf.mxu0
      %4863 = vmatprep.mubr.bf16.mxu0 %v3164
      %4864 = vmatmul.mubr.bf16.gmra.mxu0 %v3004
      %v4865 = vpop.f32.mrf.mxu0
      %v4866 = vadd.f32 %v4577, %v4865
      %v4867 = vpop.f32.mrf.mxu0
      %v4868 = vpop.f32.mrf.mxu0
      %v4869 = vadd.f32 %v4580, %v4868
      %v4870 = vpop.f32.mrf.mxu0
      %4871 = vmatprep.mubr.bf16.mxu0 %v3165
      %4872 = vmatmul.mubr.bf16.gmra.mxu0 %v3005
      %v4873 = vpop.f32.mrf.mxu0
      %v4874 = vadd.f32 %v4585, %v4873
      %v4875 = vpop.f32.mrf.mxu0
      %v4876 = vpop.f32.mrf.mxu0
      %v4877 = vadd.f32 %v4588, %v4876
      %v4878 = vpop.f32.mrf.mxu0
      %4879 = vmatprep.mubr.bf16.mxu0 %v3166
      %4880 = vmatmul.mubr.bf16.gmra.mxu0 %v3006
      %v4881 = vpop.f32.mrf.mxu0
      %v4882 = vadd.f32 %v4593, %v4881
      %v4883 = vpop.f32.mrf.mxu0
      %v4884 = vpop.f32.mrf.mxu0
      %v4885 = vadd.f32 %v4596, %v4884
      %v4886 = vpop.f32.mrf.mxu0
      %4887 = vmatprep.mubr.bf16.mxu0 %v3167
      %4888 = vmatmul.mubr.bf16.gmra.mxu0 %v3007
      %v4889 = vpop.f32.mrf.mxu0
      %v4890 = vadd.f32 %v4601, %v4889
      %v4891 = vpop.f32.mrf.mxu0
      %v4892 = vpop.f32.mrf.mxu0
      %v4893 = vadd.f32 %v4604, %v4892
      %v4894 = vpop.f32.mrf.mxu0
      %4895 = vmatprep.mubr.bf16.mxu0 %v3168
      %4896 = vmatmul.mubr.bf16.gmra.mxu0 %v3008
      %v4897 = vpop.f32.mrf.mxu0
      %v4898 = vadd.f32 %v4609, %v4897
      %v4899 = vpop.f32.mrf.mxu0
      %v4900 = vpop.f32.mrf.mxu0
      %v4901 = vadd.f32 %v4612, %v4900
      %v4902 = vpop.f32.mrf.mxu0
      %4903 = vmatprep.mubr.bf16.mxu0 %v3169
      %4904 = vmatmul.mubr.bf16.gmra.mxu0 %v3009
      %v4905 = vpop.f32.mrf.mxu0
      %v4906 = vadd.f32 %v4617, %v4905
      %v4907 = vpop.f32.mrf.mxu0
      %v4908 = vpop.f32.mrf.mxu0
      %v4909 = vadd.f32 %v4620, %v4908
      %v4910 = vpop.f32.mrf.mxu0
      %4911 = vmatprep.mubr.bf16.mxu0 %v3170
      %4912 = vmatmul.mubr.bf16.gmra.mxu0 %v3010
      %v4913 = vpop.f32.mrf.mxu0
      %v4914 = vadd.f32 %v4625, %v4913
      %v4915 = vpop.f32.mrf.mxu0
      %v4916 = vpop.f32.mrf.mxu0
      %v4917 = vadd.f32 %v4628, %v4916
      %v4918 = vpop.f32.mrf.mxu0
      %4919 = vmatprep.mubr.bf16.mxu0 %v3171
      %4920 = vmatmul.mubr.bf16.gmra.mxu0 %v3011
      %v4921 = vpop.f32.mrf.mxu0
      %v4922 = vadd.f32 %v4633, %v4921
      %v4923 = vpop.f32.mrf.mxu0
      %v4924 = vpop.f32.mrf.mxu0
      %v4925 = vadd.f32 %v4636, %v4924
      %v4926 = vpop.f32.mrf.mxu0
      %4927 = vmatprep.mubr.bf16.mxu0 %v3172
      %4928 = vmatmul.mubr.bf16.gmra.mxu0 %v3012
      %v4929 = vpop.f32.mrf.mxu0
      %v4930 = vadd.f32 %v4641, %v4929
      %v4931 = vpop.f32.mrf.mxu0
      %v4932 = vpop.f32.mrf.mxu0
      %v4933 = vadd.f32 %v4644, %v4932
      %v4934 = vpop.f32.mrf.mxu0
      %4935 = vmatprep.mubr.bf16.mxu0 %v3173
      %4936 = vmatmul.mubr.bf16.gmra.mxu0 %v3013
      %v4937 = vpop.f32.mrf.mxu0
      %v4938 = vadd.f32 %v4649, %v4937
      %v4939 = vpop.f32.mrf.mxu0
      %v4940 = vpop.f32.mrf.mxu0
      %v4941 = vadd.f32 %v4652, %v4940
      %v4942 = vpop.f32.mrf.mxu0
      %4943 = vmatprep.mubr.bf16.mxu0 %v3174
      %4944 = vmatmul.mubr.bf16.gmra.mxu0 %v3014
      %v4945 = vpop.f32.mrf.mxu0
      %v4946 = vadd.f32 %v4657, %v4945
      %v4947 = vpop.f32.mrf.mxu0
      %v4948 = vpop.f32.mrf.mxu0
      %v4949 = vadd.f32 %v4660, %v4948
      %v4950 = vpop.f32.mrf.mxu0
      %4951 = vmatprep.mubr.bf16.mxu0 %v3175
      %4952 = vmatmul.mubr.bf16.gmra.mxu0 %v3015
      %v4953 = vpop.f32.mrf.mxu0
      %v4954 = vadd.f32 %v4665, %v4953
      %v4955 = vpop.f32.mrf.mxu0
      %v4956 = vpop.f32.mrf.mxu0
      %v4957 = vadd.f32 %v4668, %v4956
      %v4958 = vpop.f32.mrf.mxu0
      %4959 = vmatprep.mubr.bf16.mxu0 %v3176
      %4960 = vmatmul.mubr.bf16.gmra.mxu0 %v3016
      %v4961 = vpop.f32.mrf.mxu0
      %v4962 = vadd.f32 %v4673, %v4961
      %v4963 = vpop.f32.mrf.mxu0
      %v4964 = vpop.f32.mrf.mxu0
      %v4965 = vadd.f32 %v4676, %v4964
      %v4966 = vpop.f32.mrf.mxu0
      %4967 = vmatprep.mubr.bf16.mxu0 %v3177
      %4968 = vmatmul.mubr.bf16.gmra.mxu0 %v3017
      %v4969 = vpop.f32.mrf.mxu0
      %v4970 = vadd.f32 %v4681, %v4969
      %v4971 = vpop.f32.mrf.mxu0
      %v4972 = vpop.f32.mrf.mxu0
      %v4973 = vadd.f32 %v4684, %v4972
      %v4974 = vpop.f32.mrf.mxu0
      %4975 = vmatprep.mubr.bf16.mxu0 %v3178
      %4976 = vmatmul.mubr.bf16.gmra.mxu0 %v3018
      %v4977 = vpop.f32.mrf.mxu0
      %v4978 = vadd.f32 %v4689, %v4977
      %v4979 = vpop.f32.mrf.mxu0
      %v4980 = vpop.f32.mrf.mxu0
      %v4981 = vadd.f32 %v4692, %v4980
      %v4982 = vpop.f32.mrf.mxu0
      %4983 = vmatprep.mubr.bf16.mxu0 %v3179
      %4984 = vmatmul.mubr.bf16.gmra.mxu0 %v3019
      %v4985 = vpop.f32.mrf.mxu0
      %v4986 = vadd.f32 %v4697, %v4985
      %v4987 = vpop.f32.mrf.mxu0
      %v4988 = vpop.f32.mrf.mxu0
      %v4989 = vadd.f32 %v4700, %v4988
      %v4990 = vpop.f32.mrf.mxu0
      %4991 = vmatprep.mubr.bf16.mxu0 %v3180
      %4992 = vmatmul.mubr.bf16.gmra.mxu0 %v3020
      %v4993 = vpop.f32.mrf.mxu0
      %v4994 = vadd.f32 %v4705, %v4993
      %v4995 = vpop.f32.mrf.mxu0
      %v4996 = vpop.f32.mrf.mxu0
      %v4997 = vadd.f32 %v4708, %v4996
      %v4998 = vpop.f32.mrf.mxu0
      %4999 = vmatprep.mubr.bf16.mxu0 %v3181
      %5000 = vmatmul.mubr.bf16.gmra.mxu0 %v3021
      %v5001 = vpop.f32.mrf.mxu0
      %v5002 = vadd.f32 %v4713, %v5001
      %v5003 = vpop.f32.mrf.mxu0
      %v5004 = vpop.f32.mrf.mxu0
      %v5005 = vadd.f32 %v4716, %v5004
      %v5006 = vpop.f32.mrf.mxu0
      %5007 = vmatprep.mubr.bf16.mxu0 %v3182
      %5008 = vmatmul.mubr.bf16.gmra.mxu0 %v3022
      %v5009 = vpop.f32.mrf.mxu0
      %v5010 = vadd.f32 %v4721, %v5009
      %v5011 = vpop.f32.mrf.mxu0
      %v5012 = vpop.f32.mrf.mxu0
      %v5013 = vadd.f32 %v4724, %v5012
      %v5014 = vpop.f32.mrf.mxu0
      %5015 = vmatprep.mubr.bf16.mxu0 %v3183
      %5016 = vmatmul.mubr.bf16.gmra.mxu0 %v3023
      %v5017 = vpop.f32.mrf.mxu0
      %v5018 = vadd.f32 %v4729, %v5017
      %v5019 = vpop.f32.mrf.mxu0
      %v5020 = vpop.f32.mrf.mxu0
      %v5021 = vadd.f32 %v4732, %v5020
      %v5022 = vpop.f32.mrf.mxu0
      %5023 = vmatprep.mubr.bf16.mxu0 %v3184
      %5024 = vmatmul.mubr.bf16.gmra.mxu0 %v3024
      %v5025 = vpop.f32.mrf.mxu0
      %v5026 = vadd.f32 %v4737, %v5025
      %v5027 = vpop.f32.mrf.mxu0
      %v5028 = vpop.f32.mrf.mxu0
      %v5029 = vadd.f32 %v4740, %v5028
      %v5030 = vpop.f32.mrf.mxu0
      %5031 = vmatprep.mubr.bf16.mxu0 %v3185
      %5032 = vmatmul.mubr.bf16.gmra.mxu0 %v3025
      %v5033 = vpop.f32.mrf.mxu0
      %v5034 = vadd.f32 %v4745, %v5033
      %v5035 = vpop.f32.mrf.mxu0
      %v5036 = vpop.f32.mrf.mxu0
      %v5037 = vadd.f32 %v4748, %v5036
      %v5038 = vpop.f32.mrf.mxu0
      %5039 = vmatprep.mubr.bf16.mxu0 %v3186
      %5040 = vmatmul.mubr.bf16.gmra.mxu0 %v3026
      %v5041 = vpop.f32.mrf.mxu0
      %v5042 = vadd.f32 %v4753, %v5041
      %v5043 = vpop.f32.mrf.mxu0
      %v5044 = vpop.f32.mrf.mxu0
      %v5045 = vadd.f32 %v4756, %v5044
      %v5046 = vpop.f32.mrf.mxu0
      %5047 = vmatprep.mubr.bf16.mxu0 %v3187
      %5048 = vmatmul.mubr.bf16.gmra.mxu0 %v3027
      %v5049 = vpop.f32.mrf.mxu0
      %v5050 = vadd.f32 %v4761, %v5049
      %v5051 = vpop.f32.mrf.mxu0
      %v5052 = vpop.f32.mrf.mxu0
      %v5053 = vadd.f32 %v4764, %v5052
      %v5054 = vpop.f32.mrf.mxu0
      %5055 = vmatprep.mubr.bf16.mxu0 %v3188
      %5056 = vmatmul.mubr.bf16.gmra.mxu0 %v3028
      %v5057 = vpop.f32.mrf.mxu0
      %v5058 = vadd.f32 %v4769, %v5057
      %v5059 = vpop.f32.mrf.mxu0
      %v5060 = vpop.f32.mrf.mxu0
      %v5061 = vadd.f32 %v4772, %v5060
      %v5062 = vpop.f32.mrf.mxu0
      %5063 = vmatprep.mubr.bf16.mxu0 %v3189
      %5064 = vmatmul.mubr.bf16.gmra.mxu0 %v3029
      %v5065 = vpop.f32.mrf.mxu0
      %v5066 = vadd.f32 %v4777, %v5065
      %v5067 = vpop.f32.mrf.mxu0
      %v5068 = vpop.f32.mrf.mxu0
      %v5069 = vadd.f32 %v4780, %v5068
      %v5070 = vpop.f32.mrf.mxu0
      %5071 = vmatprep.mubr.bf16.mxu0 %v3158
      %5072 = vmatmul.mubr.bf16.gmra.mxu0 %v2998
      %v5073 = vpop.f32.mrf.mxu0
      %v5074 = vadd.f32 %v4785, %v5073
      %v5075 = vpop.f32.mrf.mxu0
      %v5076 = vpop.f32.mrf.mxu0
      %v5077 = vadd.f32 %v4788, %v5076
      %v5078 = vpop.f32.mrf.mxu0
      %5079 = vmatprep.mubr.bf16.mxu0 %v3159
      %5080 = vmatmul.mubr.bf16.gmra.mxu0 %v2999
      %v5081 = vpop.f32.mrf.mxu0
      %v5082 = vadd.f32 %v4793, %v5081
      %v5083 = vpop.f32.mrf.mxu0
      %v5084 = vpop.f32.mrf.mxu0
      %v5085 = vadd.f32 %v4796, %v5084
      %v5086 = vpop.f32.mrf.mxu0
      %5087 = vdwg.mxu0
      %5088 = vmatprep.subr.bf16.mxu0 0
      %5089 = vmatpush1.bf16.msra.mxu0 %v3859
      %5090 = vmatprep.subr.bf16.mxu0 0
      %5091 = vmatpush1.bf16.msra.mxu0 %v3858
      %5092 = vmatprep.subr.bf16.mxu0 0
      %5093 = vmatpush1.bf16.msra.mxu0 %v3857
      %5094 = vmatprep.subr.bf16.mxu0 0
      %5095 = vmatpush1.bf16.msra.mxu0 %v3856
      %5096 = vmatprep.subr.bf16.mxu0 0
      %5097 = vmatpush1.bf16.msra.mxu0 %v3855
      %5098 = vmatprep.subr.bf16.mxu0 0
      %5099 = vmatpush1.bf16.msra.mxu0 %v3854
      %5100 = vmatprep.subr.bf16.mxu0 0
      %5101 = vmatpush1.bf16.msra.mxu0 %v3853
      %5102 = vmatprep.subr.bf16.mxu0 0
      %5103 = vmatpush1.bf16.msra.mxu0 %v3852
      %5104 = vmatprep.subr.bf16.mxu0 0
      %5105 = vmatpush2.bf16.msra.mxu0 0
      %5106 = vmatprep.subr.bf16.mxu0 0
      %5107 = vmatpush2.bf16.msra.mxu0 0
      %5108 = vmatprep.subr.bf16.mxu0 0
      %5109 = vmatpush2.bf16.msra.mxu0 0
      %5110 = vmatprep.subr.bf16.mxu0 0
      %5111 = vmatpush2.bf16.msra.mxu0 0
      %5112 = vmatprep.subr.bf16.mxu0 0
      %5113 = vmatpush2.bf16.msra.mxu0 0
      %5114 = vmatprep.subr.bf16.mxu0 0
      %5115 = vmatpush2.bf16.msra.mxu0 0
      %5116 = vmatprep.subr.bf16.mxu0 0
      %5117 = vmatpush2.bf16.msra.mxu0 0
      %5118 = vmatprep.subr.bf16.mxu0 0
      %5119 = vmatpush2.bf16.msra.mxu0 0
      %5120 = vmatprep.mubr.bf16.mxu0 0
      %5121 = vmatmul.mubr.bf16.gmra.mxu0 %v3320
      %v5122 = vpop.f32.mrf.mxu0
      %v5123 = vadd.f32 %v4834, %v5122
      %v5124 = vpop.f32.mrf.mxu0
      %v5125 = vpop.f32.mrf.mxu0
      %v5126 = vadd.f32 %v4837, %v5125
      %v5127 = vpop.f32.mrf.mxu0
      %5128 = vmatprep.mubr.bf16.mxu0 0
      %5129 = vmatmul.mubr.bf16.gmra.mxu0 %v3321
      %v5130 = vpop.f32.mrf.mxu0
      %v5131 = vadd.f32 %v4842, %v5130
      %v5132 = vpop.f32.mrf.mxu0
      %v5133 = vpop.f32.mrf.mxu0
      %v5134 = vadd.f32 %v4845, %v5133
      %v5135 = vpop.f32.mrf.mxu0
      %5136 = vmatprep.mubr.bf16.mxu0 0
      %5137 = vmatmul.mubr.bf16.gmra.mxu0 %v3322
      %v5138 = vpop.f32.mrf.mxu0
      %v5139 = vadd.f32 %v4850, %v5138
      %v5140 = vpop.f32.mrf.mxu0
      %v5141 = vpop.f32.mrf.mxu0
      %v5142 = vadd.f32 %v4853, %v5141
      %v5143 = vpop.f32.mrf.mxu0
      %5144 = vmatprep.mubr.bf16.mxu0 0
      %5145 = vmatmul.mubr.bf16.gmra.mxu0 %v3323
      %v5146 = vpop.f32.mrf.mxu0
      %v5147 = vadd.f32 %v4858, %v5146
      %v5148 = vpop.f32.mrf.mxu0
      %v5149 = vpop.f32.mrf.mxu0
      %v5150 = vadd.f32 %v4861, %v5149
      %v5151 = vpop.f32.mrf.mxu0
      %5152 = vmatprep.mubr.bf16.mxu0 0
      %5153 = vmatmul.mubr.bf16.gmra.mxu0 %v3324
      %v5154 = vpop.f32.mrf.mxu0
      %v5155 = vadd.f32 %v4866, %v5154
      %v5156 = vpop.f32.mrf.mxu0
      %v5157 = vpop.f32.mrf.mxu0
      %v5158 = vadd.f32 %v4869, %v5157
      %v5159 = vpop.f32.mrf.mxu0
      %5160 = vmatprep.mubr.bf16.mxu0 0
      %5161 = vmatmul.mubr.bf16.gmra.mxu0 %v3325
      %v5162 = vpop.f32.mrf.mxu0
      %v5163 = vadd.f32 %v4874, %v5162
      %v5164 = vpop.f32.mrf.mxu0
      %v5165 = vpop.f32.mrf.mxu0
      %v5166 = vadd.f32 %v4877, %v5165
      %v5167 = vpop.f32.mrf.mxu0
      %5168 = vmatprep.mubr.bf16.mxu0 0
      %5169 = vmatmul.mubr.bf16.gmra.mxu0 %v3326
      %v5170 = vpop.f32.mrf.mxu0
      %v5171 = vadd.f32 %v4882, %v5170
      %v5172 = vpop.f32.mrf.mxu0
      %v5173 = vpop.f32.mrf.mxu0
      %v5174 = vadd.f32 %v4885, %v5173
      %v5175 = vpop.f32.mrf.mxu0
      %5176 = vmatprep.mubr.bf16.mxu0 0
      %5177 = vmatmul.mubr.bf16.gmra.mxu0 %v3327
      %v5178 = vpop.f32.mrf.mxu0
      %v5179 = vadd.f32 %v4890, %v5178
      %v5180 = vpop.f32.mrf.mxu0
      %v5181 = vpop.f32.mrf.mxu0
      %v5182 = vadd.f32 %v4893, %v5181
      %v5183 = vpop.f32.mrf.mxu0
      %5184 = vmatprep.mubr.bf16.mxu0 0
      %5185 = vmatmul.mubr.bf16.gmra.mxu0 %v3328
      %v5186 = vpop.f32.mrf.mxu0
      %v5187 = vadd.f32 %v4898, %v5186
      %v5188 = vpop.f32.mrf.mxu0
      %v5189 = vpop.f32.mrf.mxu0
      %v5190 = vadd.f32 %v4901, %v5189
      %v5191 = vpop.f32.mrf.mxu0
      %5192 = vmatprep.mubr.bf16.mxu0 0
      %5193 = vmatmul.mubr.bf16.gmra.mxu0 %v3329
      %v5194 = vpop.f32.mrf.mxu0
      %v5195 = vadd.f32 %v4906, %v5194
      %v5196 = vpop.f32.mrf.mxu0
      %v5197 = vpop.f32.mrf.mxu0
      %v5198 = vadd.f32 %v4909, %v5197
      %v5199 = vpop.f32.mrf.mxu0
      %5200 = vmatprep.mubr.bf16.mxu0 0
      %5201 = vmatmul.mubr.bf16.gmra.mxu0 %v3330
      %v5202 = vpop.f32.mrf.mxu0
      %v5203 = vadd.f32 %v4914, %v5202
      %v5204 = vpop.f32.mrf.mxu0
      %v5205 = vpop.f32.mrf.mxu0
      %v5206 = vadd.f32 %v4917, %v5205
      %v5207 = vpop.f32.mrf.mxu0
      %5208 = vmatprep.mubr.bf16.mxu0 0
      %5209 = vmatmul.mubr.bf16.gmra.mxu0 %v3331
      %v5210 = vpop.f32.mrf.mxu0
      %v5211 = vadd.f32 %v4922, %v5210
      %v5212 = vpop.f32.mrf.mxu0
      %v5213 = vpop.f32.mrf.mxu0
      %v5214 = vadd.f32 %v4925, %v5213
      %v5215 = vpop.f32.mrf.mxu0
      %5216 = vmatprep.mubr.bf16.mxu0 0
      %5217 = vmatmul.mubr.bf16.gmra.mxu0 %v3332
      %v5218 = vpop.f32.mrf.mxu0
      %v5219 = vadd.f32 %v4930, %v5218
      %v5220 = vpop.f32.mrf.mxu0
      %v5221 = vpop.f32.mrf.mxu0
      %v5222 = vadd.f32 %v4933, %v5221
      %v5223 = vpop.f32.mrf.mxu0
      %5224 = vmatprep.mubr.bf16.mxu0 0
      %5225 = vmatmul.mubr.bf16.gmra.mxu0 %v3333
      %v5226 = vpop.f32.mrf.mxu0
      %v5227 = vadd.f32 %v4938, %v5226
      %v5228 = vpop.f32.mrf.mxu0
      %v5229 = vpop.f32.mrf.mxu0
      %v5230 = vadd.f32 %v4941, %v5229
      %v5231 = vpop.f32.mrf.mxu0
      %5232 = vmatprep.mubr.bf16.mxu0 0
      %5233 = vmatmul.mubr.bf16.gmra.mxu0 %v3334
      %v5234 = vpop.f32.mrf.mxu0
      %v5235 = vadd.f32 %v4946, %v5234
      %v5236 = vpop.f32.mrf.mxu0
      %v5237 = vpop.f32.mrf.mxu0
      %v5238 = vadd.f32 %v4949, %v5237
      %v5239 = vpop.f32.mrf.mxu0
      %5240 = vmatprep.mubr.bf16.mxu0 0
      %5241 = vmatmul.mubr.bf16.gmra.mxu0 %v3335
      %v5242 = vpop.f32.mrf.mxu0
      %v5243 = vadd.f32 %v4954, %v5242
      %v5244 = vpop.f32.mrf.mxu0
      %v5245 = vpop.f32.mrf.mxu0
      %v5246 = vadd.f32 %v4957, %v5245
      %v5247 = vpop.f32.mrf.mxu0
      %5248 = vmatprep.mubr.bf16.mxu0 0
      %5249 = vmatmul.mubr.bf16.gmra.mxu0 %v3336
      %v5250 = vpop.f32.mrf.mxu0
      %v5251 = vadd.f32 %v4962, %v5250
      %v5252 = vpop.f32.mrf.mxu0
      %v5253 = vpop.f32.mrf.mxu0
      %v5254 = vadd.f32 %v4965, %v5253
      %v5255 = vpop.f32.mrf.mxu0
      %5256 = vmatprep.mubr.bf16.mxu0 0
      %5257 = vmatmul.mubr.bf16.gmra.mxu0 %v3337
      %v5258 = vpop.f32.mrf.mxu0
      %v5259 = vadd.f32 %v4970, %v5258
      %v5260 = vpop.f32.mrf.mxu0
      %v5261 = vpop.f32.mrf.mxu0
      %v5262 = vadd.f32 %v4973, %v5261
      %v5263 = vpop.f32.mrf.mxu0
      %5264 = vmatprep.mubr.bf16.mxu0 0
      %5265 = vmatmul.mubr.bf16.gmra.mxu0 %v3338
      %v5266 = vpop.f32.mrf.mxu0
      %v5267 = vadd.f32 %v4978, %v5266
      %v5268 = vpop.f32.mrf.mxu0
      %v5269 = vpop.f32.mrf.mxu0
      %v5270 = vadd.f32 %v4981, %v5269
      %v5271 = vpop.f32.mrf.mxu0
      %5272 = vmatprep.mubr.bf16.mxu0 0
      %5273 = vmatmul.mubr.bf16.gmra.mxu0 %v3339
      %v5274 = vpop.f32.mrf.mxu0
      %v5275 = vadd.f32 %v4986, %v5274
      %v5276 = vpop.f32.mrf.mxu0
      %v5277 = vpop.f32.mrf.mxu0
      %v5278 = vadd.f32 %v4989, %v5277
      %v5279 = vpop.f32.mrf.mxu0
      %5280 = vmatprep.mubr.bf16.mxu0 0
      %5281 = vmatmul.mubr.bf16.gmra.mxu0 %v3340
      %v5282 = vpop.f32.mrf.mxu0
      %v5283 = vadd.f32 %v4994, %v5282
      %v5284 = vpop.f32.mrf.mxu0
      %v5285 = vpop.f32.mrf.mxu0
      %v5286 = vadd.f32 %v4997, %v5285
      %v5287 = vpop.f32.mrf.mxu0
      %5288 = vmatprep.mubr.bf16.mxu0 0
      %5289 = vmatmul.mubr.bf16.gmra.mxu0 %v3341
      %v5290 = vpop.f32.mrf.mxu0
      %v5291 = vadd.f32 %v5002, %v5290
      %v5292 = vpop.f32.mrf.mxu0
      %v5293 = vpop.f32.mrf.mxu0
      %v5294 = vadd.f32 %v5005, %v5293
      %v5295 = vpop.f32.mrf.mxu0
      %5296 = vmatprep.mubr.bf16.mxu0 0
      %5297 = vmatmul.mubr.bf16.gmra.mxu0 %v3342
      %v5298 = vpop.f32.mrf.mxu0
      %v5299 = vadd.f32 %v5010, %v5298
      %v5300 = vpop.f32.mrf.mxu0
      %v5301 = vpop.f32.mrf.mxu0
      %v5302 = vadd.f32 %v5013, %v5301
      %v5303 = vpop.f32.mrf.mxu0
      %5304 = vmatprep.mubr.bf16.mxu0 0
      %5305 = vmatmul.mubr.bf16.gmra.mxu0 %v3343
      %v5306 = vpop.f32.mrf.mxu0
      %v5307 = vadd.f32 %v5018, %v5306
      %v5308 = vpop.f32.mrf.mxu0
      %v5309 = vpop.f32.mrf.mxu0
      %v5310 = vadd.f32 %v5021, %v5309
      %v5311 = vpop.f32.mrf.mxu0
      %5312 = vmatprep.mubr.bf16.mxu0 0
      %5313 = vmatmul.mubr.bf16.gmra.mxu0 %v3344
      %v5314 = vpop.f32.mrf.mxu0
      %v5315 = vadd.f32 %v5026, %v5314
      %v5316 = vpop.f32.mrf.mxu0
      %v5317 = vpop.f32.mrf.mxu0
      %v5318 = vadd.f32 %v5029, %v5317
      %v5319 = vpop.f32.mrf.mxu0
      %5320 = vmatprep.mubr.bf16.mxu0 0
      %5321 = vmatmul.mubr.bf16.gmra.mxu0 %v3345
      %v5322 = vpop.f32.mrf.mxu0
      %v5323 = vadd.f32 %v5034, %v5322
      %v5324 = vpop.f32.mrf.mxu0
      %v5325 = vpop.f32.mrf.mxu0
      %v5326 = vadd.f32 %v5037, %v5325
      %v5327 = vpop.f32.mrf.mxu0
      %5328 = vmatprep.mubr.bf16.mxu0 0
      %5329 = vmatmul.mubr.bf16.gmra.mxu0 %v3346
      %v5330 = vpop.f32.mrf.mxu0
      %v5331 = vadd.f32 %v5042, %v5330
      %v5332 = vpop.f32.mrf.mxu0
      %v5333 = vpop.f32.mrf.mxu0
      %v5334 = vadd.f32 %v5045, %v5333
      %v5335 = vpop.f32.mrf.mxu0
      %5336 = vmatprep.mubr.bf16.mxu0 0
      %5337 = vmatmul.mubr.bf16.gmra.mxu0 %v3347
      %v5338 = vpop.f32.mrf.mxu0
      %v5339 = vadd.f32 %v5050, %v5338
      %v5340 = vpop.f32.mrf.mxu0
      %v5341 = vpop.f32.mrf.mxu0
      %v5342 = vadd.f32 %v5053, %v5341
      %v5343 = vpop.f32.mrf.mxu0
      %5344 = vmatprep.mubr.bf16.mxu0 0
      %5345 = vmatmul.mubr.bf16.gmra.mxu0 %v3348
      %v5346 = vpop.f32.mrf.mxu0
      %v5347 = vadd.f32 %v5058, %v5346
      %v5348 = vpop.f32.mrf.mxu0
      %v5349 = vpop.f32.mrf.mxu0
      %v5350 = vadd.f32 %v5061, %v5349
      %v5351 = vpop.f32.mrf.mxu0
      %5352 = vmatprep.mubr.bf16.mxu0 0
      %5353 = vmatmul.mubr.bf16.gmra.mxu0 %v3349
      %v5354 = vpop.f32.mrf.mxu0
      %v5355 = vadd.f32 %v5066, %v5354
      %v5356 = vpop.f32.mrf.mxu0
      %v5357 = vpop.f32.mrf.mxu0
      %v5358 = vadd.f32 %v5069, %v5357
      %v5359 = vpop.f32.mrf.mxu0
      %5360 = vmatprep.mubr.bf16.mxu0 0
      %5361 = vmatmul.mubr.bf16.gmra.mxu0 %v3318
      %v5362 = vpop.f32.mrf.mxu0
      %v5363 = vadd.f32 %v5074, %v5362
      %v5364 = vpop.f32.mrf.mxu0
      %v5365 = vpop.f32.mrf.mxu0
      %v5366 = vadd.f32 %v5077, %v5365
      %v5367 = vpop.f32.mrf.mxu0
      %5368 = vmatprep.mubr.bf16.mxu0 0
      %5369 = vmatmul.mubr.bf16.gmra.mxu0 %v3319
      %v5370 = vpop.f32.mrf.mxu0
      %v5371 = vadd.f32 %v5082, %v5370
      %v5372 = vpop.f32.mrf.mxu0
      %v5373 = vpop.f32.mrf.mxu0
      %v5374 = vadd.f32 %v5085, %v5373
      %v5375 = vpop.f32.mrf.mxu0
      %5376 = vdwg.mxu0
      %v5377 = vpack.c.bf16 %v5126, %v5123
      %v5378 = vpack.c.bf16 %v5134, %v5131
      %v5379 = vpack.c.bf16 %v5142, %v5139
      %v5380 = vpack.c.bf16 %v5150, %v5147
      %v5381 = vpack.c.bf16 %v5158, %v5155
      %v5382 = vpack.c.bf16 %v5166, %v5163
      %v5383 = vpack.c.bf16 %v5174, %v5171
      %v5384 = vpack.c.bf16 %v5182, %v5179
      %v5385 = vpack.c.bf16 %v5190, %v5187
      %v5386 = vpack.c.bf16 %v5198, %v5195
      %v5387 = vpack.c.bf16 %v5206, %v5203
      %v5388 = vpack.c.bf16 %v5214, %v5211
      %v5389 = vpack.c.bf16 %v5222, %v5219
      %v5390 = vpack.c.bf16 %v5230, %v5227
      %v5391 = vpack.c.bf16 %v5238, %v5235
      %v5392 = vpack.c.bf16 %v5246, %v5243
      %v5393 = vpack.c.bf16 %v5254, %v5251
      %v5394 = vpack.c.bf16 %v5262, %v5259
      %v5395 = vpack.c.bf16 %v5270, %v5267
      %v5396 = vpack.c.bf16 %v5278, %v5275
      %v5397 = vpack.c.bf16 %v5286, %v5283
      %v5398 = vpack.c.bf16 %v5294, %v5291
      %v5399 = vpack.c.bf16 %v5302, %v5299
      %v5400 = vpack.c.bf16 %v5310, %v5307
      %v5401 = vpack.c.bf16 %v5318, %v5315
      %v5402 = vpack.c.bf16 %v5326, %v5323
      %v5403 = vpack.c.bf16 %v5334, %v5331
      %v5404 = vpack.c.bf16 %v5342, %v5339
      %v5405 = vpack.c.bf16 %v5350, %v5347
      %v5406 = vpack.c.bf16 %v5358, %v5355
      %v5407 = vpack.c.bf16 %v5366, %v5363
      %v5408 = vpack.c.bf16 %v5374, %v5371
      %v5441 = vunpack.c.l.b16 %v5377
      %v5442 = vunpack.c.h.b16 %v5377
      %v5443 = vunpack.c.l.b16 %v5378
      %v5444 = vunpack.c.h.b16 %v5378
      %v5445 = vunpack.c.l.b16 %v5379
      %v5446 = vunpack.c.h.b16 %v5379
      %v5447 = vunpack.c.l.b16 %v5380
      %v5448 = vunpack.c.h.b16 %v5380
      %v5449 = vunpack.c.l.b16 %v5381
      %v5450 = vunpack.c.h.b16 %v5381
      %v5451 = vunpack.c.l.b16 %v5382
      %v5452 = vunpack.c.h.b16 %v5382
      %v5453 = vunpack.c.l.b16 %v5383
      %v5454 = vunpack.c.h.b16 %v5383
      %v5455 = vunpack.c.l.b16 %v5384
      %v5456 = vunpack.c.h.b16 %v5384
      %v5457 = vunpack.c.l.b16 %v5385
      %v5458 = vunpack.c.h.b16 %v5385
      %v5459 = vunpack.c.l.b16 %v5386
      %v5460 = vunpack.c.h.b16 %v5386
      %v5461 = vunpack.c.l.b16 %v5387
      %v5462 = vunpack.c.h.b16 %v5387
      %v5463 = vunpack.c.l.b16 %v5388
      %v5464 = vunpack.c.h.b16 %v5388
      %v5465 = vunpack.c.l.b16 %v5389
      %v5466 = vunpack.c.h.b16 %v5389
      %v5467 = vunpack.c.l.b16 %v5390
      %v5468 = vunpack.c.h.b16 %v5390
      %v5469 = vunpack.c.l.b16 %v5391
      %v5470 = vunpack.c.h.b16 %v5391
      %v5471 = vunpack.c.l.b16 %v5392
      %v5472 = vunpack.c.h.b16 %v5392
      %v5473 = vunpack.c.l.b16 %v5393
      %v5474 = vunpack.c.h.b16 %v5393
      %v5475 = vunpack.c.l.b16 %v5394
      %v5476 = vunpack.c.h.b16 %v5394
      %v5477 = vunpack.c.l.b16 %v5395
      %v5478 = vunpack.c.h.b16 %v5395
      %v5479 = vunpack.c.l.b16 %v5396
      %v5480 = vunpack.c.h.b16 %v5396
      %v5481 = vunpack.c.l.b16 %v5397
      %v5482 = vunpack.c.h.b16 %v5397
      %v5483 = vunpack.c.l.b16 %v5398
      %v5484 = vunpack.c.h.b16 %v5398
      %v5485 = vunpack.c.l.b16 %v5399
      %v5486 = vunpack.c.h.b16 %v5399
      %v5487 = vunpack.c.l.b16 %v5400
      %v5488 = vunpack.c.h.b16 %v5400
      %v5489 = vunpack.c.l.b16 %v5401
      %v5490 = vunpack.c.h.b16 %v5401
      %v5491 = vunpack.c.l.b16 %v5402
      %v5492 = vunpack.c.h.b16 %v5402
      %v5493 = vunpack.c.l.b16 %v5403
      %v5494 = vunpack.c.h.b16 %v5403
      %v5495 = vunpack.c.l.b16 %v5404
      %v5496 = vunpack.c.h.b16 %v5404
      %v5497 = vunpack.c.l.b16 %v5405
      %v5498 = vunpack.c.h.b16 %v5405
      %v5499 = vunpack.c.l.b16 %v5406
      %v5500 = vunpack.c.h.b16 %v5406
      %v5501 = vunpack.c.l.b16 %v5407
      %v5502 = vunpack.c.h.b16 %v5407
      %v5503 = vunpack.c.l.b16 %v5408
      %v5504 = vunpack.c.h.b16 %v5408
      %v5505 = vpack.c.b16 %v5441, %v5441
      %v5506 = vpack.c.b16 %v5442, %v5442
      %v5507 = vpack.c.b16 %v5443, %v5443
      %v5508 = vpack.c.b16 %v5444, %v5444
      %v5509 = vpack.c.b16 %v5445, %v5445
      %v5510 = vpack.c.b16 %v5446, %v5446
      %v5511 = vpack.c.b16 %v5447, %v5447
      %v5512 = vpack.c.b16 %v5448, %v5448
      %v5513 = vpack.c.b16 %v5449, %v5449
      %v5514 = vpack.c.b16 %v5450, %v5450
      %v5515 = vpack.c.b16 %v5451, %v5451
      %v5516 = vpack.c.b16 %v5452, %v5452
      %v5517 = vpack.c.b16 %v5453, %v5453
      %v5518 = vpack.c.b16 %v5454, %v5454
      %v5519 = vpack.c.b16 %v5455, %v5455
      %v5520 = vpack.c.b16 %v5456, %v5456
      %v5521 = vpack.c.b16 %v5457, %v5457
      %v5522 = vpack.c.b16 %v5458, %v5458
      %v5523 = vpack.c.b16 %v5459, %v5459
      %v5524 = vpack.c.b16 %v5460, %v5460
      %v5525 = vpack.c.b16 %v5461, %v5461
      %v5526 = vpack.c.b16 %v5462, %v5462
      %v5527 = vpack.c.b16 %v5463, %v5463
      %v5528 = vpack.c.b16 %v5464, %v5464
      %v5529 = vpack.c.b16 %v5465, %v5465
      %v5530 = vpack.c.b16 %v5466, %v5466
      %v5531 = vpack.c.b16 %v5467, %v5467
      %v5532 = vpack.c.b16 %v5468, %v5468
      %v5533 = vpack.c.b16 %v5469, %v5469
      %v5534 = vpack.c.b16 %v5470, %v5470
      %v5535 = vpack.c.b16 %v5471, %v5471
      %v5536 = vpack.c.b16 %v5472, %v5472
      %v5537 = vpack.c.b16 %v5473, %v5473
      %v5538 = vpack.c.b16 %v5474, %v5474
      %v5539 = vpack.c.b16 %v5475, %v5475
      %v5540 = vpack.c.b16 %v5476, %v5476
      %v5541 = vpack.c.b16 %v5477, %v5477
      %v5542 = vpack.c.b16 %v5478, %v5478
      %v5543 = vpack.c.b16 %v5479, %v5479
      %v5544 = vpack.c.b16 %v5480, %v5480
      %v5545 = vpack.c.b16 %v5481, %v5481
      %v5546 = vpack.c.b16 %v5482, %v5482
      %v5547 = vpack.c.b16 %v5483, %v5483
      %v5548 = vpack.c.b16 %v5484, %v5484
      %v5549 = vpack.c.b16 %v5485, %v5485
      %v5550 = vpack.c.b16 %v5486, %v5486
      %v5551 = vpack.c.b16 %v5487, %v5487
      %v5552 = vpack.c.b16 %v5488, %v5488
      %v5553 = vpack.c.b16 %v5489, %v5489
      %v5554 = vpack.c.b16 %v5490, %v5490
      %v5555 = vpack.c.b16 %v5491, %v5491
      %v5556 = vpack.c.b16 %v5492, %v5492
      %v5557 = vpack.c.b16 %v5493, %v5493
      %v5558 = vpack.c.b16 %v5494, %v5494
      %v5559 = vpack.c.b16 %v5495, %v5495
      %v5560 = vpack.c.b16 %v5496, %v5496
      %v5561 = vpack.c.b16 %v5497, %v5497
      %v5562 = vpack.c.b16 %v5498, %v5498
      %v5563 = vpack.c.b16 %v5499, %v5499
      %v5564 = vpack.c.b16 %v5500, %v5500
      %v5565 = vpack.c.b16 %v5501, %v5501
      %v5566 = vpack.c.b16 %v5502, %v5502
      %v5567 = vpack.c.b16 %v5503, %v5503
      %v5568 = vpack.c.b16 %v5504, %v5504
      %5633 = vst [vmem:[%s226] sm:$0xf] %v5505
      %5634 = vst [vmem:[%s226 + $0x4] sm:$0xf] %v5506
      %5635 = vst [vmem:[%s226 + $0x8] sm:$0xf] %v5507
      %5636 = vst [vmem:[%s226 + $0xc] sm:$0xf] %v5508
      %5637 = vst [vmem:[%s226 + $0x10] sm:$0xf] %v5509
      %5638 = vst [vmem:[%s226 + $0x14] sm:$0xf] %v5510
      %5639 = vst [vmem:[%s226 + $0x18] sm:$0xf] %v5511
      %5640 = vst [vmem:[%s226 + $0x1c] sm:$0xf] %v5512
      %5641 = vst [vmem:[%s226 + $0x20] sm:$0xf] %v5513
      %5642 = vst [vmem:[%s226 + $0x24] sm:$0xf] %v5514
      %5643 = vst [vmem:[%s226 + $0x28] sm:$0xf] %v5515
      %5644 = vst [vmem:[%s226 + $0x2c] sm:$0xf] %v5516
      %5645 = vst [vmem:[%s226 + $0x30] sm:$0xf] %v5517
      %5646 = vst [vmem:[%s226 + $0x34] sm:$0xf] %v5518
      %5647 = vst [vmem:[%s226 + $0x38] sm:$0xf] %v5519
      %5648 = vst [vmem:[%s226 + $0x3c] sm:$0xf] %v5520
      %5649 = vst [vmem:[%s226 + $0x40] sm:$0xf] %v5521
      %5650 = vst [vmem:[%s226 + $0x44] sm:$0xf] %v5522
      %5651 = vst [vmem:[%s226 + $0x48] sm:$0xf] %v5523
      %5652 = vst [vmem:[%s226 + $0x4c] sm:$0xf] %v5524
      %5653 = vst [vmem:[%s226 + $0x50] sm:$0xf] %v5525
      %5654 = vst [vmem:[%s226 + $0x54] sm:$0xf] %v5526
      %5655 = vst [vmem:[%s226 + $0x58] sm:$0xf] %v5527
      %5656 = vst [vmem:[%s226 + $0x5c] sm:$0xf] %v5528
      %5657 = vst [vmem:[%s226 + $0x60] sm:$0xf] %v5529
      %5658 = vst [vmem:[%s226 + $0x64] sm:$0xf] %v5530
      %5659 = vst [vmem:[%s226 + $0x68] sm:$0xf] %v5531
      %5660 = vst [vmem:[%s226 + $0x6c] sm:$0xf] %v5532
      %5661 = vst [vmem:[%s226 + $0x70] sm:$0xf] %v5533
      %5662 = vst [vmem:[%s226 + $0x74] sm:$0xf] %v5534
      %5663 = vst [vmem:[%s226 + $0x78] sm:$0xf] %v5535
      %5664 = vst [vmem:[%s226 + $0x7c] sm:$0xf] %v5536
      %5665 = vst [vmem:[%s226 + $0x80] sm:$0xf] %v5537
      %5666 = vst [vmem:[%s226 + $0x84] sm:$0xf] %v5538
      %5667 = vst [vmem:[%s226 + $0x88] sm:$0xf] %v5539
      %5668 = vst [vmem:[%s226 + $0x8c] sm:$0xf] %v5540
      %5669 = vst [vmem:[%s226 + $0x90] sm:$0xf] %v5541
      %5670 = vst [vmem:[%s226 + $0x94] sm:$0xf] %v5542
      %5671 = vst [vmem:[%s226 + $0x98] sm:$0xf] %v5543
      %5672 = vst [vmem:[%s226 + $0x9c] sm:$0xf] %v5544
      %5673 = vst [vmem:[%s226 + $0xa0] sm:$0xf] %v5545
      %5674 = vst [vmem:[%s226 + $0xa4] sm:$0xf] %v5546
      %5675 = vst [vmem:[%s226 + $0xa8] sm:$0xf] %v5547
      %5676 = vst [vmem:[%s226 + $0xac] sm:$0xf] %v5548
      %5677 = vst [vmem:[%s226 + $0xb0] sm:$0xf] %v5549
      %5678 = vst [vmem:[%s226 + $0xb4] sm:$0xf] %v5550
      %5679 = vst [vmem:[%s226 + $0xb8] sm:$0xf] %v5551
      %5680 = vst [vmem:[%s226 + $0xbc] sm:$0xf] %v5552
      %5681 = vst [vmem:[%s226 + $0xc0] sm:$0xf] %v5553
      %5682 = vst [vmem:[%s226 + $0xc4] sm:$0xf] %v5554
      %5683 = vst [vmem:[%s226 + $0xc8] sm:$0xf] %v5555
      %5684 = vst [vmem:[%s226 + $0xcc] sm:$0xf] %v5556
      %5685 = vst [vmem:[%s226 + $0xd0] sm:$0xf] %v5557
      %5686 = vst [vmem:[%s226 + $0xd4] sm:$0xf] %v5558
      %5687 = vst [vmem:[%s226 + $0xd8] sm:$0xf] %v5559
      %5688 = vst [vmem:[%s226 + $0xdc] sm:$0xf] %v5560
      %5689 = vst [vmem:[%s226 + $0xe0] sm:$0xf] %v5561
      %5690 = vst [vmem:[%s226 + $0xe4] sm:$0xf] %v5562
      %5691 = vst [vmem:[%s226 + $0xe8] sm:$0xf] %v5563
      %5692 = vst [vmem:[%s226 + $0xec] sm:$0xf] %v5564
      %5693 = vst [vmem:[%s226 + $0xf0] sm:$0xf] %v5565
      %5694 = vst [vmem:[%s226 + $0xf4] sm:$0xf] %v5566
      %5695 = vst [vmem:[%s226 + $0xf8] sm:$0xf] %v5567
      %5696 = vst [vmem:[%s226 + $0xfc] sm:$0xf] %v5568
      %s5697 = smul.u32 64, %s16
      %p5698 = scmp.lt.s32.totalorder %s5697, 127
      %s5699 = scalar_select %p5698, %s5697, 127
      %s5700 = smul.addr %s5699, 4
      %s5701 = scalar_lea.vmem %s5, %s5700
      // Predicated region
      $region41: #{alexnet_p2_forward.1} parent=39 // pred_check
        %p5702 = pneg %p144
      $region42: #{alexnet_p2_forward.1} parent=39 // pred_check_branch
        %5704 = sbr.rel (%p5702) target = $region44
      $region43: #{alexnet_p2_forward.1} parent=39 // pred_region
        %s5705 = smul.u32 64, %s16
      $region44: #{alexnet_p2_forward.1} parent=39 // pred_fallthru
        _
    $region40: #{alexnet_p2_forward.1} parent=5 // pred_fallthru
      _
    %p5706 = scmp.le.s32.totalorder 2, %s11
    // Predicated region
    $region45: #{alexnet_p2_forward.1} parent=5 // pred_check
      %p5707 = pneg %p5706
    $region46: #{alexnet_p2_forward.1} parent=5 // pred_check_branch
      %5709 = sbr.rel (%p5707) target = $region48
    $region47: #{alexnet_p2_forward.1} parent=5 // pred_region
      %s5710 = ssub.s32 %s11, 2
      // Predicated region
      $region49: #{alexnet_p2_forward.1} parent=47 // pred_check
        %p5711 = pneg %p150
      $region50: #{alexnet_p2_forward.1} parent=47 // pred_check_branch
        %5713 = sbr.rel (%p5711) target = $region52
      $region51: #{alexnet_p2_forward.1} parent=47 // pred_region
        %s5714 = smul.u32 64, %s17
        %p5715 = scmp.lt.s32.totalorder %s5714, 127
        %s5716 = scalar_select %p5715, %s5714, 127
        %s5717 = smul.addr %s5716, 4
        %s5718 = scalar_lea.vmem %s5, %s5717
      $region52: #{alexnet_p2_forward.1} parent=47 // pred_fallthru
        _
    $region48: #{alexnet_p2_forward.1} parent=5 // pred_fallthru
      _
  $region6: #{alexnet_p2_forward.1} parent=0 // loop_footer
    %s15 = sadd.s32 1, %s11
  $region7: #{alexnet_p2_forward.1} parent=0 // loop_footer_branch
    %10 = sbr.rel target = $region3
  $region8: #{alexnet_p2_forward.1} parent=0 // loop_exit
    _

</llo_original>
